<compile_context>
chip_gen: v6e
topology: v6e:2x2x1
jax: 0.10.0
libtpu: 0.0.40
codegen_flags: <defaults>
</compile_context>

<pallas_src>
import math

import jax
import jax.numpy as jnp
from jax.experimental import pallas as pl
from jax.experimental.pallas import tpu as pltpu  # noqa: F401  (TPU backend)

# ----------------------------- model hyperparams -----------------------------
NUM_HIDDENS = 32     # num_hiddens
NUM_HEADS   = 2      # num_heads
FFN_HIDDENS = 64     # ffn_hiddens
KEY_SIZE    = 16     # key_size (d_k)
VALUE_SIZE  = 16     # value_size (d_v)
VOCAB_SIZE  = 50     # vocab_size
MAX_POS     = 64     # max_position
NUM_LAYERS  = 2      # num_layers
LN_EPS      = 1e-5
VOCAB_PAD   = 128    # projection lane dim padded to a full vreg lane width
NEG_INF     = -1000000000.0
_PER_LAYER_REFS = 12


# ----------------------------- Pallas kernel ----------------------------------
def _layernorm(x, g, b):
    mu = jnp.mean(x, axis=-1, keepdims=True)
    var = jnp.mean((x - mu) ** 2, axis=-1, keepdims=True)
    return (x - mu) * jax.lax.rsqrt(var + LN_EPS) * g + b


def gpt_fused_kernel(*refs):
    """Full GPT forward (NUM_LAYERS decoder blocks + projection), one invocation.

    Ref layout:
      [0]  x      : (B*S, H)  embeddings + positional encoding
      [1]  pad    : (B, S)    1.0 == padded key position (mask out)
      [2 : 2+12*L] per-layer weights (12 each):
           wq (NH,H,dk), wk (NH,H,dk), wv (NH,H,dv), wo (NH,dv,H),
           ln1g (1,H), ln1b (1,H), w1 (H,F), b1 (1,F), w2 (F,H), b2 (1,H),
           ln2g (1,H), ln2b (1,H)
      [-4] proj_w : (H, VOCAB_PAD)
      [-3] proj_b : (1, VOCAB_PAD)
      [-2] logits_ref : (B*S, VOCAB_PAD)            output
      [-1] attnw_ref  : (L*B*NH, S, S)              output
    """
    x_ref, pad_ref = refs[0], refs[1]
    layer_refs = refs[2:2 + _PER_LAYER_REFS * NUM_LAYERS]
    pw_ref = refs[2 + _PER_LAYER_REFS * NUM_LAYERS]
    pb_ref = refs[3 + _PER_LAYER_REFS * NUM_LAYERS]
    logits_ref, attnw_ref = refs[-2], refs[-1]

    B, S = pad_ref.shape
    H = x_ref.shape[-1]

    x = x_ref[...]            # (B*S, H)  float32
    pad = pad_ref[...]        # (B, S)    float32, 1.0 == pad

    # Causal mask built in-kernel: True == masked out (future position).
    row = jax.lax.broadcasted_iota(jnp.int32, (S, S), 0)
    col = jax.lax.broadcasted_iota(jnp.int32, (S, S), 1)
    causal = col > row        # (S, S) bool

    scale = 1.0 / math.sqrt(float(KEY_SIZE))

    for l in range(NUM_LAYERS):
        (wq, wk, wv, wo, ln1g, ln1b,
         w1, b1, w2, b2, ln2g, ln2b) = layer_refs[_PER_LAYER_REFS * l:
                                                  _PER_LAYER_REFS * (l + 1)]

        # Head-split projections: weights are pre-split (NH, H, dk) so each head
        # is a plain 2-D dot on the full (B*S, H) slab -> no lane slicing.
        q_h = [jnp.dot(x, wq[h], preferred_element_type=jnp.float32)
               for h in range(NUM_HEADS)]
        k_h = [jnp.dot(x, wk[h], preferred_element_type=jnp.float32)
               for h in range(NUM_HEADS)]
        v_h = [jnp.dot(x, wv[h], preferred_element_type=jnp.float32)
               for h in range(NUM_HEADS)]

        batch_rows = []
        for b in range(B):
            pad_b = pad[b:b + 1, :] > 0.0            # (1, S)
            mask_b = jnp.logical_or(causal, pad_b)   # (S, S) bool
            acc = jnp.zeros((S, H), jnp.float32)
            for h in range(NUM_HEADS):
                qbh = q_h[h][b * S:(b + 1) * S, :]   # (S, dk) aligned sublane slice
                kbh = k_h[h][b * S:(b + 1) * S, :]
                vbh = v_h[h][b * S:(b + 1) * S, :]

                # scores = q @ k^T (contract last dims, no explicit transpose)
                scores = jax.lax.dot_general(
                    qbh, kbh, (((1,), (1,)), ((), ())),
                    preferred_element_type=jnp.float32) * scale
                scores = jnp.where(mask_b, NEG_INF, scores)
                scores = scores - jnp.max(scores, axis=-1, keepdims=True)
                e = jnp.exp(scores)
                w = e * pl.reciprocal(jnp.sum(e, axis=-1, keepdims=True),
                                      approx=True)
                attnw_ref[(l * B + b) * NUM_HEADS + h] = w

                ctx = jnp.dot(w, vbh, preferred_element_type=jnp.float32)  # (S, dv)
                # Summing per-head (ctx @ Wo_head) == concat(heads) @ Wo.
                acc = acc + jnp.dot(ctx, wo[h],
                                    preferred_element_type=jnp.float32)
            batch_rows.append(acc)
        attn_out = jnp.concatenate(batch_rows, axis=0)   # (B*S, H) sublane concat

        # residual + LayerNorm (MHA)
        h1 = _layernorm(attn_out + x, ln1g[...], ln1b[...])

        # position-wise FFN + residual + LayerNorm
        f = jnp.dot(h1, w1[...], preferred_element_type=jnp.float32) + b1[...]
        f = jnp.maximum(f, 0.0)
        f = jnp.dot(f, w2[...], preferred_element_type=jnp.float32) + b2[...]
        x = _layernorm(f + h1, ln2g[...], ln2b[...])

    # final projection into a lane-dense (B*S, 128) block
    logits_ref[...] = (jnp.dot(x, pw_ref[...],
                               preferred_element_type=jnp.float32) + pb_ref[...])


# ----------------------------- wrapper (plain JAX) -----------------------------
def positional_encoding(seq_len, num_hiddens):
    pos = jnp.arange(seq_len, dtype=jnp.float32)[:, None]
    div = jnp.power(10000.0, jnp.arange(0, num_hiddens, 2, dtype=jnp.float32)
                    / num_hiddens)
    x = pos / div
    P = jnp.zeros((seq_len, num_hiddens), jnp.float32)
    P = P.at[:, 0::2].set(jnp.sin(x))
    P = P.at[:, 1::2].set(jnp.cos(x))
    return P


def _prep_layer_weights(p):
    """Layout plumbing only: split heads out of the QKV/O weight matrices."""
    wq = p['wq'].reshape(NUM_HIDDENS, NUM_HEADS, KEY_SIZE).transpose(1, 0, 2)
    wk = p['wk'].reshape(NUM_HIDDENS, NUM_HEADS, KEY_SIZE).transpose(1, 0, 2)
    wv = p['wv'].reshape(NUM_HIDDENS, NUM_HEADS, VALUE_SIZE).transpose(1, 0, 2)
    wo = p['wo'].reshape(NUM_HEADS, VALUE_SIZE, NUM_HIDDENS)
    return [wq, wk, wv, wo, p['ln1g'], p['ln1b'], p['w1'], p['b1'],
            p['w2'], p['b2'], p['ln2g'], p['ln2b']]


@jax.jit
def gpt_forward(tokens, attention_mask, params):
    # TODO(synk): embedding gather + positional encoding are data-dependent
    # lookups done in plain JAX; only the dense transformer math runs in Pallas.
    B, S = tokens.shape
    x = jnp.take(params['embedding'], tokens, axis=0)            # (B,S,H)
    x = x + positional_encoding(S, NUM_HIDDENS)[None]
    x = x.reshape(B * S, NUM_HIDDENS).astype(jnp.float32)        # (B*S, H)

    if attention_mask is not None:
        pad = (attention_mask == 0).astype(jnp.float32)          # (B,S) 1.0 == pad
    else:
        pad = jnp.zeros((B, S), jnp.float32)

    flat_weights = []
    for p in params['layers']:
        flat_weights += _prep_layer_weights(p)

    proj_w = jnp.pad(params['proj_w'], ((0, 0), (0, VOCAB_PAD - VOCAB_SIZE)))
    proj_b = jnp.pad(params['proj_b'], ((0, 0), (0, VOCAB_PAD - VOCAB_SIZE)))

    logits_pad, attnw_flat = pl.pallas_call(
        gpt_fused_kernel,
        out_shape=[
            jax.ShapeDtypeStruct((B * S, VOCAB_PAD), jnp.float32),
            jax.ShapeDtypeStruct((NUM_LAYERS * B * NUM_HEADS, S, S), jnp.float32),
        ],
    )(x, pad, *flat_weights, proj_w, proj_b)

    logits = logits_pad[:, :VOCAB_SIZE]                          # (B*S, V)
    attnw = attnw_flat.reshape(NUM_LAYERS, B, NUM_HEADS, S, S)
    attn_weights = [attnw[l] for l in range(NUM_LAYERS)]
    return logits, attn_weights


# ----------------------------- deterministic params ----------------------------
def init_params(key):
    def nrm(k, shape, scale=0.02):
        return (scale * jax.random.normal(k, shape)).astype(jnp.float32)

    keys = iter(jax.random.split(key, 64))
    params = {'embedding': nrm(next(keys), (VOCAB_SIZE, NUM_HIDDENS))}
    layers = []
    for _ in range(NUM_LAYERS):
        layers.append({
            'wq': nrm(next(keys), (NUM_HIDDENS, NUM_HEADS * KEY_SIZE)),
            'wk': nrm(next(keys), (NUM_HIDDENS, NUM_HEADS * KEY_SIZE)),
            'wv': nrm(next(keys), (NUM_HIDDENS, NUM_HEADS * VALUE_SIZE)),
            'wo': nrm(next(keys), (NUM_HEADS * VALUE_SIZE, NUM_HIDDENS)),
            'ln1g': jnp.ones((1, NUM_HIDDENS), jnp.float32),
            'ln1b': jnp.zeros((1, NUM_HIDDENS), jnp.float32),
            'w1': nrm(next(keys), (NUM_HIDDENS, FFN_HIDDENS)),
            'b1': nrm(next(keys), (1, FFN_HIDDENS)),
            'w2': nrm(next(keys), (FFN_HIDDENS, NUM_HIDDENS)),
            'b2': nrm(next(keys), (1, NUM_HIDDENS)),
            'ln2g': jnp.ones((1, NUM_HIDDENS), jnp.float32),
            'ln2b': jnp.zeros((1, NUM_HIDDENS), jnp.float32),
        })
    params['layers'] = layers
    params['proj_w'] = nrm(next(keys), (NUM_HIDDENS, VOCAB_SIZE))
    params['proj_b'] = nrm(next(keys), (1, VOCAB_SIZE))
    return params


# ----------------------------------- main ---------------------------------------
if __name__ == "__main__":
    B, S = 2, 8
    key = jax.random.PRNGKey(0)
    k_tok, k_param = jax.random.split(key)

    tokens = jax.random.randint(k_tok, (B, S), minval=1, maxval=VOCAB_SIZE,
                                dtype=jnp.int32)
    # attention_mask: 1 = real token, 0 = padding (pad out last 2 positions of row 0)
    attention_mask = jnp.ones((B, S), jnp.int32).at[0, -2:].set(0)

    params = init_params(k_param)

    logits, attn_weights = gpt_forward(tokens, attention_mask, params)
    jax.block_until_ready(logits)
    for aw in attn_weights:
        jax.block_until_ready(aw)

    assert logits.shape == (B * S, VOCAB_SIZE)
    assert len(attn_weights) == NUM_LAYERS
    assert all(aw.shape == (B, NUM_HEADS, S, S) for aw in attn_weights)
    assert bool(jnp.all(jnp.isfinite(logits)))
    assert all(bool(jnp.all(jnp.isfinite(aw))) for aw in attn_weights)
    print("KERNEL_OK")
</pallas_src>

<mosaic_0001>
module attributes {stable_mosaic.version = 11 : i64} {
  func.func @gpt_fused_kernel(%arg0: memref<16x32xf32, #tpu.memory_space<vmem>>, %arg1: memref<2x8xf32, #tpu.memory_space<vmem>>, %arg2: memref<2x32x16xf32, #tpu.memory_space<vmem>>, %arg3: memref<2x32x16xf32, #tpu.memory_space<vmem>>, %arg4: memref<2x32x16xf32, #tpu.memory_space<vmem>>, %arg5: memref<2x16x32xf32, #tpu.memory_space<vmem>>, %arg6: memref<1x32xf32, #tpu.memory_space<vmem>>, %arg7: memref<1x32xf32, #tpu.memory_space<vmem>>, %arg8: memref<32x64xf32, #tpu.memory_space<vmem>>, %arg9: memref<1x64xf32, #tpu.memory_space<vmem>>, %arg10: memref<64x32xf32, #tpu.memory_space<vmem>>, %arg11: memref<1x32xf32, #tpu.memory_space<vmem>>, %arg12: memref<1x32xf32, #tpu.memory_space<vmem>>, %arg13: memref<1x32xf32, #tpu.memory_space<vmem>>, %arg14: memref<2x32x16xf32, #tpu.memory_space<vmem>>, %arg15: memref<2x32x16xf32, #tpu.memory_space<vmem>>, %arg16: memref<2x32x16xf32, #tpu.memory_space<vmem>>, %arg17: memref<2x16x32xf32, #tpu.memory_space<vmem>>, %arg18: memref<1x32xf32, #tpu.memory_space<vmem>>, %arg19: memref<1x32xf32, #tpu.memory_space<vmem>>, %arg20: memref<32x64xf32, #tpu.memory_space<vmem>>, %arg21: memref<1x64xf32, #tpu.memory_space<vmem>>, %arg22: memref<64x32xf32, #tpu.memory_space<vmem>>, %arg23: memref<1x32xf32, #tpu.memory_space<vmem>>, %arg24: memref<1x32xf32, #tpu.memory_space<vmem>>, %arg25: memref<1x32xf32, #tpu.memory_space<vmem>>, %arg26: memref<32x128xf32, #tpu.memory_space<vmem>>, %arg27: memref<1x128xf32, #tpu.memory_space<vmem>>, %arg28: memref<16x128xf32, #tpu.memory_space<vmem>>, %arg29: memref<8x8x8xf32, #tpu.memory_space<vmem>>) attributes {dimension_semantics = [], scalar_prefetch = 0 : i64, scratch_operands = 0 : i64, tpu.core_type = #tpu.core_type<tc>} {
    %c0 = arith.constant 0 : index
    %c0_0 = arith.constant 0 : index
    %0 = vector.load %arg0[%c0, %c0_0] : memref<16x32xf32, #tpu.memory_space<vmem>>, vector<16x32xf32>
    %c0_1 = arith.constant 0 : index
    %c0_2 = arith.constant 0 : index
    %1 = vector.load %arg1[%c0_1, %c0_2] : memref<2x8xf32, #tpu.memory_space<vmem>>, vector<2x8xf32>
    %2 = tpu.iota {dimensions = array<i32: 0>} : vector<8x8xi32>
    %3 = tpu.iota {dimensions = array<i32: 1>} : vector<8x8xi32>
    %4 = arith.cmpi sgt, %3, %2 : vector<8x8xi32>
    %c0_3 = arith.constant 0 : index
    %c0_4 = arith.constant 0 : index
    %c0_5 = arith.constant 0 : index
    %5 = vector.load %arg2[%c0_3, %c0_4, %c0_5] : memref<2x32x16xf32, #tpu.memory_space<vmem>>, vector<1x32x16xf32>
    %6 = vector.shape_cast %5 : vector<1x32x16xf32> to vector<32x16xf32>
    %cst = arith.constant dense<0.000000e+00> : vector<16x16xf32>
    %7 = tpu.matmul %0, %6, %cst {dimension_numbers = #tpu.dot_dimension_numbers<[1], [0], [0], [1], [0, 0, 1, 1], [], []>} : vector<16x32xf32>, vector<32x16xf32>, vector<16x16xf32> -> vector<16x16xf32>
    %c1 = arith.constant 1 : index
    %c0_6 = arith.constant 0 : index
    %c0_7 = arith.constant 0 : index
    %8 = vector.load %arg2[%c1, %c0_6, %c0_7] : memref<2x32x16xf32, #tpu.memory_space<vmem>>, vector<1x32x16xf32>
    %9 = vector.shape_cast %8 : vector<1x32x16xf32> to vector<32x16xf32>
    %cst_8 = arith.constant dense<0.000000e+00> : vector<16x16xf32>
    %10 = tpu.matmul %0, %9, %cst_8 {dimension_numbers = #tpu.dot_dimension_numbers<[1], [0], [0], [1], [0, 0, 1, 1], [], []>} : vector<16x32xf32>, vector<32x16xf32>, vector<16x16xf32> -> vector<16x16xf32>
    %c0_9 = arith.constant 0 : index
    %c0_10 = arith.constant 0 : index
    %c0_11 = arith.constant 0 : index
    %11 = vector.load %arg3[%c0_9, %c0_10, %c0_11] : memref<2x32x16xf32, #tpu.memory_space<vmem>>, vector<1x32x16xf32>
    %12 = vector.shape_cast %11 : vector<1x32x16xf32> to vector<32x16xf32>
    %cst_12 = arith.constant dense<0.000000e+00> : vector<16x16xf32>
    %13 = tpu.matmul %0, %12, %cst_12 {dimension_numbers = #tpu.dot_dimension_numbers<[1], [0], [0], [1], [0, 0, 1, 1], [], []>} : vector<16x32xf32>, vector<32x16xf32>, vector<16x16xf32> -> vector<16x16xf32>
    %c1_13 = arith.constant 1 : index
    %c0_14 = arith.constant 0 : index
    %c0_15 = arith.constant 0 : index
    %14 = vector.load %arg3[%c1_13, %c0_14, %c0_15] : memref<2x32x16xf32, #tpu.memory_space<vmem>>, vector<1x32x16xf32>
    %15 = vector.shape_cast %14 : vector<1x32x16xf32> to vector<32x16xf32>
    %cst_16 = arith.constant dense<0.000000e+00> : vector<16x16xf32>
    %16 = tpu.matmul %0, %15, %cst_16 {dimension_numbers = #tpu.dot_dimension_numbers<[1], [0], [0], [1], [0, 0, 1, 1], [], []>} : vector<16x32xf32>, vector<32x16xf32>, vector<16x16xf32> -> vector<16x16xf32>
    %c0_17 = arith.constant 0 : index
    %c0_18 = arith.constant 0 : index
    %c0_19 = arith.constant 0 : index
    %17 = vector.load %arg4[%c0_17, %c0_18, %c0_19] : memref<2x32x16xf32, #tpu.memory_space<vmem>>, vector<1x32x16xf32>
    %18 = vector.shape_cast %17 : vector<1x32x16xf32> to vector<32x16xf32>
    %cst_20 = arith.constant dense<0.000000e+00> : vector<16x16xf32>
    %19 = tpu.matmul %0, %18, %cst_20 {dimension_numbers = #tpu.dot_dimension_numbers<[1], [0], [0], [1], [0, 0, 1, 1], [], []>} : vector<16x32xf32>, vector<32x16xf32>, vector<16x16xf32> -> vector<16x16xf32>
    %c1_21 = arith.constant 1 : index
    %c0_22 = arith.constant 0 : index
    %c0_23 = arith.constant 0 : index
    %20 = vector.load %arg4[%c1_21, %c0_22, %c0_23] : memref<2x32x16xf32, #tpu.memory_space<vmem>>, vector<1x32x16xf32>
    %21 = vector.shape_cast %20 : vector<1x32x16xf32> to vector<32x16xf32>
    %cst_24 = arith.constant dense<0.000000e+00> : vector<16x16xf32>
    %22 = tpu.matmul %0, %21, %cst_24 {dimension_numbers = #tpu.dot_dimension_numbers<[1], [0], [0], [1], [0, 0, 1, 1], [], []>} : vector<16x32xf32>, vector<32x16xf32>, vector<16x16xf32> -> vector<16x16xf32>
    %23 = vector.extract_strided_slice %1 {offsets = [0, 0], sizes = [1, 8], strides = [1, 1]} : vector<2x8xf32> to vector<1x8xf32>
    %cst_25 = arith.constant 0.000000e+00 : f32
    %24 = vector.broadcast %cst_25 : f32 to vector<1x8xf32>
    %25 = arith.cmpf ogt, %23, %24 : vector<1x8xf32>
    %26 = vector.broadcast %25 : vector<1x8xi1> to vector<8x8xi1>
    %27 = arith.ori %4, %26 : vector<8x8xi1>
    %cst_26 = arith.constant 0.000000e+00 : f32
    %28 = vector.broadcast %cst_26 : f32 to vector<8x32xf32>
    %29 = vector.extract_strided_slice %7 {offsets = [0, 0], sizes = [8, 16], strides = [1, 1]} : vector<16x16xf32> to vector<8x16xf32>
    %30 = vector.extract_strided_slice %13 {offsets = [0, 0], sizes = [8, 16], strides = [1, 1]} : vector<16x16xf32> to vector<8x16xf32>
    %31 = vector.extract_strided_slice %19 {offsets = [0, 0], sizes = [8, 16], strides = [1, 1]} : vector<16x16xf32> to vector<8x16xf32>
    %cst_27 = arith.constant dense<0.000000e+00> : vector<8x8xf32>
    %32 = tpu.matmul %29, %30, %cst_27 {dimension_numbers = #tpu.dot_dimension_numbers<[1], [1], [0], [0], [0, 0, 1, 0], [], []>} : vector<8x16xf32>, vector<8x16xf32>, vector<8x8xf32> -> vector<8x8xf32>
    %cst_28 = arith.constant 2.500000e-01 : f32
    %33 = vector.broadcast %cst_28 : f32 to vector<8x8xf32>
    %34 = arith.mulf %32, %33 : vector<8x8xf32>
    %cst_29 = arith.constant -1.000000e+09 : f32
    %35 = vector.broadcast %cst_29 : f32 to vector<8x8xf32>
    %36 = arith.select %27, %35, %34 : vector<8x8xi1>, vector<8x8xf32>
    %cst_30 = arith.constant dense<0xFF800000> : vector<8xf32>
    %37 = vector.multi_reduction <maximumf>, %36, %cst_30 [1] : vector<8x8xf32> to vector<8xf32>
    %38 = vector.shape_cast %37 : vector<8xf32> to vector<8x1xf32>
    %39 = vector.broadcast %38 : vector<8x1xf32> to vector<8x8xf32>
    %40 = arith.subf %36, %39 : vector<8x8xf32>
    %41 = math.exp %40 : vector<8x8xf32>
    %cst_31 = arith.constant dense<0.000000e+00> : vector<8xf32>
    %42 = vector.multi_reduction <add>, %41, %cst_31 [1] : vector<8x8xf32> to vector<8xf32>
    %43 = vector.shape_cast %42 : vector<8xf32> to vector<8x1xf32>
    %44 = tpu.reciprocal %43 {approx = true} : vector<8x1xf32> -> vector<8x1xf32>
    %45 = vector.broadcast %44 : vector<8x1xf32> to vector<8x8xf32>
    %46 = arith.mulf %41, %45 : vector<8x8xf32>
    %c0_32 = arith.constant 0 : index
    %c0_33 = arith.constant 0 : index
    %c0_34 = arith.constant 0 : index
    %47 = vector.load %arg29[%c0_32, %c0_33, %c0_34] : memref<8x8x8xf32, #tpu.memory_space<vmem>>, vector<1x8x8xf32>
    %48 = vector.shape_cast %47 : vector<1x8x8xf32> to vector<8x8xf32>
    %49 = vector.shape_cast %46 : vector<8x8xf32> to vector<1x8x8xf32>
    tpu.vector_store %arg29[%c0_32, %c0_33, %c0_34], %49 {strides = array<i32>} : memref<8x8x8xf32, #tpu.memory_space<vmem>>, vector<1x8x8xf32>,
    %cst_35 = arith.constant dense<0.000000e+00> : vector<8x16xf32>
    %50 = tpu.matmul %46, %31, %cst_35 {dimension_numbers = #tpu.dot_dimension_numbers<[1], [0], [0], [1], [0, 0, 1, 1], [], []>} : vector<8x8xf32>, vector<8x16xf32>, vector<8x16xf32> -> vector<8x16xf32>
    %c0_36 = arith.constant 0 : index
    %c0_37 = arith.constant 0 : index
    %c0_38 = arith.constant 0 : index
    %51 = vector.load %arg5[%c0_36, %c0_37, %c0_38] : memref<2x16x32xf32, #tpu.memory_space<vmem>>, vector<1x16x32xf32>
    %52 = vector.shape_cast %51 : vector<1x16x32xf32> to vector<16x32xf32>
    %cst_39 = arith.constant dense<0.000000e+00> : vector<8x32xf32>
    %53 = tpu.matmul %50, %52, %cst_39 {dimension_numbers = #tpu.dot_dimension_numbers<[1], [0], [0], [1], [0, 0, 1, 1], [], []>} : vector<8x16xf32>, vector<16x32xf32>, vector<8x32xf32> -> vector<8x32xf32>
    %54 = arith.addf %28, %53 : vector<8x32xf32>
    %55 = vector.extract_strided_slice %10 {offsets = [0, 0], sizes = [8, 16], strides = [1, 1]} : vector<16x16xf32> to vector<8x16xf32>
    %56 = vector.extract_strided_slice %16 {offsets = [0, 0], sizes = [8, 16], strides = [1, 1]} : vector<16x16xf32> to vector<8x16xf32>
    %57 = vector.extract_strided_slice %22 {offsets = [0, 0], sizes = [8, 16], strides = [1, 1]} : vector<16x16xf32> to vector<8x16xf32>
    %cst_40 = arith.constant dense<0.000000e+00> : vector<8x8xf32>
    %58 = tpu.matmul %55, %56, %cst_40 {dimension_numbers = #tpu.dot_dimension_numbers<[1], [1], [0], [0], [0, 0, 1, 0], [], []>} : vector<8x16xf32>, vector<8x16xf32>, vector<8x8xf32> -> vector<8x8xf32>
    %cst_41 = arith.constant 2.500000e-01 : f32
    %59 = vector.broadcast %cst_41 : f32 to vector<8x8xf32>
    %60 = arith.mulf %58, %59 : vector<8x8xf32>
    %cst_42 = arith.constant -1.000000e+09 : f32
    %61 = vector.broadcast %cst_42 : f32 to vector<8x8xf32>
    %62 = arith.select %27, %61, %60 : vector<8x8xi1>, vector<8x8xf32>
    %cst_43 = arith.constant dense<0xFF800000> : vector<8xf32>
    %63 = vector.multi_reduction <maximumf>, %62, %cst_43 [1] : vector<8x8xf32> to vector<8xf32>
    %64 = vector.shape_cast %63 : vector<8xf32> to vector<8x1xf32>
    %65 = vector.broadcast %64 : vector<8x1xf32> to vector<8x8xf32>
    %66 = arith.subf %62, %65 : vector<8x8xf32>
    %67 = math.exp %66 : vector<8x8xf32>
    %cst_44 = arith.constant dense<0.000000e+00> : vector<8xf32>
    %68 = vector.multi_reduction <add>, %67, %cst_44 [1] : vector<8x8xf32> to vector<8xf32>
    %69 = vector.shape_cast %68 : vector<8xf32> to vector<8x1xf32>
    %70 = tpu.reciprocal %69 {approx = true} : vector<8x1xf32> -> vector<8x1xf32>
    %71 = vector.broadcast %70 : vector<8x1xf32> to vector<8x8xf32>
    %72 = arith.mulf %67, %71 : vector<8x8xf32>
    %c1_45 = arith.constant 1 : index
    %c0_46 = arith.constant 0 : index
    %c0_47 = arith.constant 0 : index
    %73 = vector.load %arg29[%c1_45, %c0_46, %c0_47] : memref<8x8x8xf32, #tpu.memory_space<vmem>>, vector<1x8x8xf32>
    %74 = vector.shape_cast %73 : vector<1x8x8xf32> to vector<8x8xf32>
    %75 = vector.shape_cast %72 : vector<8x8xf32> to vector<1x8x8xf32>
    tpu.vector_store %arg29[%c1_45, %c0_46, %c0_47], %75 {strides = array<i32>} : memref<8x8x8xf32, #tpu.memory_space<vmem>>, vector<1x8x8xf32>,
    %cst_48 = arith.constant dense<0.000000e+00> : vector<8x16xf32>
    %76 = tpu.matmul %72, %57, %cst_48 {dimension_numbers = #tpu.dot_dimension_numbers<[1], [0], [0], [1], [0, 0, 1, 1], [], []>} : vector<8x8xf32>, vector<8x16xf32>, vector<8x16xf32> -> vector<8x16xf32>
    %c1_49 = arith.constant 1 : index
    %c0_50 = arith.constant 0 : index
    %c0_51 = arith.constant 0 : index
    %77 = vector.load %arg5[%c1_49, %c0_50, %c0_51] : memref<2x16x32xf32, #tpu.memory_space<vmem>>, vector<1x16x32xf32>
    %78 = vector.shape_cast %77 : vector<1x16x32xf32> to vector<16x32xf32>
    %cst_52 = arith.constant dense<0.000000e+00> : vector<8x32xf32>
    %79 = tpu.matmul %76, %78, %cst_52 {dimension_numbers = #tpu.dot_dimension_numbers<[1], [0], [0], [1], [0, 0, 1, 1], [], []>} : vector<8x16xf32>, vector<16x32xf32>, vector<8x32xf32> -> vector<8x32xf32>
    %80 = arith.addf %54, %79 : vector<8x32xf32>
    %81 = vector.extract_strided_slice %1 {offsets = [1, 0], sizes = [1, 8], strides = [1, 1]} : vector<2x8xf32> to vector<1x8xf32>
    %cst_53 = arith.constant 0.000000e+00 : f32
    %82 = vector.broadcast %cst_53 : f32 to vector<1x8xf32>
    %83 = arith.cmpf ogt, %81, %82 : vector<1x8xf32>
    %84 = vector.broadcast %83 : vector<1x8xi1> to vector<8x8xi1>
    %85 = arith.ori %4, %84 : vector<8x8xi1>
    %cst_54 = arith.constant 0.000000e+00 : f32
    %86 = vector.broadcast %cst_54 : f32 to vector<8x32xf32>
    %87 = vector.extract_strided_slice %7 {offsets = [8, 0], sizes = [8, 16], strides = [1, 1]} : vector<16x16xf32> to vector<8x16xf32>
    %88 = vector.extract_strided_slice %13 {offsets = [8, 0], sizes = [8, 16], strides = [1, 1]} : vector<16x16xf32> to vector<8x16xf32>
    %89 = vector.extract_strided_slice %19 {offsets = [8, 0], sizes = [8, 16], strides = [1, 1]} : vector<16x16xf32> to vector<8x16xf32>
    %cst_55 = arith.constant dense<0.000000e+00> : vector<8x8xf32>
    %90 = tpu.matmul %87, %88, %cst_55 {dimension_numbers = #tpu.dot_dimension_numbers<[1], [1], [0], [0], [0, 0, 1, 0], [], []>} : vector<8x16xf32>, vector<8x16xf32>, vector<8x8xf32> -> vector<8x8xf32>
    %cst_56 = arith.constant 2.500000e-01 : f32
    %91 = vector.broadcast %cst_56 : f32 to vector<8x8xf32>
    %92 = arith.mulf %90, %91 : vector<8x8xf32>
    %cst_57 = arith.constant -1.000000e+09 : f32
    %93 = vector.broadcast %cst_57 : f32 to vector<8x8xf32>
    %94 = arith.select %85, %93, %92 : vector<8x8xi1>, vector<8x8xf32>
    %cst_58 = arith.constant dense<0xFF800000> : vector<8xf32>
    %95 = vector.multi_reduction <maximumf>, %94, %cst_58 [1] : vector<8x8xf32> to vector<8xf32>
    %96 = vector.shape_cast %95 : vector<8xf32> to vector<8x1xf32>
    %97 = vector.broadcast %96 : vector<8x1xf32> to vector<8x8xf32>
    %98 = arith.subf %94, %97 : vector<8x8xf32>
    %99 = math.exp %98 : vector<8x8xf32>
    %cst_59 = arith.constant dense<0.000000e+00> : vector<8xf32>
    %100 = vector.multi_reduction <add>, %99, %cst_59 [1] : vector<8x8xf32> to vector<8xf32>
    %101 = vector.shape_cast %100 : vector<8xf32> to vector<8x1xf32>
    %102 = tpu.reciprocal %101 {approx = true} : vector<8x1xf32> -> vector<8x1xf32>
    %103 = vector.broadcast %102 : vector<8x1xf32> to vector<8x8xf32>
    %104 = arith.mulf %99, %103 : vector<8x8xf32>
    %c2 = arith.constant 2 : index
    %c0_60 = arith.constant 0 : index
    %c0_61 = arith.constant 0 : index
    %105 = vector.load %arg29[%c2, %c0_60, %c0_61] : memref<8x8x8xf32, #tpu.memory_space<vmem>>, vector<1x8x8xf32>
    %106 = vector.shape_cast %105 : vector<1x8x8xf32> to vector<8x8xf32>
    %107 = vector.shape_cast %104 : vector<8x8xf32> to vector<1x8x8xf32>
    tpu.vector_store %arg29[%c2, %c0_60, %c0_61], %107 {strides = array<i32>} : memref<8x8x8xf32, #tpu.memory_space<vmem>>, vector<1x8x8xf32>,
    %cst_62 = arith.constant dense<0.000000e+00> : vector<8x16xf32>
    %108 = tpu.matmul %104, %89, %cst_62 {dimension_numbers = #tpu.dot_dimension_numbers<[1], [0], [0], [1], [0, 0, 1, 1], [], []>} : vector<8x8xf32>, vector<8x16xf32>, vector<8x16xf32> -> vector<8x16xf32>
    %c0_63 = arith.constant 0 : index
    %c0_64 = arith.constant 0 : index
    %c0_65 = arith.constant 0 : index
    %109 = vector.load %arg5[%c0_63, %c0_64, %c0_65] : memref<2x16x32xf32, #tpu.memory_space<vmem>>, vector<1x16x32xf32>
    %110 = vector.shape_cast %109 : vector<1x16x32xf32> to vector<16x32xf32>
    %cst_66 = arith.constant dense<0.000000e+00> : vector<8x32xf32>
    %111 = tpu.matmul %108, %110, %cst_66 {dimension_numbers = #tpu.dot_dimension_numbers<[1], [0], [0], [1], [0, 0, 1, 1], [], []>} : vector<8x16xf32>, vector<16x32xf32>, vector<8x32xf32> -> vector<8x32xf32>
    %112 = arith.addf %86, %111 : vector<8x32xf32>
    %113 = vector.extract_strided_slice %10 {offsets = [8, 0], sizes = [8, 16], strides = [1, 1]} : vector<16x16xf32> to vector<8x16xf32>
    %114 = vector.extract_strided_slice %16 {offsets = [8, 0], sizes = [8, 16], strides = [1, 1]} : vector<16x16xf32> to vector<8x16xf32>
    %115 = vector.extract_strided_slice %22 {offsets = [8, 0], sizes = [8, 16], strides = [1, 1]} : vector<16x16xf32> to vector<8x16xf32>
    %cst_67 = arith.constant dense<0.000000e+00> : vector<8x8xf32>
    %116 = tpu.matmul %113, %114, %cst_67 {dimension_numbers = #tpu.dot_dimension_numbers<[1], [1], [0], [0], [0, 0, 1, 0], [], []>} : vector<8x16xf32>, vector<8x16xf32>, vector<8x8xf32> -> vector<8x8xf32>
    %cst_68 = arith.constant 2.500000e-01 : f32
    %117 = vector.broadcast %cst_68 : f32 to vector<8x8xf32>
    %118 = arith.mulf %116, %117 : vector<8x8xf32>
    %cst_69 = arith.constant -1.000000e+09 : f32
    %119 = vector.broadcast %cst_69 : f32 to vector<8x8xf32>
    %120 = arith.select %85, %119, %118 : vector<8x8xi1>, vector<8x8xf32>
    %cst_70 = arith.constant dense<0xFF800000> : vector<8xf32>
    %121 = vector.multi_reduction <maximumf>, %120, %cst_70 [1] : vector<8x8xf32> to vector<8xf32>
    %122 = vector.shape_cast %121 : vector<8xf32> to vector<8x1xf32>
    %123 = vector.broadcast %122 : vector<8x1xf32> to vector<8x8xf32>
    %124 = arith.subf %120, %123 : vector<8x8xf32>
    %125 = math.exp %124 : vector<8x8xf32>
    %cst_71 = arith.constant dense<0.000000e+00> : vector<8xf32>
    %126 = vector.multi_reduction <add>, %125, %cst_71 [1] : vector<8x8xf32> to vector<8xf32>
    %127 = vector.shape_cast %126 : vector<8xf32> to vector<8x1xf32>
    %128 = tpu.reciprocal %127 {approx = true} : vector<8x1xf32> -> vector<8x1xf32>
    %129 = vector.broadcast %128 : vector<8x1xf32> to vector<8x8xf32>
    %130 = arith.mulf %125, %129 : vector<8x8xf32>
    %c3 = arith.constant 3 : index
    %c0_72 = arith.constant 0 : index
    %c0_73 = arith.constant 0 : index
    %131 = vector.load %arg29[%c3, %c0_72, %c0_73] : memref<8x8x8xf32, #tpu.memory_space<vmem>>, vector<1x8x8xf32>
    %132 = vector.shape_cast %131 : vector<1x8x8xf32> to vector<8x8xf32>
    %133 = vector.shape_cast %130 : vector<8x8xf32> to vector<1x8x8xf32>
    tpu.vector_store %arg29[%c3, %c0_72, %c0_73], %133 {strides = array<i32>} : memref<8x8x8xf32, #tpu.memory_space<vmem>>, vector<1x8x8xf32>,
    %cst_74 = arith.constant dense<0.000000e+00> : vector<8x16xf32>
    %134 = tpu.matmul %130, %115, %cst_74 {dimension_numbers = #tpu.dot_dimension_numbers<[1], [0], [0], [1], [0, 0, 1, 1], [], []>} : vector<8x8xf32>, vector<8x16xf32>, vector<8x16xf32> -> vector<8x16xf32>
    %c1_75 = arith.constant 1 : index
    %c0_76 = arith.constant 0 : index
    %c0_77 = arith.constant 0 : index
    %135 = vector.load %arg5[%c1_75, %c0_76, %c0_77] : memref<2x16x32xf32, #tpu.memory_space<vmem>>, vector<1x16x32xf32>
    %136 = vector.shape_cast %135 : vector<1x16x32xf32> to vector<16x32xf32>
    %cst_78 = arith.constant dense<0.000000e+00> : vector<8x32xf32>
    %137 = tpu.matmul %134, %136, %cst_78 {dimension_numbers = #tpu.dot_dimension_numbers<[1], [0], [0], [1], [0, 0, 1, 1], [], []>} : vector<8x16xf32>, vector<16x32xf32>, vector<8x32xf32> -> vector<8x32xf32>
    %138 = arith.addf %112, %137 : vector<8x32xf32>
    %139 = tpu.concatenate %80, %138 in 0 : vector<8x32xf32>, vector<8x32xf32> -> vector<16x32xf32>
    %140 = arith.addf %139, %0 : vector<16x32xf32>
    %c0_79 = arith.constant 0 : index
    %c0_80 = arith.constant 0 : index
    %141 = vector.load %arg6[%c0_79, %c0_80] : memref<1x32xf32, #tpu.memory_space<vmem>>, vector<1x32xf32>
    %c0_81 = arith.constant 0 : index
    %c0_82 = arith.constant 0 : index
    %142 = vector.load %arg7[%c0_81, %c0_82] : memref<1x32xf32, #tpu.memory_space<vmem>>, vector<1x32xf32>
    %cst_83 = arith.constant dense<0.000000e+00> : vector<16xf32>
    %143 = vector.multi_reduction <add>, %140, %cst_83 [1] : vector<16x32xf32> to vector<16xf32>
    %144 = vector.shape_cast %143 : vector<16xf32> to vector<16x1xf32>
    %cst_84 = arith.constant 3.200000e+01 : f32
    %145 = vector.broadcast %cst_84 : f32 to vector<16x1xf32>
    %146 = arith.divf %144, %145 : vector<16x1xf32>
    %147 = vector.broadcast %146 : vector<16x1xf32> to vector<16x32xf32>
    %148 = arith.subf %140, %147 : vector<16x32xf32>
    %149 = arith.mulf %148, %148 : vector<16x32xf32>
    %cst_85 = arith.constant dense<0.000000e+00> : vector<16xf32>
    %150 = vector.multi_reduction <add>, %149, %cst_85 [1] : vector<16x32xf32> to vector<16xf32>
    %151 = vector.shape_cast %150 : vector<16xf32> to vector<16x1xf32>
    %cst_86 = arith.constant 3.200000e+01 : f32
    %152 = vector.broadcast %cst_86 : f32 to vector<16x1xf32>
    %153 = arith.divf %151, %152 : vector<16x1xf32>
    %154 = vector.broadcast %146 : vector<16x1xf32> to vector<16x32xf32>
    %155 = arith.subf %140, %154 : vector<16x32xf32>
    %cst_87 = arith.constant 9.99999974E-6 : f32
    %156 = vector.broadcast %cst_87 : f32 to vector<16x1xf32>
    %157 = arith.addf %153, %156 : vector<16x1xf32>
    %158 = math.rsqrt %157 : vector<16x1xf32>
    %159 = vector.broadcast %158 : vector<16x1xf32> to vector<16x32xf32>
    %160 = arith.mulf %155, %159 : vector<16x32xf32>
    %161 = vector.broadcast %141 : vector<1x32xf32> to vector<16x32xf32>
    %162 = arith.mulf %160, %161 : vector<16x32xf32>
    %163 = vector.broadcast %142 : vector<1x32xf32> to vector<16x32xf32>
    %164 = arith.addf %162, %163 : vector<16x32xf32>
    %c0_88 = arith.constant 0 : index
    %c0_89 = arith.constant 0 : index
    %165 = vector.load %arg8[%c0_88, %c0_89] : memref<32x64xf32, #tpu.memory_space<vmem>>, vector<32x64xf32>
    %cst_90 = arith.constant dense<0.000000e+00> : vector<16x64xf32>
    %166 = tpu.matmul %164, %165, %cst_90 {dimension_numbers = #tpu.dot_dimension_numbers<[1], [0], [0], [1], [0, 0, 1, 1], [], []>} : vector<16x32xf32>, vector<32x64xf32>, vector<16x64xf32> -> vector<16x64xf32>
    %c0_91 = arith.constant 0 : index
    %c0_92 = arith.constant 0 : index
    %167 = vector.load %arg9[%c0_91, %c0_92] : memref<1x64xf32, #tpu.memory_space<vmem>>, vector<1x64xf32>
    %168 = vector.broadcast %167 : vector<1x64xf32> to vector<16x64xf32>
    %169 = arith.addf %166, %168 : vector<16x64xf32>
    %cst_93 = arith.constant 0.000000e+00 : f32
    %170 = vector.broadcast %cst_93 : f32 to vector<16x64xf32>
    %171 = arith.maximumf %169, %170 : vector<16x64xf32>
    %c0_94 = arith.constant 0 : index
    %c0_95 = arith.constant 0 : index
    %172 = vector.load %arg10[%c0_94, %c0_95] : memref<64x32xf32, #tpu.memory_space<vmem>>, vector<64x32xf32>
    %cst_96 = arith.constant dense<0.000000e+00> : vector<16x32xf32>
    %173 = tpu.matmul %171, %172, %cst_96 {dimension_numbers = #tpu.dot_dimension_numbers<[1], [0], [0], [1], [0, 0, 1, 1], [], []>} : vector<16x64xf32>, vector<64x32xf32>, vector<16x32xf32> -> vector<16x32xf32>
    %c0_97 = arith.constant 0 : index
    %c0_98 = arith.constant 0 : index
    %174 = vector.load %arg11[%c0_97, %c0_98] : memref<1x32xf32, #tpu.memory_space<vmem>>, vector<1x32xf32>
    %175 = vector.broadcast %174 : vector<1x32xf32> to vector<16x32xf32>
    %176 = arith.addf %173, %175 : vector<16x32xf32>
    %177 = arith.addf %176, %164 : vector<16x32xf32>
    %c0_99 = arith.constant 0 : index
    %c0_100 = arith.constant 0 : index
    %178 = vector.load %arg12[%c0_99, %c0_100] : memref<1x32xf32, #tpu.memory_space<vmem>>, vector<1x32xf32>
    %c0_101 = arith.constant 0 : index
    %c0_102 = arith.constant 0 : index
    %179 = vector.load %arg13[%c0_101, %c0_102] : memref<1x32xf32, #tpu.memory_space<vmem>>, vector<1x32xf32>
    %cst_103 = arith.constant dense<0.000000e+00> : vector<16xf32>
    %180 = vector.multi_reduction <add>, %177, %cst_103 [1] : vector<16x32xf32> to vector<16xf32>
    %181 = vector.shape_cast %180 : vector<16xf32> to vector<16x1xf32>
    %cst_104 = arith.constant 3.200000e+01 : f32
    %182 = vector.broadcast %cst_104 : f32 to vector<16x1xf32>
    %183 = arith.divf %181, %182 : vector<16x1xf32>
    %184 = vector.broadcast %183 : vector<16x1xf32> to vector<16x32xf32>
    %185 = arith.subf %177, %184 : vector<16x32xf32>
    %186 = arith.mulf %185, %185 : vector<16x32xf32>
    %cst_105 = arith.constant dense<0.000000e+00> : vector<16xf32>
    %187 = vector.multi_reduction <add>, %186, %cst_105 [1] : vector<16x32xf32> to vector<16xf32>
    %188 = vector.shape_cast %187 : vector<16xf32> to vector<16x1xf32>
    %cst_106 = arith.constant 3.200000e+01 : f32
    %189 = vector.broadcast %cst_106 : f32 to vector<16x1xf32>
    %190 = arith.divf %188, %189 : vector<16x1xf32>
    %191 = vector.broadcast %183 : vector<16x1xf32> to vector<16x32xf32>
    %192 = arith.subf %177, %191 : vector<16x32xf32>
    %cst_107 = arith.constant 9.99999974E-6 : f32
    %193 = vector.broadcast %cst_107 : f32 to vector<16x1xf32>
    %194 = arith.addf %190, %193 : vector<16x1xf32>
    %195 = math.rsqrt %194 : vector<16x1xf32>
    %196 = vector.broadcast %195 : vector<16x1xf32> to vector<16x32xf32>
    %197 = arith.mulf %192, %196 : vector<16x32xf32>
    %198 = vector.broadcast %178 : vector<1x32xf32> to vector<16x32xf32>
    %199 = arith.mulf %197, %198 : vector<16x32xf32>
    %200 = vector.broadcast %179 : vector<1x32xf32> to vector<16x32xf32>
    %201 = arith.addf %199, %200 : vector<16x32xf32>
    %c0_108 = arith.constant 0 : index
    %c0_109 = arith.constant 0 : index
    %c0_110 = arith.constant 0 : index
    %202 = vector.load %arg14[%c0_108, %c0_109, %c0_110] : memref<2x32x16xf32, #tpu.memory_space<vmem>>, vector<1x32x16xf32>
    %203 = vector.shape_cast %202 : vector<1x32x16xf32> to vector<32x16xf32>
    %cst_111 = arith.constant dense<0.000000e+00> : vector<16x16xf32>
    %204 = tpu.matmul %201, %203, %cst_111 {dimension_numbers = #tpu.dot_dimension_numbers<[1], [0], [0], [1], [0, 0, 1, 1], [], []>} : vector<16x32xf32>, vector<32x16xf32>, vector<16x16xf32> -> vector<16x16xf32>
    %c1_112 = arith.constant 1 : index
    %c0_113 = arith.constant 0 : index
    %c0_114 = arith.constant 0 : index
    %205 = vector.load %arg14[%c1_112, %c0_113, %c0_114] : memref<2x32x16xf32, #tpu.memory_space<vmem>>, vector<1x32x16xf32>
    %206 = vector.shape_cast %205 : vector<1x32x16xf32> to vector<32x16xf32>
    %cst_115 = arith.constant dense<0.000000e+00> : vector<16x16xf32>
    %207 = tpu.matmul %201, %206, %cst_115 {dimension_numbers = #tpu.dot_dimension_numbers<[1], [0], [0], [1], [0, 0, 1, 1], [], []>} : vector<16x32xf32>, vector<32x16xf32>, vector<16x16xf32> -> vector<16x16xf32>
    %c0_116 = arith.constant 0 : index
    %c0_117 = arith.constant 0 : index
    %c0_118 = arith.constant 0 : index
    %208 = vector.load %arg15[%c0_116, %c0_117, %c0_118] : memref<2x32x16xf32, #tpu.memory_space<vmem>>, vector<1x32x16xf32>
    %209 = vector.shape_cast %208 : vector<1x32x16xf32> to vector<32x16xf32>
    %cst_119 = arith.constant dense<0.000000e+00> : vector<16x16xf32>
    %210 = tpu.matmul %201, %209, %cst_119 {dimension_numbers = #tpu.dot_dimension_numbers<[1], [0], [0], [1], [0, 0, 1, 1], [], []>} : vector<16x32xf32>, vector<32x16xf32>, vector<16x16xf32> -> vector<16x16xf32>
    %c1_120 = arith.constant 1 : index
    %c0_121 = arith.constant 0 : index
    %c0_122 = arith.constant 0 : index
    %211 = vector.load %arg15[%c1_120, %c0_121, %c0_122] : memref<2x32x16xf32, #tpu.memory_space<vmem>>, vector<1x32x16xf32>
    %212 = vector.shape_cast %211 : vector<1x32x16xf32> to vector<32x16xf32>
    %cst_123 = arith.constant dense<0.000000e+00> : vector<16x16xf32>
    %213 = tpu.matmul %201, %212, %cst_123 {dimension_numbers = #tpu.dot_dimension_numbers<[1], [0], [0], [1], [0, 0, 1, 1], [], []>} : vector<16x32xf32>, vector<32x16xf32>, vector<16x16xf32> -> vector<16x16xf32>
    %c0_124 = arith.constant 0 : index
    %c0_125 = arith.constant 0 : index
    %c0_126 = arith.constant 0 : index
    %214 = vector.load %arg16[%c0_124, %c0_125, %c0_126] : memref<2x32x16xf32, #tpu.memory_space<vmem>>, vector<1x32x16xf32>
    %215 = vector.shape_cast %214 : vector<1x32x16xf32> to vector<32x16xf32>
    %cst_127 = arith.constant dense<0.000000e+00> : vector<16x16xf32>
    %216 = tpu.matmul %201, %215, %cst_127 {dimension_numbers = #tpu.dot_dimension_numbers<[1], [0], [0], [1], [0, 0, 1, 1], [], []>} : vector<16x32xf32>, vector<32x16xf32>, vector<16x16xf32> -> vector<16x16xf32>
    %c1_128 = arith.constant 1 : index
    %c0_129 = arith.constant 0 : index
    %c0_130 = arith.constant 0 : index
    %217 = vector.load %arg16[%c1_128, %c0_129, %c0_130] : memref<2x32x16xf32, #tpu.memory_space<vmem>>, vector<1x32x16xf32>
    %218 = vector.shape_cast %217 : vector<1x32x16xf32> to vector<32x16xf32>
    %cst_131 = arith.constant dense<0.000000e+00> : vector<16x16xf32>
    %219 = tpu.matmul %201, %218, %cst_131 {dimension_numbers = #tpu.dot_dimension_numbers<[1], [0], [0], [1], [0, 0, 1, 1], [], []>} : vector<16x32xf32>, vector<32x16xf32>, vector<16x16xf32> -> vector<16x16xf32>
    %220 = vector.extract_strided_slice %1 {offsets = [0, 0], sizes = [1, 8], strides = [1, 1]} : vector<2x8xf32> to vector<1x8xf32>
    %cst_132 = arith.constant 0.000000e+00 : f32
    %221 = vector.broadcast %cst_132 : f32 to vector<1x8xf32>
    %222 = arith.cmpf ogt, %220, %221 : vector<1x8xf32>
    %223 = vector.broadcast %222 : vector<1x8xi1> to vector<8x8xi1>
    %224 = arith.ori %4, %223 : vector<8x8xi1>
    %cst_133 = arith.constant 0.000000e+00 : f32
    %225 = vector.broadcast %cst_133 : f32 to vector<8x32xf32>
    %226 = vector.extract_strided_slice %204 {offsets = [0, 0], sizes = [8, 16], strides = [1, 1]} : vector<16x16xf32> to vector<8x16xf32>
    %227 = vector.extract_strided_slice %210 {offsets = [0, 0], sizes = [8, 16], strides = [1, 1]} : vector<16x16xf32> to vector<8x16xf32>
    %228 = vector.extract_strided_slice %216 {offsets = [0, 0], sizes = [8, 16], strides = [1, 1]} : vector<16x16xf32> to vector<8x16xf32>
    %cst_134 = arith.constant dense<0.000000e+00> : vector<8x8xf32>
    %229 = tpu.matmul %226, %227, %cst_134 {dimension_numbers = #tpu.dot_dimension_numbers<[1], [1], [0], [0], [0, 0, 1, 0], [], []>} : vector<8x16xf32>, vector<8x16xf32>, vector<8x8xf32> -> vector<8x8xf32>
    %cst_135 = arith.constant 2.500000e-01 : f32
    %230 = vector.broadcast %cst_135 : f32 to vector<8x8xf32>
    %231 = arith.mulf %229, %230 : vector<8x8xf32>
    %cst_136 = arith.constant -1.000000e+09 : f32
    %232 = vector.broadcast %cst_136 : f32 to vector<8x8xf32>
    %233 = arith.select %224, %232, %231 : vector<8x8xi1>, vector<8x8xf32>
    %cst_137 = arith.constant dense<0xFF800000> : vector<8xf32>
    %234 = vector.multi_reduction <maximumf>, %233, %cst_137 [1] : vector<8x8xf32> to vector<8xf32>
    %235 = vector.shape_cast %234 : vector<8xf32> to vector<8x1xf32>
    %236 = vector.broadcast %235 : vector<8x1xf32> to vector<8x8xf32>
    %237 = arith.subf %233, %236 : vector<8x8xf32>
    %238 = math.exp %237 : vector<8x8xf32>
    %cst_138 = arith.constant dense<0.000000e+00> : vector<8xf32>
    %239 = vector.multi_reduction <add>, %238, %cst_138 [1] : vector<8x8xf32> to vector<8xf32>
    %240 = vector.shape_cast %239 : vector<8xf32> to vector<8x1xf32>
    %241 = tpu.reciprocal %240 {approx = true} : vector<8x1xf32> -> vector<8x1xf32>
    %242 = vector.broadcast %241 : vector<8x1xf32> to vector<8x8xf32>
    %243 = arith.mulf %238, %242 : vector<8x8xf32>
    %c4 = arith.constant 4 : index
    %c0_139 = arith.constant 0 : index
    %c0_140 = arith.constant 0 : index
    %244 = vector.load %arg29[%c4, %c0_139, %c0_140] : memref<8x8x8xf32, #tpu.memory_space<vmem>>, vector<1x8x8xf32>
    %245 = vector.shape_cast %244 : vector<1x8x8xf32> to vector<8x8xf32>
    %246 = vector.shape_cast %243 : vector<8x8xf32> to vector<1x8x8xf32>
    tpu.vector_store %arg29[%c4, %c0_139, %c0_140], %246 {strides = array<i32>} : memref<8x8x8xf32, #tpu.memory_space<vmem>>, vector<1x8x8xf32>,
    %cst_141 = arith.constant dense<0.000000e+00> : vector<8x16xf32>
    %247 = tpu.matmul %243, %228, %cst_141 {dimension_numbers = #tpu.dot_dimension_numbers<[1], [0], [0], [1], [0, 0, 1, 1], [], []>} : vector<8x8xf32>, vector<8x16xf32>, vector<8x16xf32> -> vector<8x16xf32>
    %c0_142 = arith.constant 0 : index
    %c0_143 = arith.constant 0 : index
    %c0_144 = arith.constant 0 : index
    %248 = vector.load %arg17[%c0_142, %c0_143, %c0_144] : memref<2x16x32xf32, #tpu.memory_space<vmem>>, vector<1x16x32xf32>
    %249 = vector.shape_cast %248 : vector<1x16x32xf32> to vector<16x32xf32>
    %cst_145 = arith.constant dense<0.000000e+00> : vector<8x32xf32>
    %250 = tpu.matmul %247, %249, %cst_145 {dimension_numbers = #tpu.dot_dimension_numbers<[1], [0], [0], [1], [0, 0, 1, 1], [], []>} : vector<8x16xf32>, vector<16x32xf32>, vector<8x32xf32> -> vector<8x32xf32>
    %251 = arith.addf %225, %250 : vector<8x32xf32>
    %252 = vector.extract_strided_slice %207 {offsets = [0, 0], sizes = [8, 16], strides = [1, 1]} : vector<16x16xf32> to vector<8x16xf32>
    %253 = vector.extract_strided_slice %213 {offsets = [0, 0], sizes = [8, 16], strides = [1, 1]} : vector<16x16xf32> to vector<8x16xf32>
    %254 = vector.extract_strided_slice %219 {offsets = [0, 0], sizes = [8, 16], strides = [1, 1]} : vector<16x16xf32> to vector<8x16xf32>
    %cst_146 = arith.constant dense<0.000000e+00> : vector<8x8xf32>
    %255 = tpu.matmul %252, %253, %cst_146 {dimension_numbers = #tpu.dot_dimension_numbers<[1], [1], [0], [0], [0, 0, 1, 0], [], []>} : vector<8x16xf32>, vector<8x16xf32>, vector<8x8xf32> -> vector<8x8xf32>
    %cst_147 = arith.constant 2.500000e-01 : f32
    %256 = vector.broadcast %cst_147 : f32 to vector<8x8xf32>
    %257 = arith.mulf %255, %256 : vector<8x8xf32>
    %cst_148 = arith.constant -1.000000e+09 : f32
    %258 = vector.broadcast %cst_148 : f32 to vector<8x8xf32>
    %259 = arith.select %224, %258, %257 : vector<8x8xi1>, vector<8x8xf32>
    %cst_149 = arith.constant dense<0xFF800000> : vector<8xf32>
    %260 = vector.multi_reduction <maximumf>, %259, %cst_149 [1] : vector<8x8xf32> to vector<8xf32>
    %261 = vector.shape_cast %260 : vector<8xf32> to vector<8x1xf32>
    %262 = vector.broadcast %261 : vector<8x1xf32> to vector<8x8xf32>
    %263 = arith.subf %259, %262 : vector<8x8xf32>
    %264 = math.exp %263 : vector<8x8xf32>
    %cst_150 = arith.constant dense<0.000000e+00> : vector<8xf32>
    %265 = vector.multi_reduction <add>, %264, %cst_150 [1] : vector<8x8xf32> to vector<8xf32>
    %266 = vector.shape_cast %265 : vector<8xf32> to vector<8x1xf32>
    %267 = tpu.reciprocal %266 {approx = true} : vector<8x1xf32> -> vector<8x1xf32>
    %268 = vector.broadcast %267 : vector<8x1xf32> to vector<8x8xf32>
    %269 = arith.mulf %264, %268 : vector<8x8xf32>
    %c5 = arith.constant 5 : index
    %c0_151 = arith.constant 0 : index
    %c0_152 = arith.constant 0 : index
    %270 = vector.load %arg29[%c5, %c0_151, %c0_152] : memref<8x8x8xf32, #tpu.memory_space<vmem>>, vector<1x8x8xf32>
    %271 = vector.shape_cast %270 : vector<1x8x8xf32> to vector<8x8xf32>
    %272 = vector.shape_cast %269 : vector<8x8xf32> to vector<1x8x8xf32>
    tpu.vector_store %arg29[%c5, %c0_151, %c0_152], %272 {strides = array<i32>} : memref<8x8x8xf32, #tpu.memory_space<vmem>>, vector<1x8x8xf32>,
    %cst_153 = arith.constant dense<0.000000e+00> : vector<8x16xf32>
    %273 = tpu.matmul %269, %254, %cst_153 {dimension_numbers = #tpu.dot_dimension_numbers<[1], [0], [0], [1], [0, 0, 1, 1], [], []>} : vector<8x8xf32>, vector<8x16xf32>, vector<8x16xf32> -> vector<8x16xf32>
    %c1_154 = arith.constant 1 : index
    %c0_155 = arith.constant 0 : index
    %c0_156 = arith.constant 0 : index
    %274 = vector.load %arg17[%c1_154, %c0_155, %c0_156] : memref<2x16x32xf32, #tpu.memory_space<vmem>>, vector<1x16x32xf32>
    %275 = vector.shape_cast %274 : vector<1x16x32xf32> to vector<16x32xf32>
    %cst_157 = arith.constant dense<0.000000e+00> : vector<8x32xf32>
    %276 = tpu.matmul %273, %275, %cst_157 {dimension_numbers = #tpu.dot_dimension_numbers<[1], [0], [0], [1], [0, 0, 1, 1], [], []>} : vector<8x16xf32>, vector<16x32xf32>, vector<8x32xf32> -> vector<8x32xf32>
    %277 = arith.addf %251, %276 : vector<8x32xf32>
    %278 = vector.extract_strided_slice %1 {offsets = [1, 0], sizes = [1, 8], strides = [1, 1]} : vector<2x8xf32> to vector<1x8xf32>
    %cst_158 = arith.constant 0.000000e+00 : f32
    %279 = vector.broadcast %cst_158 : f32 to vector<1x8xf32>
    %280 = arith.cmpf ogt, %278, %279 : vector<1x8xf32>
    %281 = vector.broadcast %280 : vector<1x8xi1> to vector<8x8xi1>
    %282 = arith.ori %4, %281 : vector<8x8xi1>
    %cst_159 = arith.constant 0.000000e+00 : f32
    %283 = vector.broadcast %cst_159 : f32 to vector<8x32xf32>
    %284 = vector.extract_strided_slice %204 {offsets = [8, 0], sizes = [8, 16], strides = [1, 1]} : vector<16x16xf32> to vector<8x16xf32>
    %285 = vector.extract_strided_slice %210 {offsets = [8, 0], sizes = [8, 16], strides = [1, 1]} : vector<16x16xf32> to vector<8x16xf32>
    %286 = vector.extract_strided_slice %216 {offsets = [8, 0], sizes = [8, 16], strides = [1, 1]} : vector<16x16xf32> to vector<8x16xf32>
    %cst_160 = arith.constant dense<0.000000e+00> : vector<8x8xf32>
    %287 = tpu.matmul %284, %285, %cst_160 {dimension_numbers = #tpu.dot_dimension_numbers<[1], [1], [0], [0], [0, 0, 1, 0], [], []>} : vector<8x16xf32>, vector<8x16xf32>, vector<8x8xf32> -> vector<8x8xf32>
    %cst_161 = arith.constant 2.500000e-01 : f32
    %288 = vector.broadcast %cst_161 : f32 to vector<8x8xf32>
    %289 = arith.mulf %287, %288 : vector<8x8xf32>
    %cst_162 = arith.constant -1.000000e+09 : f32
    %290 = vector.broadcast %cst_162 : f32 to vector<8x8xf32>
    %291 = arith.select %282, %290, %289 : vector<8x8xi1>, vector<8x8xf32>
    %cst_163 = arith.constant dense<0xFF800000> : vector<8xf32>
    %292 = vector.multi_reduction <maximumf>, %291, %cst_163 [1] : vector<8x8xf32> to vector<8xf32>
    %293 = vector.shape_cast %292 : vector<8xf32> to vector<8x1xf32>
    %294 = vector.broadcast %293 : vector<8x1xf32> to vector<8x8xf32>
    %295 = arith.subf %291, %294 : vector<8x8xf32>
    %296 = math.exp %295 : vector<8x8xf32>
    %cst_164 = arith.constant dense<0.000000e+00> : vector<8xf32>
    %297 = vector.multi_reduction <add>, %296, %cst_164 [1] : vector<8x8xf32> to vector<8xf32>
    %298 = vector.shape_cast %297 : vector<8xf32> to vector<8x1xf32>
    %299 = tpu.reciprocal %298 {approx = true} : vector<8x1xf32> -> vector<8x1xf32>
    %300 = vector.broadcast %299 : vector<8x1xf32> to vector<8x8xf32>
    %301 = arith.mulf %296, %300 : vector<8x8xf32>
    %c6 = arith.constant 6 : index
    %c0_165 = arith.constant 0 : index
    %c0_166 = arith.constant 0 : index
    %302 = vector.load %arg29[%c6, %c0_165, %c0_166] : memref<8x8x8xf32, #tpu.memory_space<vmem>>, vector<1x8x8xf32>
    %303 = vector.shape_cast %302 : vector<1x8x8xf32> to vector<8x8xf32>
    %304 = vector.shape_cast %301 : vector<8x8xf32> to vector<1x8x8xf32>
    tpu.vector_store %arg29[%c6, %c0_165, %c0_166], %304 {strides = array<i32>} : memref<8x8x8xf32, #tpu.memory_space<vmem>>, vector<1x8x8xf32>,
    %cst_167 = arith.constant dense<0.000000e+00> : vector<8x16xf32>
    %305 = tpu.matmul %301, %286, %cst_167 {dimension_numbers = #tpu.dot_dimension_numbers<[1], [0], [0], [1], [0, 0, 1, 1], [], []>} : vector<8x8xf32>, vector<8x16xf32>, vector<8x16xf32> -> vector<8x16xf32>
    %c0_168 = arith.constant 0 : index
    %c0_169 = arith.constant 0 : index
    %c0_170 = arith.constant 0 : index
    %306 = vector.load %arg17[%c0_168, %c0_169, %c0_170] : memref<2x16x32xf32, #tpu.memory_space<vmem>>, vector<1x16x32xf32>
    %307 = vector.shape_cast %306 : vector<1x16x32xf32> to vector<16x32xf32>
    %cst_171 = arith.constant dense<0.000000e+00> : vector<8x32xf32>
    %308 = tpu.matmul %305, %307, %cst_171 {dimension_numbers = #tpu.dot_dimension_numbers<[1], [0], [0], [1], [0, 0, 1, 1], [], []>} : vector<8x16xf32>, vector<16x32xf32>, vector<8x32xf32> -> vector<8x32xf32>
    %309 = arith.addf %283, %308 : vector<8x32xf32>
    %310 = vector.extract_strided_slice %207 {offsets = [8, 0], sizes = [8, 16], strides = [1, 1]} : vector<16x16xf32> to vector<8x16xf32>
    %311 = vector.extract_strided_slice %213 {offsets = [8, 0], sizes = [8, 16], strides = [1, 1]} : vector<16x16xf32> to vector<8x16xf32>
    %312 = vector.extract_strided_slice %219 {offsets = [8, 0], sizes = [8, 16], strides = [1, 1]} : vector<16x16xf32> to vector<8x16xf32>
    %cst_172 = arith.constant dense<0.000000e+00> : vector<8x8xf32>
    %313 = tpu.matmul %310, %311, %cst_172 {dimension_numbers = #tpu.dot_dimension_numbers<[1], [1], [0], [0], [0, 0, 1, 0], [], []>} : vector<8x16xf32>, vector<8x16xf32>, vector<8x8xf32> -> vector<8x8xf32>
    %cst_173 = arith.constant 2.500000e-01 : f32
    %314 = vector.broadcast %cst_173 : f32 to vector<8x8xf32>
    %315 = arith.mulf %313, %314 : vector<8x8xf32>
    %cst_174 = arith.constant -1.000000e+09 : f32
    %316 = vector.broadcast %cst_174 : f32 to vector<8x8xf32>
    %317 = arith.select %282, %316, %315 : vector<8x8xi1>, vector<8x8xf32>
    %cst_175 = arith.constant dense<0xFF800000> : vector<8xf32>
    %318 = vector.multi_reduction <maximumf>, %317, %cst_175 [1] : vector<8x8xf32> to vector<8xf32>
    %319 = vector.shape_cast %318 : vector<8xf32> to vector<8x1xf32>
    %320 = vector.broadcast %319 : vector<8x1xf32> to vector<8x8xf32>
    %321 = arith.subf %317, %320 : vector<8x8xf32>
    %322 = math.exp %321 : vector<8x8xf32>
    %cst_176 = arith.constant dense<0.000000e+00> : vector<8xf32>
    %323 = vector.multi_reduction <add>, %322, %cst_176 [1] : vector<8x8xf32> to vector<8xf32>
    %324 = vector.shape_cast %323 : vector<8xf32> to vector<8x1xf32>
    %325 = tpu.reciprocal %324 {approx = true} : vector<8x1xf32> -> vector<8x1xf32>
    %326 = vector.broadcast %325 : vector<8x1xf32> to vector<8x8xf32>
    %327 = arith.mulf %322, %326 : vector<8x8xf32>
    %c7 = arith.constant 7 : index
    %c0_177 = arith.constant 0 : index
    %c0_178 = arith.constant 0 : index
    %328 = vector.load %arg29[%c7, %c0_177, %c0_178] : memref<8x8x8xf32, #tpu.memory_space<vmem>>, vector<1x8x8xf32>
    %329 = vector.shape_cast %328 : vector<1x8x8xf32> to vector<8x8xf32>
    %330 = vector.shape_cast %327 : vector<8x8xf32> to vector<1x8x8xf32>
    tpu.vector_store %arg29[%c7, %c0_177, %c0_178], %330 {strides = array<i32>} : memref<8x8x8xf32, #tpu.memory_space<vmem>>, vector<1x8x8xf32>,
    %cst_179 = arith.constant dense<0.000000e+00> : vector<8x16xf32>
    %331 = tpu.matmul %327, %312, %cst_179 {dimension_numbers = #tpu.dot_dimension_numbers<[1], [0], [0], [1], [0, 0, 1, 1], [], []>} : vector<8x8xf32>, vector<8x16xf32>, vector<8x16xf32> -> vector<8x16xf32>
    %c1_180 = arith.constant 1 : index
    %c0_181 = arith.constant 0 : index
    %c0_182 = arith.constant 0 : index
    %332 = vector.load %arg17[%c1_180, %c0_181, %c0_182] : memref<2x16x32xf32, #tpu.memory_space<vmem>>, vector<1x16x32xf32>
    %333 = vector.shape_cast %332 : vector<1x16x32xf32> to vector<16x32xf32>
    %cst_183 = arith.constant dense<0.000000e+00> : vector<8x32xf32>
    %334 = tpu.matmul %331, %333, %cst_183 {dimension_numbers = #tpu.dot_dimension_numbers<[1], [0], [0], [1], [0, 0, 1, 1], [], []>} : vector<8x16xf32>, vector<16x32xf32>, vector<8x32xf32> -> vector<8x32xf32>
    %335 = arith.addf %309, %334 : vector<8x32xf32>
    %336 = tpu.concatenate %277, %335 in 0 : vector<8x32xf32>, vector<8x32xf32> -> vector<16x32xf32>
    %337 = arith.addf %336, %201 : vector<16x32xf32>
    %c0_184 = arith.constant 0 : index
    %c0_185 = arith.constant 0 : index
    %338 = vector.load %arg18[%c0_184, %c0_185] : memref<1x32xf32, #tpu.memory_space<vmem>>, vector<1x32xf32>
    %c0_186 = arith.constant 0 : index
    %c0_187 = arith.constant 0 : index
    %339 = vector.load %arg19[%c0_186, %c0_187] : memref<1x32xf32, #tpu.memory_space<vmem>>, vector<1x32xf32>
    %cst_188 = arith.constant dense<0.000000e+00> : vector<16xf32>
    %340 = vector.multi_reduction <add>, %337, %cst_188 [1] : vector<16x32xf32> to vector<16xf32>
    %341 = vector.shape_cast %340 : vector<16xf32> to vector<16x1xf32>
    %cst_189 = arith.constant 3.200000e+01 : f32
    %342 = vector.broadcast %cst_189 : f32 to vector<16x1xf32>
    %343 = arith.divf %341, %342 : vector<16x1xf32>
    %344 = vector.broadcast %343 : vector<16x1xf32> to vector<16x32xf32>
    %345 = arith.subf %337, %344 : vector<16x32xf32>
    %346 = arith.mulf %345, %345 : vector<16x32xf32>
    %cst_190 = arith.constant dense<0.000000e+00> : vector<16xf32>
    %347 = vector.multi_reduction <add>, %346, %cst_190 [1] : vector<16x32xf32> to vector<16xf32>
    %348 = vector.shape_cast %347 : vector<16xf32> to vector<16x1xf32>
    %cst_191 = arith.constant 3.200000e+01 : f32
    %349 = vector.broadcast %cst_191 : f32 to vector<16x1xf32>
    %350 = arith.divf %348, %349 : vector<16x1xf32>
    %351 = vector.broadcast %343 : vector<16x1xf32> to vector<16x32xf32>
    %352 = arith.subf %337, %351 : vector<16x32xf32>
    %cst_192 = arith.constant 9.99999974E-6 : f32
    %353 = vector.broadcast %cst_192 : f32 to vector<16x1xf32>
    %354 = arith.addf %350, %353 : vector<16x1xf32>
    %355 = math.rsqrt %354 : vector<16x1xf32>
    %356 = vector.broadcast %355 : vector<16x1xf32> to vector<16x32xf32>
    %357 = arith.mulf %352, %356 : vector<16x32xf32>
    %358 = vector.broadcast %338 : vector<1x32xf32> to vector<16x32xf32>
    %359 = arith.mulf %357, %358 : vector<16x32xf32>
    %360 = vector.broadcast %339 : vector<1x32xf32> to vector<16x32xf32>
    %361 = arith.addf %359, %360 : vector<16x32xf32>
    %c0_193 = arith.constant 0 : index
    %c0_194 = arith.constant 0 : index
    %362 = vector.load %arg20[%c0_193, %c0_194] : memref<32x64xf32, #tpu.memory_space<vmem>>, vector<32x64xf32>
    %cst_195 = arith.constant dense<0.000000e+00> : vector<16x64xf32>
    %363 = tpu.matmul %361, %362, %cst_195 {dimension_numbers = #tpu.dot_dimension_numbers<[1], [0], [0], [1], [0, 0, 1, 1], [], []>} : vector<16x32xf32>, vector<32x64xf32>, vector<16x64xf32> -> vector<16x64xf32>
    %c0_196 = arith.constant 0 : index
    %c0_197 = arith.constant 0 : index
    %364 = vector.load %arg21[%c0_196, %c0_197] : memref<1x64xf32, #tpu.memory_space<vmem>>, vector<1x64xf32>
    %365 = vector.broadcast %364 : vector<1x64xf32> to vector<16x64xf32>
    %366 = arith.addf %363, %365 : vector<16x64xf32>
    %cst_198 = arith.constant 0.000000e+00 : f32
    %367 = vector.broadcast %cst_198 : f32 to vector<16x64xf32>
    %368 = arith.maximumf %366, %367 : vector<16x64xf32>
    %c0_199 = arith.constant 0 : index
    %c0_200 = arith.constant 0 : index
    %369 = vector.load %arg22[%c0_199, %c0_200] : memref<64x32xf32, #tpu.memory_space<vmem>>, vector<64x32xf32>
    %cst_201 = arith.constant dense<0.000000e+00> : vector<16x32xf32>
    %370 = tpu.matmul %368, %369, %cst_201 {dimension_numbers = #tpu.dot_dimension_numbers<[1], [0], [0], [1], [0, 0, 1, 1], [], []>} : vector<16x64xf32>, vector<64x32xf32>, vector<16x32xf32> -> vector<16x32xf32>
    %c0_202 = arith.constant 0 : index
    %c0_203 = arith.constant 0 : index
    %371 = vector.load %arg23[%c0_202, %c0_203] : memref<1x32xf32, #tpu.memory_space<vmem>>, vector<1x32xf32>
    %372 = vector.broadcast %371 : vector<1x32xf32> to vector<16x32xf32>
    %373 = arith.addf %370, %372 : vector<16x32xf32>
    %374 = arith.addf %373, %361 : vector<16x32xf32>
    %c0_204 = arith.constant 0 : index
    %c0_205 = arith.constant 0 : index
    %375 = vector.load %arg24[%c0_204, %c0_205] : memref<1x32xf32, #tpu.memory_space<vmem>>, vector<1x32xf32>
    %c0_206 = arith.constant 0 : index
    %c0_207 = arith.constant 0 : index
    %376 = vector.load %arg25[%c0_206, %c0_207] : memref<1x32xf32, #tpu.memory_space<vmem>>, vector<1x32xf32>
    %cst_208 = arith.constant dense<0.000000e+00> : vector<16xf32>
    %377 = vector.multi_reduction <add>, %374, %cst_208 [1] : vector<16x32xf32> to vector<16xf32>
    %378 = vector.shape_cast %377 : vector<16xf32> to vector<16x1xf32>
    %cst_209 = arith.constant 3.200000e+01 : f32
    %379 = vector.broadcast %cst_209 : f32 to vector<16x1xf32>
    %380 = arith.divf %378, %379 : vector<16x1xf32>
    %381 = vector.broadcast %380 : vector<16x1xf32> to vector<16x32xf32>
    %382 = arith.subf %374, %381 : vector<16x32xf32>
    %383 = arith.mulf %382, %382 : vector<16x32xf32>
    %cst_210 = arith.constant dense<0.000000e+00> : vector<16xf32>
    %384 = vector.multi_reduction <add>, %383, %cst_210 [1] : vector<16x32xf32> to vector<16xf32>
    %385 = vector.shape_cast %384 : vector<16xf32> to vector<16x1xf32>
    %cst_211 = arith.constant 3.200000e+01 : f32
    %386 = vector.broadcast %cst_211 : f32 to vector<16x1xf32>
    %387 = arith.divf %385, %386 : vector<16x1xf32>
    %388 = vector.broadcast %380 : vector<16x1xf32> to vector<16x32xf32>
    %389 = arith.subf %374, %388 : vector<16x32xf32>
    %cst_212 = arith.constant 9.99999974E-6 : f32
    %390 = vector.broadcast %cst_212 : f32 to vector<16x1xf32>
    %391 = arith.addf %387, %390 : vector<16x1xf32>
    %392 = math.rsqrt %391 : vector<16x1xf32>
    %393 = vector.broadcast %392 : vector<16x1xf32> to vector<16x32xf32>
    %394 = arith.mulf %389, %393 : vector<16x32xf32>
    %395 = vector.broadcast %375 : vector<1x32xf32> to vector<16x32xf32>
    %396 = arith.mulf %394, %395 : vector<16x32xf32>
    %397 = vector.broadcast %376 : vector<1x32xf32> to vector<16x32xf32>
    %398 = arith.addf %396, %397 : vector<16x32xf32>
    %c0_213 = arith.constant 0 : index
    %c0_214 = arith.constant 0 : index
    %399 = vector.load %arg26[%c0_213, %c0_214] : memref<32x128xf32, #tpu.memory_space<vmem>>, vector<32x128xf32>
    %cst_215 = arith.constant dense<0.000000e+00> : vector<16x128xf32>
    %400 = tpu.matmul %398, %399, %cst_215 {dimension_numbers = #tpu.dot_dimension_numbers<[1], [0], [0], [1], [0, 0, 1, 1], [], []>} : vector<16x32xf32>, vector<32x128xf32>, vector<16x128xf32> -> vector<16x128xf32>
    %c0_216 = arith.constant 0 : index
    %c0_217 = arith.constant 0 : index
    %401 = vector.load %arg27[%c0_216, %c0_217] : memref<1x128xf32, #tpu.memory_space<vmem>>, vector<1x128xf32>
    %402 = vector.broadcast %401 : vector<1x128xf32> to vector<16x128xf32>
    %403 = arith.addf %400, %402 : vector<16x128xf32>
    %c0_218 = arith.constant 0 : index
    %c0_219 = arith.constant 0 : index
    %404 = vector.load %arg28[%c0_218, %c0_219] : memref<16x128xf32, #tpu.memory_space<vmem>>, vector<16x128xf32>
    tpu.vector_store %arg28[%c0_218, %c0_219], %403 {strides = array<i32>} : memref<16x128xf32, #tpu.memory_space<vmem>>, vector<16x128xf32>,
    return
  }
}

</mosaic_0001>

<llo_original>
// kernel: gpt_forward.1
$region0: #{gpt_forward.1}
  #allocation0 [shape = 'u32[]', space=smem, size = 0x4, offset = 0x4, fixed_abs, tag = 'smem constant byte address 0x4 - core index']
  #allocation1 [shape = 'u32[144,128]{1,0:T(1,128)}', space=vmem, size = 0x12000, scoped, tag = 'internal scratch']
  %s0 = inlined_call_operand.smem [shape: u32[30], index: -1, kind: input, shape index: {}]
  %s1 = sld [smem:[%s0]]
  %s2 = scalar_lea.smem %s0, 1
  %s3 = sld [smem:[%s2]]
  %s4 = scalar_lea.smem %s0, 2
  %s5 = sld [smem:[%s4]]
  %s6 = scalar_lea.smem %s0, 3
  %s7 = sld [smem:[%s6]]
  %s8 = scalar_lea.smem %s0, 4
  %s9 = sld [smem:[%s8]]
  %s10 = scalar_lea.smem %s0, 5
  %s11 = sld [smem:[%s10]]
  %s12 = scalar_lea.smem %s0, 6
  %s13 = sld [smem:[%s12]]
  %s14 = scalar_lea.smem %s0, 7
  %s15 = sld [smem:[%s14]]
  %s16 = scalar_lea.smem %s0, 8
  %s17 = sld [smem:[%s16]]
  %s18 = scalar_lea.smem %s0, 9
  %s19 = sld [smem:[%s18]]
  %s20 = scalar_lea.smem %s0, 10
  %s21 = sld [smem:[%s20]]
  %s22 = scalar_lea.smem %s0, 11
  %s23 = sld [smem:[%s22]]
  %s24 = scalar_lea.smem %s0, 12
  %s25 = sld [smem:[%s24]]
  %s26 = scalar_lea.smem %s0, 13
  %s27 = sld [smem:[%s26]]
  %s28 = scalar_lea.smem %s0, 14
  %s29 = sld [smem:[%s28]]
  %s30 = scalar_lea.smem %s0, 15
  %s31 = sld [smem:[%s30]]
  %s32 = scalar_lea.smem %s0, 16
  %s33 = sld [smem:[%s32]]
  %s34 = scalar_lea.smem %s0, 17
  %s35 = sld [smem:[%s34]]
  %s36 = scalar_lea.smem %s0, 18
  %s37 = sld [smem:[%s36]]
  %s38 = scalar_lea.smem %s0, 19
  %s39 = sld [smem:[%s38]]
  %s40 = scalar_lea.smem %s0, 20
  %s41 = sld [smem:[%s40]]
  %s42 = scalar_lea.smem %s0, 21
  %s43 = sld [smem:[%s42]]
  %s44 = scalar_lea.smem %s0, 22
  %s45 = sld [smem:[%s44]]
  %s46 = scalar_lea.smem %s0, 23
  %s47 = sld [smem:[%s46]]
  %s48 = scalar_lea.smem %s0, 24
  %s49 = sld [smem:[%s48]]
  %s50 = scalar_lea.smem %s0, 25
  %s51 = sld [smem:[%s50]]
  %s52 = scalar_lea.smem %s0, 26
  %s53 = sld [smem:[%s52]]
  %s54 = scalar_lea.smem %s0, 27
  %s55 = sld [smem:[%s54]]
  %s56 = scalar_lea.smem %s0, 28
  %s57 = sld [smem:[%s56]]
  %s58 = scalar_lea.smem %s0, 29
  %s59 = sld [smem:[%s58]]
  %60 = xla_tuple %s57, %s59
  %s61 = sld [smem:[#allocation0]]
  $region130: #{gpt_forward.1} parent=0
    _
  %s63 = ssub.s32 1, %s61
  %s64 = scalar_select 0, %s63, %s61
  $region1: #{gpt_forward.1} parent=0
    #allocation2 [shape = 'u8[8192]{0}', space=vmem, size = 0x2000, scoped, tag = 'output window, operand 0, single buffered']
    #allocation3 [shape = 's32[1]{0}', space=sflag, size = 0x4, scoped, tag = 'scoped memory for gpt_forward.1']
    %65 = vsyncpa [#allocation3], 0
    // Predicated region
    $region2: #{gpt_forward.1} parent=1 // pred_check
      _
    $region3: #{gpt_forward.1} parent=1 // pred_check_branch
      %67 = sbr.rel (0) target = $region5
    $region4: #{gpt_forward.1} parent=1 // pred_region
      _
    $region5: #{gpt_forward.1} parent=1 // pred_fallthru
      _
    // Predicated region
    $region6: #{gpt_forward.1} parent=1 // pred_check
      _
    $region7: #{gpt_forward.1} parent=1 // pred_check_branch
      %69 = sbr.rel (0) target = $region9
    $region8: #{gpt_forward.1} parent=1 // pred_region
      _
    $region9: #{gpt_forward.1} parent=1 // pred_fallthru
      _
    // Predicated region
    $region10: #{gpt_forward.1} parent=1 // pred_check
      _
    $region11: #{gpt_forward.1} parent=1 // pred_check_branch
      %71 = sbr.rel (0) target = $region13
    $region12: #{gpt_forward.1} parent=1 // pred_region
      _
    $region13: #{gpt_forward.1} parent=1 // pred_fallthru
      _
    // Predicated region
    $region14: #{gpt_forward.1} parent=1 // pred_check
      _
    $region15: #{gpt_forward.1} parent=1 // pred_check_branch
      %73 = sbr.rel (0) target = $region17
    $region16: #{gpt_forward.1} parent=1 // pred_region
      _
    $region17: #{gpt_forward.1} parent=1 // pred_fallthru
      _
    // Predicated region
    $region18: #{gpt_forward.1} parent=1 // pred_check
      _
    $region19: #{gpt_forward.1} parent=1 // pred_check_branch
      %75 = sbr.rel (0) target = $region21
    $region20: #{gpt_forward.1} parent=1 // pred_region
      _
    $region21: #{gpt_forward.1} parent=1 // pred_fallthru
      _
    // Predicated region
    $region22: #{gpt_forward.1} parent=1 // pred_check
      _
    $region23: #{gpt_forward.1} parent=1 // pred_check_branch
      %77 = sbr.rel (0) target = $region25
    $region24: #{gpt_forward.1} parent=1 // pred_region
      _
    $region25: #{gpt_forward.1} parent=1 // pred_fallthru
      _
    // Predicated region
    $region26: #{gpt_forward.1} parent=1 // pred_check
      _
    $region27: #{gpt_forward.1} parent=1 // pred_check_branch
      %79 = sbr.rel (0) target = $region29
    $region28: #{gpt_forward.1} parent=1 // pred_region
      _
    $region29: #{gpt_forward.1} parent=1 // pred_fallthru
      _
    // Predicated region
    $region30: #{gpt_forward.1} parent=1 // pred_check
      _
    $region31: #{gpt_forward.1} parent=1 // pred_check_branch
      %81 = sbr.rel (0) target = $region33
    $region32: #{gpt_forward.1} parent=1 // pred_region
      _
    $region33: #{gpt_forward.1} parent=1 // pred_fallthru
      _
    // Predicated region
    $region34: #{gpt_forward.1} parent=1 // pred_check
      _
    $region35: #{gpt_forward.1} parent=1 // pred_check_branch
      %83 = sbr.rel (0) target = $region37
    $region36: #{gpt_forward.1} parent=1 // pred_region
      _
    $region37: #{gpt_forward.1} parent=1 // pred_fallthru
      _
    // Predicated region
    $region38: #{gpt_forward.1} parent=1 // pred_check
      _
    $region39: #{gpt_forward.1} parent=1 // pred_check_branch
      %85 = sbr.rel (0) target = $region41
    $region40: #{gpt_forward.1} parent=1 // pred_region
      _
    $region41: #{gpt_forward.1} parent=1 // pred_fallthru
      _
    // Predicated region
    $region42: #{gpt_forward.1} parent=1 // pred_check
      _
    $region43: #{gpt_forward.1} parent=1 // pred_check_branch
      %87 = sbr.rel (0) target = $region45
    $region44: #{gpt_forward.1} parent=1 // pred_region
      _
    $region45: #{gpt_forward.1} parent=1 // pred_fallthru
      _
    // Predicated region
    $region46: #{gpt_forward.1} parent=1 // pred_check
      _
    $region47: #{gpt_forward.1} parent=1 // pred_check_branch
      %89 = sbr.rel (0) target = $region49
    $region48: #{gpt_forward.1} parent=1 // pred_region
      _
    $region49: #{gpt_forward.1} parent=1 // pred_fallthru
      _
    // Predicated region
    $region50: #{gpt_forward.1} parent=1 // pred_check
      _
    $region51: #{gpt_forward.1} parent=1 // pred_check_branch
      %91 = sbr.rel (0) target = $region53
    $region52: #{gpt_forward.1} parent=1 // pred_region
      _
    $region53: #{gpt_forward.1} parent=1 // pred_fallthru
      _
    // Predicated region
    $region54: #{gpt_forward.1} parent=1 // pred_check
      _
    $region55: #{gpt_forward.1} parent=1 // pred_check_branch
      %93 = sbr.rel (0) target = $region57
    $region56: #{gpt_forward.1} parent=1 // pred_region
      _
    $region57: #{gpt_forward.1} parent=1 // pred_fallthru
      _
    // Predicated region
    $region58: #{gpt_forward.1} parent=1 // pred_check
      _
    $region59: #{gpt_forward.1} parent=1 // pred_check_branch
      %95 = sbr.rel (0) target = $region61
    $region60: #{gpt_forward.1} parent=1 // pred_region
      _
    $region61: #{gpt_forward.1} parent=1 // pred_fallthru
      _
    // Predicated region
    $region62: #{gpt_forward.1} parent=1 // pred_check
      _
    $region63: #{gpt_forward.1} parent=1 // pred_check_branch
      %97 = sbr.rel (0) target = $region65
    $region64: #{gpt_forward.1} parent=1 // pred_region
      _
    $region65: #{gpt_forward.1} parent=1 // pred_fallthru
      _
    // Predicated region
    $region66: #{gpt_forward.1} parent=1 // pred_check
      _
    $region67: #{gpt_forward.1} parent=1 // pred_check_branch
      %99 = sbr.rel (0) target = $region69
    $region68: #{gpt_forward.1} parent=1 // pred_region
      _
    $region69: #{gpt_forward.1} parent=1 // pred_fallthru
      _
    // Predicated region
    $region70: #{gpt_forward.1} parent=1 // pred_check
      _
    $region71: #{gpt_forward.1} parent=1 // pred_check_branch
      %101 = sbr.rel (0) target = $region73
    $region72: #{gpt_forward.1} parent=1 // pred_region
      _
    $region73: #{gpt_forward.1} parent=1 // pred_fallthru
      _
    // Predicated region
    $region74: #{gpt_forward.1} parent=1 // pred_check
      _
    $region75: #{gpt_forward.1} parent=1 // pred_check_branch
      %103 = sbr.rel (0) target = $region77
    $region76: #{gpt_forward.1} parent=1 // pred_region
      _
    $region77: #{gpt_forward.1} parent=1 // pred_fallthru
      _
    // Predicated region
    $region78: #{gpt_forward.1} parent=1 // pred_check
      _
    $region79: #{gpt_forward.1} parent=1 // pred_check_branch
      %105 = sbr.rel (0) target = $region81
    $region80: #{gpt_forward.1} parent=1 // pred_region
      _
    $region81: #{gpt_forward.1} parent=1 // pred_fallthru
      _
    // Predicated region
    $region82: #{gpt_forward.1} parent=1 // pred_check
      _
    $region83: #{gpt_forward.1} parent=1 // pred_check_branch
      %107 = sbr.rel (0) target = $region85
    $region84: #{gpt_forward.1} parent=1 // pred_region
      _
    $region85: #{gpt_forward.1} parent=1 // pred_fallthru
      _
    // Predicated region
    $region86: #{gpt_forward.1} parent=1 // pred_check
      _
    $region87: #{gpt_forward.1} parent=1 // pred_check_branch
      %109 = sbr.rel (0) target = $region89
    $region88: #{gpt_forward.1} parent=1 // pred_region
      _
    $region89: #{gpt_forward.1} parent=1 // pred_fallthru
      _
    // Predicated region
    $region90: #{gpt_forward.1} parent=1 // pred_check
      _
    $region91: #{gpt_forward.1} parent=1 // pred_check_branch
      %111 = sbr.rel (0) target = $region93
    $region92: #{gpt_forward.1} parent=1 // pred_region
      _
    $region93: #{gpt_forward.1} parent=1 // pred_fallthru
      _
    // Predicated region
    $region94: #{gpt_forward.1} parent=1 // pred_check
      _
    $region95: #{gpt_forward.1} parent=1 // pred_check_branch
      %113 = sbr.rel (0) target = $region97
    $region96: #{gpt_forward.1} parent=1 // pred_region
      _
    $region97: #{gpt_forward.1} parent=1 // pred_fallthru
      _
    // Predicated region
    $region98: #{gpt_forward.1} parent=1 // pred_check
      _
    $region99: #{gpt_forward.1} parent=1 // pred_check_branch
      %115 = sbr.rel (0) target = $region101
    $region100: #{gpt_forward.1} parent=1 // pred_region
      _
    $region101: #{gpt_forward.1} parent=1 // pred_fallthru
      _
    // Predicated region
    $region102: #{gpt_forward.1} parent=1 // pred_check
      _
    $region103: #{gpt_forward.1} parent=1 // pred_check_branch
      %117 = sbr.rel (0) target = $region105
    $region104: #{gpt_forward.1} parent=1 // pred_region
      _
    $region105: #{gpt_forward.1} parent=1 // pred_fallthru
      _
    // Predicated region
    $region106: #{gpt_forward.1} parent=1 // pred_check
      _
    $region107: #{gpt_forward.1} parent=1 // pred_check_branch
      %119 = sbr.rel (0) target = $region109
    $region108: #{gpt_forward.1} parent=1 // pred_region
      _
    $region109: #{gpt_forward.1} parent=1 // pred_fallthru
      _
    // Predicated region
    $region110: #{gpt_forward.1} parent=1 // pred_check
      _
    $region111: #{gpt_forward.1} parent=1 // pred_check_branch
      %121 = sbr.rel (0) target = $region113
    $region112: #{gpt_forward.1} parent=1 // pred_region
      _
    $region113: #{gpt_forward.1} parent=1 // pred_fallthru
      _
    %v122 = vld [vmem:[%s1] sm:$0xff]
    %v123 = vld [vmem:[%s1 + $0x8] sm:$0xff]
    %v124 = vld [vmem:[%s3] sm:$0x3]
    %v125 = vlaneseq
    %v126 = vshrl.u32 %v125, 7
    %v127 = vlaneseq
    %v128 = vand.u32 %v127, 127
    %vm129 = vcmp.gt.s32.totalorder %v128, %v126
    %v130 = vld [vmem:[%s5] sm:$0xff]
    %v131 = vld [vmem:[%s5 + $0x8] sm:$0xff]
    %v132 = vld [vmem:[%s5 + $0x10] sm:$0xff]
    %v133 = vld [vmem:[%s5 + $0x18] sm:$0xff]
    %vm134 = vcmask 261120
    %v136 = vsel %vm134, %v122, 0
    %v139 = vsel %vm134, %v123, 0
    %141 = vmatprep.subr.mxu0 0.0
    %142 = vmatpush1.msra.mxu0 0.0
    %143 = vmatprep.subr.mxu0 0.0
    %144 = vmatpush1.msra.mxu0 0.0
    %145 = vmatprep.subr.mxu0 0.0
    %146 = vmatpush1.msra.mxu0 0.0
    %147 = vmatprep.subr.mxu0 0.0
    %148 = vmatpush1.msra.mxu0 0.0
    %149 = vmatprep.subr.mxu0 0.0
    %150 = vmatpush1.msra.mxu0 0.0
    %151 = vmatprep.subr.mxu0 0.0
    %152 = vmatpush1.msra.mxu0 0.0
    %153 = vmatprep.subr.mxu0 0.0
    %154 = vmatpush1.msra.mxu0 0.0
    %155 = vmatprep.subr.mxu0 0.0
    %156 = vmatpush1.msra.mxu0 0.0
    %157 = vmatprep.subr.mxu0 0.0
    %158 = vmatpush1.msra.mxu0 0.0
    %159 = vmatprep.subr.mxu0 0.0
    %160 = vmatpush1.msra.mxu0 0.0
    %161 = vmatprep.subr.mxu0 0.0
    %162 = vmatpush1.msra.mxu0 0.0
    %163 = vmatprep.subr.mxu0 0.0
    %164 = vmatpush1.msra.mxu0 0.0
    %165 = vmatprep.subr.mxu0 0.0
    %166 = vmatpush1.msra.mxu0 %v133
    %167 = vmatprep.subr.mxu0 0.0
    %168 = vmatpush1.msra.mxu0 %v132
    %169 = vmatprep.subr.mxu0 0.0
    %170 = vmatpush1.msra.mxu0 %v131
    %171 = vmatprep.subr.mxu0 0.0
    %172 = vmatpush1.msra.mxu0 %v130
    %173 = vmatprep.subr.mxu0 0.0
    %174 = vmatpush2.msra.mxu0 0.0
    %175 = vmatprep.subr.mxu0 0.0
    %176 = vmatpush2.msra.mxu0 0.0
    %177 = vmatprep.subr.mxu0 0.0
    %178 = vmatpush2.msra.mxu0 0.0
    %179 = vmatprep.subr.mxu0 0.0
    %180 = vmatpush2.msra.mxu0 0.0
    %181 = vmatprep.subr.mxu0 0.0
    %182 = vmatpush2.msra.mxu0 0.0
    %183 = vmatprep.subr.mxu0 0.0
    %184 = vmatpush2.msra.mxu0 0.0
    %185 = vmatprep.subr.mxu0 0.0
    %186 = vmatpush2.msra.mxu0 0.0
    %187 = vmatprep.subr.mxu0 0.0
    %188 = vmatpush2.msra.mxu0 0.0
    %189 = vmatprep.subr.mxu0 0.0
    %190 = vmatpush2.msra.mxu0 0.0
    %191 = vmatprep.subr.mxu0 0.0
    %192 = vmatpush2.msra.mxu0 0.0
    %193 = vmatprep.subr.mxu0 0.0
    %194 = vmatpush2.msra.mxu0 0.0
    %195 = vmatprep.subr.mxu0 0.0
    %196 = vmatpush2.msra.mxu0 0.0
    %197 = vmatprep.subr.mxu0 0.0
    %198 = vmatpush2.msra.mxu0 0.0
    %199 = vmatprep.subr.mxu0 0.0
    %200 = vmatpush2.msra.mxu0 0.0
    %201 = vmatprep.subr.mxu0 0.0
    %202 = vmatpush2.msra.mxu0 0.0
    %203 = vmatprep.subr.mxu0 0.0
    %204 = vmatpush2.msra.mxu0 0.0
    %205 = vmatprep.mubr.f32.mxu0 0.0
    %206 = vmatmul.mubr.f32.gmra.mxu0 %v136
    %v207 = vpop.f32.mrf.mxu0
    %v208 = vadd.f32 0.0, %v207
    %v209 = vpop.f32.mrf.mxu0
    %210 = vmatprep.mubr.f32.mxu0 0.0
    %211 = vmatmul.mubr.f32.gmra.mxu0 %v139
    %v212 = vpop.f32.mrf.mxu0
    %v213 = vadd.f32 0.0, %v212
    %v214 = vpop.f32.mrf.mxu0
    %215 = vdwg.mxu0
    %s216 = scalar_lea.vmem %s5, 32
    %v217 = vld [vmem:[%s216] sm:$0xff]
    %v218 = vld [vmem:[%s216 + $0x8] sm:$0xff]
    %v219 = vld [vmem:[%s216 + $0x10] sm:$0xff]
    %v220 = vld [vmem:[%s216 + $0x18] sm:$0xff]
    %221 = vmatprep.subr.mxu0 0.0
    %222 = vmatpush1.msra.mxu0 0.0
    %223 = vmatprep.subr.mxu0 0.0
    %224 = vmatpush1.msra.mxu0 0.0
    %225 = vmatprep.subr.mxu0 0.0
    %226 = vmatpush1.msra.mxu0 0.0
    %227 = vmatprep.subr.mxu0 0.0
    %228 = vmatpush1.msra.mxu0 0.0
    %229 = vmatprep.subr.mxu0 0.0
    %230 = vmatpush1.msra.mxu0 0.0
    %231 = vmatprep.subr.mxu0 0.0
    %232 = vmatpush1.msra.mxu0 0.0
    %233 = vmatprep.subr.mxu0 0.0
    %234 = vmatpush1.msra.mxu0 0.0
    %235 = vmatprep.subr.mxu0 0.0
    %236 = vmatpush1.msra.mxu0 0.0
    %237 = vmatprep.subr.mxu0 0.0
    %238 = vmatpush1.msra.mxu0 0.0
    %239 = vmatprep.subr.mxu0 0.0
    %240 = vmatpush1.msra.mxu0 0.0
    %241 = vmatprep.subr.mxu0 0.0
    %242 = vmatpush1.msra.mxu0 0.0
    %243 = vmatprep.subr.mxu0 0.0
    %244 = vmatpush1.msra.mxu0 0.0
    %245 = vmatprep.subr.mxu0 0.0
    %246 = vmatpush1.msra.mxu0 %v220
    %247 = vmatprep.subr.mxu0 0.0
    %248 = vmatpush1.msra.mxu0 %v219
    %249 = vmatprep.subr.mxu0 0.0
    %250 = vmatpush1.msra.mxu0 %v218
    %251 = vmatprep.subr.mxu0 0.0
    %252 = vmatpush1.msra.mxu0 %v217
    %253 = vmatprep.subr.mxu0 0.0
    %254 = vmatpush2.msra.mxu0 0.0
    %255 = vmatprep.subr.mxu0 0.0
    %256 = vmatpush2.msra.mxu0 0.0
    %257 = vmatprep.subr.mxu0 0.0
    %258 = vmatpush2.msra.mxu0 0.0
    %259 = vmatprep.subr.mxu0 0.0
    %260 = vmatpush2.msra.mxu0 0.0
    %261 = vmatprep.subr.mxu0 0.0
    %262 = vmatpush2.msra.mxu0 0.0
    %263 = vmatprep.subr.mxu0 0.0
    %264 = vmatpush2.msra.mxu0 0.0
    %265 = vmatprep.subr.mxu0 0.0
    %266 = vmatpush2.msra.mxu0 0.0
    %267 = vmatprep.subr.mxu0 0.0
    %268 = vmatpush2.msra.mxu0 0.0
    %269 = vmatprep.subr.mxu0 0.0
    %270 = vmatpush2.msra.mxu0 0.0
    %271 = vmatprep.subr.mxu0 0.0
    %272 = vmatpush2.msra.mxu0 0.0
    %273 = vmatprep.subr.mxu0 0.0
    %274 = vmatpush2.msra.mxu0 0.0
    %275 = vmatprep.subr.mxu0 0.0
    %276 = vmatpush2.msra.mxu0 0.0
    %277 = vmatprep.subr.mxu0 0.0
    %278 = vmatpush2.msra.mxu0 0.0
    %279 = vmatprep.subr.mxu0 0.0
    %280 = vmatpush2.msra.mxu0 0.0
    %281 = vmatprep.subr.mxu0 0.0
    %282 = vmatpush2.msra.mxu0 0.0
    %283 = vmatprep.subr.mxu0 0.0
    %284 = vmatpush2.msra.mxu0 0.0
    %285 = vmatprep.mubr.f32.mxu0 0.0
    %286 = vmatmul.mubr.f32.gmra.mxu0 %v136
    %v287 = vpop.f32.mrf.mxu0
    %v288 = vadd.f32 0.0, %v287
    %v289 = vpop.f32.mrf.mxu0
    %290 = vmatprep.mubr.f32.mxu0 0.0
    %291 = vmatmul.mubr.f32.gmra.mxu0 %v139
    %v292 = vpop.f32.mrf.mxu0
    %v293 = vadd.f32 0.0, %v292
    %v294 = vpop.f32.mrf.mxu0
    %295 = vdwg.mxu0
    %v296 = vld [vmem:[%s7] sm:$0xff]
    %v297 = vld [vmem:[%s7 + $0x8] sm:$0xff]
    %v298 = vld [vmem:[%s7 + $0x10] sm:$0xff]
    %v299 = vld [vmem:[%s7 + $0x18] sm:$0xff]
    %300 = vmatprep.subr.mxu0 0.0
    %301 = vmatpush1.msra.mxu0 0.0
    %302 = vmatprep.subr.mxu0 0.0
    %303 = vmatpush1.msra.mxu0 0.0
    %304 = vmatprep.subr.mxu0 0.0
    %305 = vmatpush1.msra.mxu0 0.0
    %306 = vmatprep.subr.mxu0 0.0
    %307 = vmatpush1.msra.mxu0 0.0
    %308 = vmatprep.subr.mxu0 0.0
    %309 = vmatpush1.msra.mxu0 0.0
    %310 = vmatprep.subr.mxu0 0.0
    %311 = vmatpush1.msra.mxu0 0.0
    %312 = vmatprep.subr.mxu0 0.0
    %313 = vmatpush1.msra.mxu0 0.0
    %314 = vmatprep.subr.mxu0 0.0
    %315 = vmatpush1.msra.mxu0 0.0
    %316 = vmatprep.subr.mxu0 0.0
    %317 = vmatpush1.msra.mxu0 0.0
    %318 = vmatprep.subr.mxu0 0.0
    %319 = vmatpush1.msra.mxu0 0.0
    %320 = vmatprep.subr.mxu0 0.0
    %321 = vmatpush1.msra.mxu0 0.0
    %322 = vmatprep.subr.mxu0 0.0
    %323 = vmatpush1.msra.mxu0 0.0
    %324 = vmatprep.subr.mxu0 0.0
    %325 = vmatpush1.msra.mxu0 %v299
    %326 = vmatprep.subr.mxu0 0.0
    %327 = vmatpush1.msra.mxu0 %v298
    %328 = vmatprep.subr.mxu0 0.0
    %329 = vmatpush1.msra.mxu0 %v297
    %330 = vmatprep.subr.mxu0 0.0
    %331 = vmatpush1.msra.mxu0 %v296
    %332 = vmatprep.subr.mxu0 0.0
    %333 = vmatpush2.msra.mxu0 0.0
    %334 = vmatprep.subr.mxu0 0.0
    %335 = vmatpush2.msra.mxu0 0.0
    %336 = vmatprep.subr.mxu0 0.0
    %337 = vmatpush2.msra.mxu0 0.0
    %338 = vmatprep.subr.mxu0 0.0
    %339 = vmatpush2.msra.mxu0 0.0
    %340 = vmatprep.subr.mxu0 0.0
    %341 = vmatpush2.msra.mxu0 0.0
    %342 = vmatprep.subr.mxu0 0.0
    %343 = vmatpush2.msra.mxu0 0.0
    %344 = vmatprep.subr.mxu0 0.0
    %345 = vmatpush2.msra.mxu0 0.0
    %346 = vmatprep.subr.mxu0 0.0
    %347 = vmatpush2.msra.mxu0 0.0
    %348 = vmatprep.subr.mxu0 0.0
    %349 = vmatpush2.msra.mxu0 0.0
    %350 = vmatprep.subr.mxu0 0.0
    %351 = vmatpush2.msra.mxu0 0.0
    %352 = vmatprep.subr.mxu0 0.0
    %353 = vmatpush2.msra.mxu0 0.0
    %354 = vmatprep.subr.mxu0 0.0
    %355 = vmatpush2.msra.mxu0 0.0
    %356 = vmatprep.subr.mxu0 0.0
    %357 = vmatpush2.msra.mxu0 0.0
    %358 = vmatprep.subr.mxu0 0.0
    %359 = vmatpush2.msra.mxu0 0.0
    %360 = vmatprep.subr.mxu0 0.0
    %361 = vmatpush2.msra.mxu0 0.0
    %362 = vmatprep.subr.mxu0 0.0
    %363 = vmatpush2.msra.mxu0 0.0
    %364 = vmatprep.mubr.f32.mxu0 0.0
    %365 = vmatmul.mubr.f32.gmra.mxu0 %v136
    %v366 = vpop.f32.mrf.mxu0
    %v367 = vadd.f32 0.0, %v366
    %v368 = vpop.f32.mrf.mxu0
    %369 = vmatprep.mubr.f32.mxu0 0.0
    %370 = vmatmul.mubr.f32.gmra.mxu0 %v139
    %v371 = vpop.f32.mrf.mxu0
    %v372 = vadd.f32 0.0, %v371
    %v373 = vpop.f32.mrf.mxu0
    %374 = vdwg.mxu0
    %s375 = scalar_lea.vmem %s7, 32
    %v376 = vld [vmem:[%s375] sm:$0xff]
    %v377 = vld [vmem:[%s375 + $0x8] sm:$0xff]
    %v378 = vld [vmem:[%s375 + $0x10] sm:$0xff]
    %v379 = vld [vmem:[%s375 + $0x18] sm:$0xff]
    %380 = vmatprep.subr.mxu0 0.0
    %381 = vmatpush1.msra.mxu0 0.0
    %382 = vmatprep.subr.mxu0 0.0
    %383 = vmatpush1.msra.mxu0 0.0
    %384 = vmatprep.subr.mxu0 0.0
    %385 = vmatpush1.msra.mxu0 0.0
    %386 = vmatprep.subr.mxu0 0.0
    %387 = vmatpush1.msra.mxu0 0.0
    %388 = vmatprep.subr.mxu0 0.0
    %389 = vmatpush1.msra.mxu0 0.0
    %390 = vmatprep.subr.mxu0 0.0
    %391 = vmatpush1.msra.mxu0 0.0
    %392 = vmatprep.subr.mxu0 0.0
    %393 = vmatpush1.msra.mxu0 0.0
    %394 = vmatprep.subr.mxu0 0.0
    %395 = vmatpush1.msra.mxu0 0.0
    %396 = vmatprep.subr.mxu0 0.0
    %397 = vmatpush1.msra.mxu0 0.0
    %398 = vmatprep.subr.mxu0 0.0
    %399 = vmatpush1.msra.mxu0 0.0
    %400 = vmatprep.subr.mxu0 0.0
    %401 = vmatpush1.msra.mxu0 0.0
    %402 = vmatprep.subr.mxu0 0.0
    %403 = vmatpush1.msra.mxu0 0.0
    %404 = vmatprep.subr.mxu0 0.0
    %405 = vmatpush1.msra.mxu0 %v379
    %406 = vmatprep.subr.mxu0 0.0
    %407 = vmatpush1.msra.mxu0 %v378
    %408 = vmatprep.subr.mxu0 0.0
    %409 = vmatpush1.msra.mxu0 %v377
    %410 = vmatprep.subr.mxu0 0.0
    %411 = vmatpush1.msra.mxu0 %v376
    %412 = vmatprep.subr.mxu0 0.0
    %413 = vmatpush2.msra.mxu0 0.0
    %414 = vmatprep.subr.mxu0 0.0
    %415 = vmatpush2.msra.mxu0 0.0
    %416 = vmatprep.subr.mxu0 0.0
    %417 = vmatpush2.msra.mxu0 0.0
    %418 = vmatprep.subr.mxu0 0.0
    %419 = vmatpush2.msra.mxu0 0.0
    %420 = vmatprep.subr.mxu0 0.0
    %421 = vmatpush2.msra.mxu0 0.0
    %422 = vmatprep.subr.mxu0 0.0
    %423 = vmatpush2.msra.mxu0 0.0
    %424 = vmatprep.subr.mxu0 0.0
    %425 = vmatpush2.msra.mxu0 0.0
    %426 = vmatprep.subr.mxu0 0.0
    %427 = vmatpush2.msra.mxu0 0.0
    %428 = vmatprep.subr.mxu0 0.0
    %429 = vmatpush2.msra.mxu0 0.0
    %430 = vmatprep.subr.mxu0 0.0
    %431 = vmatpush2.msra.mxu0 0.0
    %432 = vmatprep.subr.mxu0 0.0
    %433 = vmatpush2.msra.mxu0 0.0
    %434 = vmatprep.subr.mxu0 0.0
    %435 = vmatpush2.msra.mxu0 0.0
    %436 = vmatprep.subr.mxu0 0.0
    %437 = vmatpush2.msra.mxu0 0.0
    %438 = vmatprep.subr.mxu0 0.0
    %439 = vmatpush2.msra.mxu0 0.0
    %440 = vmatprep.subr.mxu0 0.0
    %441 = vmatpush2.msra.mxu0 0.0
    %442 = vmatprep.subr.mxu0 0.0
    %443 = vmatpush2.msra.mxu0 0.0
    %444 = vmatprep.mubr.f32.mxu0 0.0
    %445 = vmatmul.mubr.f32.gmra.mxu0 %v136
    %v446 = vpop.f32.mrf.mxu0
    %v447 = vadd.f32 0.0, %v446
    %v448 = vpop.f32.mrf.mxu0
    %449 = vmatprep.mubr.f32.mxu0 0.0
    %450 = vmatmul.mubr.f32.gmra.mxu0 %v139
    %v451 = vpop.f32.mrf.mxu0
    %v452 = vadd.f32 0.0, %v451
    %v453 = vpop.f32.mrf.mxu0
    %454 = vdwg.mxu0
    %v455 = vld [vmem:[%s9] sm:$0xff]
    %v456 = vld [vmem:[%s9 + $0x8] sm:$0xff]
    %v457 = vld [vmem:[%s9 + $0x10] sm:$0xff]
    %v458 = vld [vmem:[%s9 + $0x18] sm:$0xff]
    %459 = vmatprep.subr.mxu0 0.0
    %460 = vmatpush1.msra.mxu0 0.0
    %461 = vmatprep.subr.mxu0 0.0
    %462 = vmatpush1.msra.mxu0 0.0
    %463 = vmatprep.subr.mxu0 0.0
    %464 = vmatpush1.msra.mxu0 0.0
    %465 = vmatprep.subr.mxu0 0.0
    %466 = vmatpush1.msra.mxu0 0.0
    %467 = vmatprep.subr.mxu0 0.0
    %468 = vmatpush1.msra.mxu0 0.0
    %469 = vmatprep.subr.mxu0 0.0
    %470 = vmatpush1.msra.mxu0 0.0
    %471 = vmatprep.subr.mxu0 0.0
    %472 = vmatpush1.msra.mxu0 0.0
    %473 = vmatprep.subr.mxu0 0.0
    %474 = vmatpush1.msra.mxu0 0.0
    %475 = vmatprep.subr.mxu0 0.0
    %476 = vmatpush1.msra.mxu0 0.0
    %477 = vmatprep.subr.mxu0 0.0
    %478 = vmatpush1.msra.mxu0 0.0
    %479 = vmatprep.subr.mxu0 0.0
    %480 = vmatpush1.msra.mxu0 0.0
    %481 = vmatprep.subr.mxu0 0.0
    %482 = vmatpush1.msra.mxu0 0.0
    %483 = vmatprep.subr.mxu0 0.0
    %484 = vmatpush1.msra.mxu0 %v458
    %485 = vmatprep.subr.mxu0 0.0
    %486 = vmatpush1.msra.mxu0 %v457
    %487 = vmatprep.subr.mxu0 0.0
    %488 = vmatpush1.msra.mxu0 %v456
    %489 = vmatprep.subr.mxu0 0.0
    %490 = vmatpush1.msra.mxu0 %v455
    %491 = vmatprep.subr.mxu0 0.0
    %492 = vmatpush2.msra.mxu0 0.0
    %493 = vmatprep.subr.mxu0 0.0
    %494 = vmatpush2.msra.mxu0 0.0
    %495 = vmatprep.subr.mxu0 0.0
    %496 = vmatpush2.msra.mxu0 0.0
    %497 = vmatprep.subr.mxu0 0.0
    %498 = vmatpush2.msra.mxu0 0.0
    %499 = vmatprep.subr.mxu0 0.0
    %500 = vmatpush2.msra.mxu0 0.0
    %501 = vmatprep.subr.mxu0 0.0
    %502 = vmatpush2.msra.mxu0 0.0
    %503 = vmatprep.subr.mxu0 0.0
    %504 = vmatpush2.msra.mxu0 0.0
    %505 = vmatprep.subr.mxu0 0.0
    %506 = vmatpush2.msra.mxu0 0.0
    %507 = vmatprep.subr.mxu0 0.0
    %508 = vmatpush2.msra.mxu0 0.0
    %509 = vmatprep.subr.mxu0 0.0
    %510 = vmatpush2.msra.mxu0 0.0
    %511 = vmatprep.subr.mxu0 0.0
    %512 = vmatpush2.msra.mxu0 0.0
    %513 = vmatprep.subr.mxu0 0.0
    %514 = vmatpush2.msra.mxu0 0.0
    %515 = vmatprep.subr.mxu0 0.0
    %516 = vmatpush2.msra.mxu0 0.0
    %517 = vmatprep.subr.mxu0 0.0
    %518 = vmatpush2.msra.mxu0 0.0
    %519 = vmatprep.subr.mxu0 0.0
    %520 = vmatpush2.msra.mxu0 0.0
    %521 = vmatprep.subr.mxu0 0.0
    %522 = vmatpush2.msra.mxu0 0.0
    %523 = vmatprep.mubr.f32.mxu0 0.0
    %524 = vmatmul.mubr.f32.gmra.mxu0 %v136
    %v525 = vpop.f32.mrf.mxu0
    %v526 = vadd.f32 0.0, %v525
    %v527 = vpop.f32.mrf.mxu0
    %528 = vmatprep.mubr.f32.mxu0 0.0
    %529 = vmatmul.mubr.f32.gmra.mxu0 %v139
    %v530 = vpop.f32.mrf.mxu0
    %v531 = vadd.f32 0.0, %v530
    %v532 = vpop.f32.mrf.mxu0
    %533 = vdwg.mxu0
    %s534 = scalar_lea.vmem %s9, 32
    %v535 = vld [vmem:[%s534] sm:$0xff]
    %v536 = vld [vmem:[%s534 + $0x8] sm:$0xff]
    %v537 = vld [vmem:[%s534 + $0x10] sm:$0xff]
    %v538 = vld [vmem:[%s534 + $0x18] sm:$0xff]
    %539 = vmatprep.subr.mxu0 0.0
    %540 = vmatpush1.msra.mxu0 0.0
    %541 = vmatprep.subr.mxu0 0.0
    %542 = vmatpush1.msra.mxu0 0.0
    %543 = vmatprep.subr.mxu0 0.0
    %544 = vmatpush1.msra.mxu0 0.0
    %545 = vmatprep.subr.mxu0 0.0
    %546 = vmatpush1.msra.mxu0 0.0
    %547 = vmatprep.subr.mxu0 0.0
    %548 = vmatpush1.msra.mxu0 0.0
    %549 = vmatprep.subr.mxu0 0.0
    %550 = vmatpush1.msra.mxu0 0.0
    %551 = vmatprep.subr.mxu0 0.0
    %552 = vmatpush1.msra.mxu0 0.0
    %553 = vmatprep.subr.mxu0 0.0
    %554 = vmatpush1.msra.mxu0 0.0
    %555 = vmatprep.subr.mxu0 0.0
    %556 = vmatpush1.msra.mxu0 0.0
    %557 = vmatprep.subr.mxu0 0.0
    %558 = vmatpush1.msra.mxu0 0.0
    %559 = vmatprep.subr.mxu0 0.0
    %560 = vmatpush1.msra.mxu0 0.0
    %561 = vmatprep.subr.mxu0 0.0
    %562 = vmatpush1.msra.mxu0 0.0
    %563 = vmatprep.subr.mxu0 0.0
    %564 = vmatpush1.msra.mxu0 %v538
    %565 = vmatprep.subr.mxu0 0.0
    %566 = vmatpush1.msra.mxu0 %v537
    %567 = vmatprep.subr.mxu0 0.0
    %568 = vmatpush1.msra.mxu0 %v536
    %569 = vmatprep.subr.mxu0 0.0
    %570 = vmatpush1.msra.mxu0 %v535
    %571 = vmatprep.subr.mxu0 0.0
    %572 = vmatpush2.msra.mxu0 0.0
    %573 = vmatprep.subr.mxu0 0.0
    %574 = vmatpush2.msra.mxu0 0.0
    %575 = vmatprep.subr.mxu0 0.0
    %576 = vmatpush2.msra.mxu0 0.0
    %577 = vmatprep.subr.mxu0 0.0
    %578 = vmatpush2.msra.mxu0 0.0
    %579 = vmatprep.subr.mxu0 0.0
    %580 = vmatpush2.msra.mxu0 0.0
    %581 = vmatprep.subr.mxu0 0.0
    %582 = vmatpush2.msra.mxu0 0.0
    %583 = vmatprep.subr.mxu0 0.0
    %584 = vmatpush2.msra.mxu0 0.0
    %585 = vmatprep.subr.mxu0 0.0
    %586 = vmatpush2.msra.mxu0 0.0
    %587 = vmatprep.subr.mxu0 0.0
    %588 = vmatpush2.msra.mxu0 0.0
    %589 = vmatprep.subr.mxu0 0.0
    %590 = vmatpush2.msra.mxu0 0.0
    %591 = vmatprep.subr.mxu0 0.0
    %592 = vmatpush2.msra.mxu0 0.0
    %593 = vmatprep.subr.mxu0 0.0
    %594 = vmatpush2.msra.mxu0 0.0
    %595 = vmatprep.subr.mxu0 0.0
    %596 = vmatpush2.msra.mxu0 0.0
    %597 = vmatprep.subr.mxu0 0.0
    %598 = vmatpush2.msra.mxu0 0.0
    %599 = vmatprep.subr.mxu0 0.0
    %600 = vmatpush2.msra.mxu0 0.0
    %601 = vmatprep.subr.mxu0 0.0
    %602 = vmatpush2.msra.mxu0 0.0
    %603 = vmatprep.mubr.f32.mxu0 0.0
    %604 = vmatmul.mubr.f32.gmra.mxu0 %v136
    %v605 = vpop.f32.mrf.mxu0
    %v606 = vadd.f32 0.0, %v605
    %v607 = vpop.f32.mrf.mxu0
    %608 = vmatprep.mubr.f32.mxu0 0.0
    %609 = vmatmul.mubr.f32.gmra.mxu0 %v139
    %v610 = vpop.f32.mrf.mxu0
    %v611 = vadd.f32 0.0, %v610
    %v612 = vpop.f32.mrf.mxu0
    %613 = vdwg.mxu0
    %vm614 = vcmp.gt.f32.partialorder %v124, 0.0
    %v615 = vsel %vm614, 1, 0
    %v616 = vlaneseq
    %v617 = vshrl.u32 %v616, 7
    %v618 = vsub.s32 0, %v617
    %v619 = vrot.slane %v615, %v618
    %vm620 = vcmp.eq.s32.totalorder %v619, 1
    %vm621 = vmor %vm129, %vm620
    %vm622 = vcmask 130048
    %v624 = vsel %vm622, %v208, 0
    %v627 = vsel %vm622, %v367, 0
    %629 = vmatprep.subr.mxu0 0.0
    %630 = vmatpush1.xpose.msra.mxu0 0.0
    %631 = vmatprep.subr.mxu0 0.0
    %632 = vmatpush1.xpose.msra.mxu0 0.0
    %633 = vmatprep.subr.mxu0 0.0
    %634 = vmatpush1.xpose.msra.mxu0 0.0
    %635 = vmatprep.subr.mxu0 0.0
    %636 = vmatpush1.xpose.msra.mxu0 0.0
    %637 = vmatprep.subr.mxu0 0.0
    %638 = vmatpush1.xpose.msra.mxu0 0.0
    %639 = vmatprep.subr.mxu0 0.0
    %640 = vmatpush1.xpose.msra.mxu0 0.0
    %641 = vmatprep.subr.mxu0 0.0
    %642 = vmatpush1.xpose.msra.mxu0 0.0
    %643 = vmatprep.subr.mxu0 0.0
    %644 = vmatpush1.xpose.msra.mxu0 0.0
    %645 = vmatprep.subr.mxu0 0.0
    %646 = vmatpush1.xpose.msra.mxu0 0.0
    %647 = vmatprep.subr.mxu0 0.0
    %648 = vmatpush1.xpose.msra.mxu0 0.0
    %649 = vmatprep.subr.mxu0 0.0
    %650 = vmatpush1.xpose.msra.mxu0 0.0
    %651 = vmatprep.subr.mxu0 0.0
    %652 = vmatpush1.xpose.msra.mxu0 0.0
    %653 = vmatprep.subr.mxu0 0.0
    %654 = vmatpush1.xpose.msra.mxu0 0.0
    %655 = vmatprep.subr.mxu0 0.0
    %656 = vmatpush1.xpose.msra.mxu0 0.0
    %657 = vmatprep.subr.mxu0 0.0
    %658 = vmatpush1.xpose.msra.mxu0 0.0
    %659 = vmatprep.subr.mxu0 0.0
    %660 = vmatpush1.xpose.msra.mxu0 %v627
    %661 = vmatprep.subr.mxu0 0.0
    %662 = vmatpush2.xpose.msra.mxu0 0.0
    %663 = vmatprep.subr.mxu0 0.0
    %664 = vmatpush2.xpose.msra.mxu0 0.0
    %665 = vmatprep.subr.mxu0 0.0
    %666 = vmatpush2.xpose.msra.mxu0 0.0
    %667 = vmatprep.subr.mxu0 0.0
    %668 = vmatpush2.xpose.msra.mxu0 0.0
    %669 = vmatprep.subr.mxu0 0.0
    %670 = vmatpush2.xpose.msra.mxu0 0.0
    %671 = vmatprep.subr.mxu0 0.0
    %672 = vmatpush2.xpose.msra.mxu0 0.0
    %673 = vmatprep.subr.mxu0 0.0
    %674 = vmatpush2.xpose.msra.mxu0 0.0
    %675 = vmatprep.subr.mxu0 0.0
    %676 = vmatpush2.xpose.msra.mxu0 0.0
    %677 = vmatprep.subr.mxu0 0.0
    %678 = vmatpush2.xpose.msra.mxu0 0.0
    %679 = vmatprep.subr.mxu0 0.0
    %680 = vmatpush2.xpose.msra.mxu0 0.0
    %681 = vmatprep.subr.mxu0 0.0
    %682 = vmatpush2.xpose.msra.mxu0 0.0
    %683 = vmatprep.subr.mxu0 0.0
    %684 = vmatpush2.xpose.msra.mxu0 0.0
    %685 = vmatprep.subr.mxu0 0.0
    %686 = vmatpush2.xpose.msra.mxu0 0.0
    %687 = vmatprep.subr.mxu0 0.0
    %688 = vmatpush2.xpose.msra.mxu0 0.0
    %689 = vmatprep.subr.mxu0 0.0
    %690 = vmatpush2.xpose.msra.mxu0 0.0
    %691 = vmatprep.subr.mxu0 0.0
    %692 = vmatpush2.xpose.msra.mxu0 0.0
    %693 = vmatprep.mubr.f32.mxu0 0.0
    %694 = vmatmul.mubr.f32.gmra.mxu0 %v624
    %v695 = vpop.f32.mrf.mxu0
    %v696 = vadd.f32 0.0, %v695
    %v697 = vpop.f32.mrf.mxu0
    %698 = vdwg.mxu0
    %v699 = vmul.f32 %v696, 0.25
    %v700 = vsel %vm621, -1e+09, %v699
    %vm701 = vcmask 64512
    %v702 = vsel %vm701, %v700, -inf
    %703 = vmax.xlane.f32.xlu0 %v702
    %v704 = vpop.xlane.xlu0 %703
    %v705 = vsub.f32 %v700, %v704
    %v706 = vmul.f32 %v705, 1.442695
    %v707 = vpow.pop %v706
    %v708 = vsel %vm701, %v707, 0.0
    %709 = vadd.xlane.f32.xlu0 %v708
    %v710 = vpop.xlane.xlu0 %709
    %v711 = vrcp.pop %v710
    %v712 = vmul.f32 %v707, %v711
    %713 = vst.msk [vmem:[%s59] sm:$0xff] %vm701, %v712
    %v715 = vsel %vm701, %v712, 0
    %717 = vmatprep.subr.mxu0 0.0
    %718 = vmatpush1.msra.mxu0 0.0
    %719 = vmatprep.subr.mxu0 0.0
    %720 = vmatpush1.msra.mxu0 0.0
    %721 = vmatprep.subr.mxu0 0.0
    %722 = vmatpush1.msra.mxu0 0.0
    %723 = vmatprep.subr.mxu0 0.0
    %724 = vmatpush1.msra.mxu0 0.0
    %725 = vmatprep.subr.mxu0 0.0
    %726 = vmatpush1.msra.mxu0 0.0
    %727 = vmatprep.subr.mxu0 0.0
    %728 = vmatpush1.msra.mxu0 0.0
    %729 = vmatprep.subr.mxu0 0.0
    %730 = vmatpush1.msra.mxu0 0.0
    %731 = vmatprep.subr.mxu0 0.0
    %732 = vmatpush1.msra.mxu0 0.0
    %733 = vmatprep.subr.mxu0 0.0
    %734 = vmatpush1.msra.mxu0 0.0
    %735 = vmatprep.subr.mxu0 0.0
    %736 = vmatpush1.msra.mxu0 0.0
    %737 = vmatprep.subr.mxu0 0.0
    %738 = vmatpush1.msra.mxu0 0.0
    %739 = vmatprep.subr.mxu0 0.0
    %740 = vmatpush1.msra.mxu0 0.0
    %741 = vmatprep.subr.mxu0 0.0
    %742 = vmatpush1.msra.mxu0 0.0
    %743 = vmatprep.subr.mxu0 0.0
    %744 = vmatpush1.msra.mxu0 0.0
    %745 = vmatprep.subr.mxu0 0.0
    %746 = vmatpush1.msra.mxu0 0.0
    %747 = vmatprep.subr.mxu0 0.0
    %748 = vmatpush1.msra.mxu0 %v526
    %749 = vmatprep.subr.mxu0 0.0
    %750 = vmatpush2.msra.mxu0 0.0
    %751 = vmatprep.subr.mxu0 0.0
    %752 = vmatpush2.msra.mxu0 0.0
    %753 = vmatprep.subr.mxu0 0.0
    %754 = vmatpush2.msra.mxu0 0.0
    %755 = vmatprep.subr.mxu0 0.0
    %756 = vmatpush2.msra.mxu0 0.0
    %757 = vmatprep.subr.mxu0 0.0
    %758 = vmatpush2.msra.mxu0 0.0
    %759 = vmatprep.subr.mxu0 0.0
    %760 = vmatpush2.msra.mxu0 0.0
    %761 = vmatprep.subr.mxu0 0.0
    %762 = vmatpush2.msra.mxu0 0.0
    %763 = vmatprep.subr.mxu0 0.0
    %764 = vmatpush2.msra.mxu0 0.0
    %765 = vmatprep.subr.mxu0 0.0
    %766 = vmatpush2.msra.mxu0 0.0
    %767 = vmatprep.subr.mxu0 0.0
    %768 = vmatpush2.msra.mxu0 0.0
    %769 = vmatprep.subr.mxu0 0.0
    %770 = vmatpush2.msra.mxu0 0.0
    %771 = vmatprep.subr.mxu0 0.0
    %772 = vmatpush2.msra.mxu0 0.0
    %773 = vmatprep.subr.mxu0 0.0
    %774 = vmatpush2.msra.mxu0 0.0
    %775 = vmatprep.subr.mxu0 0.0
    %776 = vmatpush2.msra.mxu0 0.0
    %777 = vmatprep.subr.mxu0 0.0
    %778 = vmatpush2.msra.mxu0 0.0
    %779 = vmatprep.subr.mxu0 0.0
    %780 = vmatpush2.msra.mxu0 0.0
    %781 = vmatprep.mubr.f32.mxu0 0.0
    %782 = vmatmul.mubr.f32.gmra.mxu0 %v715
    %v783 = vpop.f32.mrf.mxu0
    %v784 = vadd.f32 0.0, %v783
    %v785 = vpop.f32.mrf.mxu0
    %786 = vdwg.mxu0
    %v787 = vld [vmem:[%s11] sm:$0xff]
    %v788 = vld [vmem:[%s11 + $0x8] sm:$0xff]
    %v790 = vsel %vm622, %v288, 0
    %v793 = vsel %vm622, %v447, 0
    %795 = vmatprep.subr.mxu0 0.0
    %796 = vmatpush1.xpose.msra.mxu0 0.0
    %797 = vmatprep.subr.mxu0 0.0
    %798 = vmatpush1.xpose.msra.mxu0 0.0
    %799 = vmatprep.subr.mxu0 0.0
    %800 = vmatpush1.xpose.msra.mxu0 0.0
    %801 = vmatprep.subr.mxu0 0.0
    %802 = vmatpush1.xpose.msra.mxu0 0.0
    %803 = vmatprep.subr.mxu0 0.0
    %804 = vmatpush1.xpose.msra.mxu0 0.0
    %805 = vmatprep.subr.mxu0 0.0
    %806 = vmatpush1.xpose.msra.mxu0 0.0
    %807 = vmatprep.subr.mxu0 0.0
    %808 = vmatpush1.xpose.msra.mxu0 0.0
    %809 = vmatprep.subr.mxu0 0.0
    %810 = vmatpush1.xpose.msra.mxu0 0.0
    %811 = vmatprep.subr.mxu0 0.0
    %812 = vmatpush1.xpose.msra.mxu0 0.0
    %813 = vmatprep.subr.mxu0 0.0
    %814 = vmatpush1.xpose.msra.mxu0 0.0
    %815 = vmatprep.subr.mxu0 0.0
    %816 = vmatpush1.xpose.msra.mxu0 0.0
    %817 = vmatprep.subr.mxu0 0.0
    %818 = vmatpush1.xpose.msra.mxu0 0.0
    %819 = vmatprep.subr.mxu0 0.0
    %820 = vmatpush1.xpose.msra.mxu0 0.0
    %821 = vmatprep.subr.mxu0 0.0
    %822 = vmatpush1.xpose.msra.mxu0 0.0
    %823 = vmatprep.subr.mxu0 0.0
    %824 = vmatpush1.xpose.msra.mxu0 0.0
    %825 = vmatprep.subr.mxu0 0.0
    %826 = vmatpush1.xpose.msra.mxu0 %v793
    %827 = vmatprep.subr.mxu0 0.0
    %828 = vmatpush2.xpose.msra.mxu0 0.0
    %829 = vmatprep.subr.mxu0 0.0
    %830 = vmatpush2.xpose.msra.mxu0 0.0
    %831 = vmatprep.subr.mxu0 0.0
    %832 = vmatpush2.xpose.msra.mxu0 0.0
    %833 = vmatprep.subr.mxu0 0.0
    %834 = vmatpush2.xpose.msra.mxu0 0.0
    %835 = vmatprep.subr.mxu0 0.0
    %836 = vmatpush2.xpose.msra.mxu0 0.0
    %837 = vmatprep.subr.mxu0 0.0
    %838 = vmatpush2.xpose.msra.mxu0 0.0
    %839 = vmatprep.subr.mxu0 0.0
    %840 = vmatpush2.xpose.msra.mxu0 0.0
    %841 = vmatprep.subr.mxu0 0.0
    %842 = vmatpush2.xpose.msra.mxu0 0.0
    %843 = vmatprep.subr.mxu0 0.0
    %844 = vmatpush2.xpose.msra.mxu0 0.0
    %845 = vmatprep.subr.mxu0 0.0
    %846 = vmatpush2.xpose.msra.mxu0 0.0
    %847 = vmatprep.subr.mxu0 0.0
    %848 = vmatpush2.xpose.msra.mxu0 0.0
    %849 = vmatprep.subr.mxu0 0.0
    %850 = vmatpush2.xpose.msra.mxu0 0.0
    %851 = vmatprep.subr.mxu0 0.0
    %852 = vmatpush2.xpose.msra.mxu0 0.0
    %853 = vmatprep.subr.mxu0 0.0
    %854 = vmatpush2.xpose.msra.mxu0 0.0
    %855 = vmatprep.subr.mxu0 0.0
    %856 = vmatpush2.xpose.msra.mxu0 0.0
    %857 = vmatprep.subr.mxu0 0.0
    %858 = vmatpush2.xpose.msra.mxu0 0.0
    %859 = vmatprep.mubr.f32.mxu0 0.0
    %860 = vmatmul.mubr.f32.gmra.mxu0 %v790
    %v861 = vpop.f32.mrf.mxu0
    %v862 = vadd.f32 0.0, %v861
    %v863 = vpop.f32.mrf.mxu0
    %864 = vdwg.mxu0
    %v865 = vmul.f32 %v862, 0.25
    %v866 = vsel %vm621, -1e+09, %v865
    %v867 = vsel %vm701, %v866, -inf
    %868 = vmax.xlane.f32.xlu0 %v867
    %v869 = vpop.xlane.xlu0 %868
    %v870 = vsub.f32 %v866, %v869
    %v871 = vmul.f32 %v870, 1.442695
    %v872 = vpow.pop %v871
    %v873 = vsel %vm701, %v872, 0.0
    %874 = vadd.xlane.f32.xlu0 %v873
    %v875 = vpop.xlane.xlu0 %874
    %v876 = vrcp.pop %v875
    %v877 = vmul.f32 %v872, %v876
    %s878 = scalar_lea.vmem %s59, 8
    %879 = vst.msk [vmem:[%s878] sm:$0xff] %vm701, %v877
    %v881 = vsel %vm701, %v877, 0
    %883 = vmatprep.subr.mxu0 0.0
    %884 = vmatpush1.msra.mxu0 0.0
    %885 = vmatprep.subr.mxu0 0.0
    %886 = vmatpush1.msra.mxu0 0.0
    %887 = vmatprep.subr.mxu0 0.0
    %888 = vmatpush1.msra.mxu0 0.0
    %889 = vmatprep.subr.mxu0 0.0
    %890 = vmatpush1.msra.mxu0 0.0
    %891 = vmatprep.subr.mxu0 0.0
    %892 = vmatpush1.msra.mxu0 0.0
    %893 = vmatprep.subr.mxu0 0.0
    %894 = vmatpush1.msra.mxu0 0.0
    %895 = vmatprep.subr.mxu0 0.0
    %896 = vmatpush1.msra.mxu0 0.0
    %897 = vmatprep.subr.mxu0 0.0
    %898 = vmatpush1.msra.mxu0 0.0
    %899 = vmatprep.subr.mxu0 0.0
    %900 = vmatpush1.msra.mxu0 0.0
    %901 = vmatprep.subr.mxu0 0.0
    %902 = vmatpush1.msra.mxu0 0.0
    %903 = vmatprep.subr.mxu0 0.0
    %904 = vmatpush1.msra.mxu0 0.0
    %905 = vmatprep.subr.mxu0 0.0
    %906 = vmatpush1.msra.mxu0 0.0
    %907 = vmatprep.subr.mxu0 0.0
    %908 = vmatpush1.msra.mxu0 0.0
    %909 = vmatprep.subr.mxu0 0.0
    %910 = vmatpush1.msra.mxu0 0.0
    %911 = vmatprep.subr.mxu0 0.0
    %912 = vmatpush1.msra.mxu0 0.0
    %913 = vmatprep.subr.mxu0 0.0
    %914 = vmatpush1.msra.mxu0 %v606
    %915 = vmatprep.subr.mxu0 0.0
    %916 = vmatpush2.msra.mxu0 0.0
    %917 = vmatprep.subr.mxu0 0.0
    %918 = vmatpush2.msra.mxu0 0.0
    %919 = vmatprep.subr.mxu0 0.0
    %920 = vmatpush2.msra.mxu0 0.0
    %921 = vmatprep.subr.mxu0 0.0
    %922 = vmatpush2.msra.mxu0 0.0
    %923 = vmatprep.subr.mxu0 0.0
    %924 = vmatpush2.msra.mxu0 0.0
    %925 = vmatprep.subr.mxu0 0.0
    %926 = vmatpush2.msra.mxu0 0.0
    %927 = vmatprep.subr.mxu0 0.0
    %928 = vmatpush2.msra.mxu0 0.0
    %929 = vmatprep.subr.mxu0 0.0
    %930 = vmatpush2.msra.mxu0 0.0
    %931 = vmatprep.subr.mxu0 0.0
    %932 = vmatpush2.msra.mxu0 0.0
    %933 = vmatprep.subr.mxu0 0.0
    %934 = vmatpush2.msra.mxu0 0.0
    %935 = vmatprep.subr.mxu0 0.0
    %936 = vmatpush2.msra.mxu0 0.0
    %937 = vmatprep.subr.mxu0 0.0
    %938 = vmatpush2.msra.mxu0 0.0
    %939 = vmatprep.subr.mxu0 0.0
    %940 = vmatpush2.msra.mxu0 0.0
    %941 = vmatprep.subr.mxu0 0.0
    %942 = vmatpush2.msra.mxu0 0.0
    %943 = vmatprep.subr.mxu0 0.0
    %944 = vmatpush2.msra.mxu0 0.0
    %945 = vmatprep.subr.mxu0 0.0
    %946 = vmatpush2.msra.mxu0 0.0
    %947 = vmatprep.mubr.f32.mxu0 0.0
    %948 = vmatmul.mubr.f32.gmra.mxu0 %v881
    %v949 = vpop.f32.mrf.mxu0
    %v950 = vadd.f32 0.0, %v949
    %v951 = vpop.f32.mrf.mxu0
    %952 = vdwg.mxu0
    %s953 = scalar_lea.vmem %s11, 16
    %v954 = vld [vmem:[%s953] sm:$0xff]
    %v955 = vld [vmem:[%s953 + $0x8] sm:$0xff]
    %v957 = vsel %vm622, %v950, 0
    %959 = vmatprep.subr.mxu0 0.0
    %960 = vmatpush1.msra.mxu0 0.0
    %961 = vmatprep.subr.mxu0 0.0
    %962 = vmatpush1.msra.mxu0 0.0
    %963 = vmatprep.subr.mxu0 0.0
    %964 = vmatpush1.msra.mxu0 0.0
    %965 = vmatprep.subr.mxu0 0.0
    %966 = vmatpush1.msra.mxu0 0.0
    %967 = vmatprep.subr.mxu0 0.0
    %968 = vmatpush1.msra.mxu0 0.0
    %969 = vmatprep.subr.mxu0 0.0
    %970 = vmatpush1.msra.mxu0 0.0
    %971 = vmatprep.subr.mxu0 0.0
    %972 = vmatpush1.msra.mxu0 0.0
    %973 = vmatprep.subr.mxu0 0.0
    %974 = vmatpush1.msra.mxu0 0.0
    %975 = vmatprep.subr.mxu0 0.0
    %976 = vmatpush1.msra.mxu0 0.0
    %977 = vmatprep.subr.mxu0 0.0
    %978 = vmatpush1.msra.mxu0 0.0
    %979 = vmatprep.subr.mxu0 0.0
    %980 = vmatpush1.msra.mxu0 0.0
    %981 = vmatprep.subr.mxu0 0.0
    %982 = vmatpush1.msra.mxu0 0.0
    %983 = vmatprep.subr.mxu0 0.0
    %984 = vmatpush1.msra.mxu0 0.0
    %985 = vmatprep.subr.mxu0 0.0
    %986 = vmatpush1.msra.mxu0 0.0
    %987 = vmatprep.subr.mxu0 0.0
    %988 = vmatpush1.msra.mxu0 %v955
    %989 = vmatprep.subr.mxu0 0.0
    %990 = vmatpush1.msra.mxu0 %v954
    %991 = vmatprep.subr.mxu0 0.0
    %992 = vmatpush2.msra.mxu0 0.0
    %993 = vmatprep.subr.mxu0 0.0
    %994 = vmatpush2.msra.mxu0 0.0
    %995 = vmatprep.subr.mxu0 0.0
    %996 = vmatpush2.msra.mxu0 0.0
    %997 = vmatprep.subr.mxu0 0.0
    %998 = vmatpush2.msra.mxu0 0.0
    %999 = vmatprep.subr.mxu0 0.0
    %1000 = vmatpush2.msra.mxu0 0.0
    %1001 = vmatprep.subr.mxu0 0.0
    %1002 = vmatpush2.msra.mxu0 0.0
    %1003 = vmatprep.subr.mxu0 0.0
    %1004 = vmatpush2.msra.mxu0 0.0
    %1005 = vmatprep.subr.mxu0 0.0
    %1006 = vmatpush2.msra.mxu0 0.0
    %1007 = vmatprep.subr.mxu0 0.0
    %1008 = vmatpush2.msra.mxu0 0.0
    %1009 = vmatprep.subr.mxu0 0.0
    %1010 = vmatpush2.msra.mxu0 0.0
    %1011 = vmatprep.subr.mxu0 0.0
    %1012 = vmatpush2.msra.mxu0 0.0
    %1013 = vmatprep.subr.mxu0 0.0
    %1014 = vmatpush2.msra.mxu0 0.0
    %1015 = vmatprep.subr.mxu0 0.0
    %1016 = vmatpush2.msra.mxu0 0.0
    %1017 = vmatprep.subr.mxu0 0.0
    %1018 = vmatpush2.msra.mxu0 0.0
    %1019 = vmatprep.subr.mxu0 0.0
    %1020 = vmatpush2.msra.mxu0 0.0
    %1021 = vmatprep.subr.mxu0 0.0
    %1022 = vmatpush2.msra.mxu0 0.0
    %1023 = vmatprep.mubr.f32.mxu0 0.0
    %1024 = vmatmul.mubr.f32.gmra.mxu0 %v957
    %v1025 = vpop.f32.mrf.mxu0
    %v1026 = vadd.f32 0.0, %v1025
    %v1027 = vpop.f32.mrf.mxu0
    %1028 = vdwg.mxu0
    %v1030 = vsel %vm622, %v784, 0
    %1032 = vmatprep.subr.mxu0 0.0
    %1033 = vmatpush1.msra.mxu0 0.0
    %1034 = vmatprep.subr.mxu0 0.0
    %1035 = vmatpush1.msra.mxu0 0.0
    %1036 = vmatprep.subr.mxu0 0.0
    %1037 = vmatpush1.msra.mxu0 0.0
    %1038 = vmatprep.subr.mxu0 0.0
    %1039 = vmatpush1.msra.mxu0 0.0
    %1040 = vmatprep.subr.mxu0 0.0
    %1041 = vmatpush1.msra.mxu0 0.0
    %1042 = vmatprep.subr.mxu0 0.0
    %1043 = vmatpush1.msra.mxu0 0.0
    %1044 = vmatprep.subr.mxu0 0.0
    %1045 = vmatpush1.msra.mxu0 0.0
    %1046 = vmatprep.subr.mxu0 0.0
    %1047 = vmatpush1.msra.mxu0 0.0
    %1048 = vmatprep.subr.mxu0 0.0
    %1049 = vmatpush1.msra.mxu0 0.0
    %1050 = vmatprep.subr.mxu0 0.0
    %1051 = vmatpush1.msra.mxu0 0.0
    %1052 = vmatprep.subr.mxu0 0.0
    %1053 = vmatpush1.msra.mxu0 0.0
    %1054 = vmatprep.subr.mxu0 0.0
    %1055 = vmatpush1.msra.mxu0 0.0
    %1056 = vmatprep.subr.mxu0 0.0
    %1057 = vmatpush1.msra.mxu0 0.0
    %1058 = vmatprep.subr.mxu0 0.0
    %1059 = vmatpush1.msra.mxu0 0.0
    %1060 = vmatprep.subr.mxu0 0.0
    %1061 = vmatpush1.msra.mxu0 %v788
    %1062 = vmatprep.subr.mxu0 0.0
    %1063 = vmatpush1.msra.mxu0 %v787
    %1064 = vmatprep.subr.mxu0 0.0
    %1065 = vmatpush2.msra.mxu0 0.0
    %1066 = vmatprep.subr.mxu0 0.0
    %1067 = vmatpush2.msra.mxu0 0.0
    %1068 = vmatprep.subr.mxu0 0.0
    %1069 = vmatpush2.msra.mxu0 0.0
    %1070 = vmatprep.subr.mxu0 0.0
    %1071 = vmatpush2.msra.mxu0 0.0
    %1072 = vmatprep.subr.mxu0 0.0
    %1073 = vmatpush2.msra.mxu0 0.0
    %1074 = vmatprep.subr.mxu0 0.0
    %1075 = vmatpush2.msra.mxu0 0.0
    %1076 = vmatprep.subr.mxu0 0.0
    %1077 = vmatpush2.msra.mxu0 0.0
    %1078 = vmatprep.subr.mxu0 0.0
    %1079 = vmatpush2.msra.mxu0 0.0
    %1080 = vmatprep.subr.mxu0 0.0
    %1081 = vmatpush2.msra.mxu0 0.0
    %1082 = vmatprep.subr.mxu0 0.0
    %1083 = vmatpush2.msra.mxu0 0.0
    %1084 = vmatprep.subr.mxu0 0.0
    %1085 = vmatpush2.msra.mxu0 0.0
    %1086 = vmatprep.subr.mxu0 0.0
    %1087 = vmatpush2.msra.mxu0 0.0
    %1088 = vmatprep.subr.mxu0 0.0
    %1089 = vmatpush2.msra.mxu0 0.0
    %1090 = vmatprep.subr.mxu0 0.0
    %1091 = vmatpush2.msra.mxu0 0.0
    %1092 = vmatprep.subr.mxu0 0.0
    %1093 = vmatpush2.msra.mxu0 0.0
    %1094 = vmatprep.subr.mxu0 0.0
    %1095 = vmatpush2.msra.mxu0 0.0
    %1096 = vmatprep.mubr.f32.mxu0 0.0
    %1097 = vmatmul.mubr.f32.gmra.mxu0 %v1030
    %v1098 = vpop.f32.mrf.mxu0
    %v1099 = vadd.f32 %v1026, %v1098
    %v1100 = vpop.f32.mrf.mxu0
    %1101 = vdwg.mxu0
    %v1102 = vlaneseq
    %v1103 = vshrl.u32 %v1102, 7
    %v1104 = vsub.s32 1, %v1103
    %v1105 = vrot.slane %v615, %v1104
    %vm1106 = vcmp.eq.s32.totalorder %v1105, 1
    %vm1107 = vmor %vm129, %vm1106
    %v1109 = vsel %vm622, %v213, 0
    %v1112 = vsel %vm622, %v372, 0
    %1114 = vmatprep.subr.mxu0 0.0
    %1115 = vmatpush1.xpose.msra.mxu0 0.0
    %1116 = vmatprep.subr.mxu0 0.0
    %1117 = vmatpush1.xpose.msra.mxu0 0.0
    %1118 = vmatprep.subr.mxu0 0.0
    %1119 = vmatpush1.xpose.msra.mxu0 0.0
    %1120 = vmatprep.subr.mxu0 0.0
    %1121 = vmatpush1.xpose.msra.mxu0 0.0
    %1122 = vmatprep.subr.mxu0 0.0
    %1123 = vmatpush1.xpose.msra.mxu0 0.0
    %1124 = vmatprep.subr.mxu0 0.0
    %1125 = vmatpush1.xpose.msra.mxu0 0.0
    %1126 = vmatprep.subr.mxu0 0.0
    %1127 = vmatpush1.xpose.msra.mxu0 0.0
    %1128 = vmatprep.subr.mxu0 0.0
    %1129 = vmatpush1.xpose.msra.mxu0 0.0
    %1130 = vmatprep.subr.mxu0 0.0
    %1131 = vmatpush1.xpose.msra.mxu0 0.0
    %1132 = vmatprep.subr.mxu0 0.0
    %1133 = vmatpush1.xpose.msra.mxu0 0.0
    %1134 = vmatprep.subr.mxu0 0.0
    %1135 = vmatpush1.xpose.msra.mxu0 0.0
    %1136 = vmatprep.subr.mxu0 0.0
    %1137 = vmatpush1.xpose.msra.mxu0 0.0
    %1138 = vmatprep.subr.mxu0 0.0
    %1139 = vmatpush1.xpose.msra.mxu0 0.0
    %1140 = vmatprep.subr.mxu0 0.0
    %1141 = vmatpush1.xpose.msra.mxu0 0.0
    %1142 = vmatprep.subr.mxu0 0.0
    %1143 = vmatpush1.xpose.msra.mxu0 0.0
    %1144 = vmatprep.subr.mxu0 0.0
    %1145 = vmatpush1.xpose.msra.mxu0 %v1112
    %1146 = vmatprep.subr.mxu0 0.0
    %1147 = vmatpush2.xpose.msra.mxu0 0.0
    %1148 = vmatprep.subr.mxu0 0.0
    %1149 = vmatpush2.xpose.msra.mxu0 0.0
    %1150 = vmatprep.subr.mxu0 0.0
    %1151 = vmatpush2.xpose.msra.mxu0 0.0
    %1152 = vmatprep.subr.mxu0 0.0
    %1153 = vmatpush2.xpose.msra.mxu0 0.0
    %1154 = vmatprep.subr.mxu0 0.0
    %1155 = vmatpush2.xpose.msra.mxu0 0.0
    %1156 = vmatprep.subr.mxu0 0.0
    %1157 = vmatpush2.xpose.msra.mxu0 0.0
    %1158 = vmatprep.subr.mxu0 0.0
    %1159 = vmatpush2.xpose.msra.mxu0 0.0
    %1160 = vmatprep.subr.mxu0 0.0
    %1161 = vmatpush2.xpose.msra.mxu0 0.0
    %1162 = vmatprep.subr.mxu0 0.0
    %1163 = vmatpush2.xpose.msra.mxu0 0.0
    %1164 = vmatprep.subr.mxu0 0.0
    %1165 = vmatpush2.xpose.msra.mxu0 0.0
    %1166 = vmatprep.subr.mxu0 0.0
    %1167 = vmatpush2.xpose.msra.mxu0 0.0
    %1168 = vmatprep.subr.mxu0 0.0
    %1169 = vmatpush2.xpose.msra.mxu0 0.0
    %1170 = vmatprep.subr.mxu0 0.0
    %1171 = vmatpush2.xpose.msra.mxu0 0.0
    %1172 = vmatprep.subr.mxu0 0.0
    %1173 = vmatpush2.xpose.msra.mxu0 0.0
    %1174 = vmatprep.subr.mxu0 0.0
    %1175 = vmatpush2.xpose.msra.mxu0 0.0
    %1176 = vmatprep.subr.mxu0 0.0
    %1177 = vmatpush2.xpose.msra.mxu0 0.0
    %1178 = vmatprep.mubr.f32.mxu0 0.0
    %1179 = vmatmul.mubr.f32.gmra.mxu0 %v1109
    %v1180 = vpop.f32.mrf.mxu0
    %v1181 = vadd.f32 0.0, %v1180
    %v1182 = vpop.f32.mrf.mxu0
    %1183 = vdwg.mxu0
    %v1184 = vmul.f32 %v1181, 0.25
    %v1185 = vsel %vm1107, -1e+09, %v1184
    %v1186 = vsel %vm701, %v1185, -inf
    %1187 = vmax.xlane.f32.xlu0 %v1186
    %v1188 = vpop.xlane.xlu0 %1187
    %v1189 = vsub.f32 %v1185, %v1188
    %v1190 = vmul.f32 %v1189, 1.442695
    %v1191 = vpow.pop %v1190
    %v1192 = vsel %vm701, %v1191, 0.0
    %1193 = vadd.xlane.f32.xlu0 %v1192
    %v1194 = vpop.xlane.xlu0 %1193
    %v1195 = vrcp.pop %v1194
    %v1196 = vmul.f32 %v1191, %v1195
    %s1197 = scalar_lea.vmem %s59, 16
    %1198 = vst.msk [vmem:[%s1197] sm:$0xff] %vm701, %v1196
    %v1200 = vsel %vm701, %v1196, 0
    %1202 = vmatprep.subr.mxu0 0.0
    %1203 = vmatpush1.msra.mxu0 0.0
    %1204 = vmatprep.subr.mxu0 0.0
    %1205 = vmatpush1.msra.mxu0 0.0
    %1206 = vmatprep.subr.mxu0 0.0
    %1207 = vmatpush1.msra.mxu0 0.0
    %1208 = vmatprep.subr.mxu0 0.0
    %1209 = vmatpush1.msra.mxu0 0.0
    %1210 = vmatprep.subr.mxu0 0.0
    %1211 = vmatpush1.msra.mxu0 0.0
    %1212 = vmatprep.subr.mxu0 0.0
    %1213 = vmatpush1.msra.mxu0 0.0
    %1214 = vmatprep.subr.mxu0 0.0
    %1215 = vmatpush1.msra.mxu0 0.0
    %1216 = vmatprep.subr.mxu0 0.0
    %1217 = vmatpush1.msra.mxu0 0.0
    %1218 = vmatprep.subr.mxu0 0.0
    %1219 = vmatpush1.msra.mxu0 0.0
    %1220 = vmatprep.subr.mxu0 0.0
    %1221 = vmatpush1.msra.mxu0 0.0
    %1222 = vmatprep.subr.mxu0 0.0
    %1223 = vmatpush1.msra.mxu0 0.0
    %1224 = vmatprep.subr.mxu0 0.0
    %1225 = vmatpush1.msra.mxu0 0.0
    %1226 = vmatprep.subr.mxu0 0.0
    %1227 = vmatpush1.msra.mxu0 0.0
    %1228 = vmatprep.subr.mxu0 0.0
    %1229 = vmatpush1.msra.mxu0 0.0
    %1230 = vmatprep.subr.mxu0 0.0
    %1231 = vmatpush1.msra.mxu0 0.0
    %1232 = vmatprep.subr.mxu0 0.0
    %1233 = vmatpush1.msra.mxu0 %v531
    %1234 = vmatprep.subr.mxu0 0.0
    %1235 = vmatpush2.msra.mxu0 0.0
    %1236 = vmatprep.subr.mxu0 0.0
    %1237 = vmatpush2.msra.mxu0 0.0
    %1238 = vmatprep.subr.mxu0 0.0
    %1239 = vmatpush2.msra.mxu0 0.0
    %1240 = vmatprep.subr.mxu0 0.0
    %1241 = vmatpush2.msra.mxu0 0.0
    %1242 = vmatprep.subr.mxu0 0.0
    %1243 = vmatpush2.msra.mxu0 0.0
    %1244 = vmatprep.subr.mxu0 0.0
    %1245 = vmatpush2.msra.mxu0 0.0
    %1246 = vmatprep.subr.mxu0 0.0
    %1247 = vmatpush2.msra.mxu0 0.0
    %1248 = vmatprep.subr.mxu0 0.0
    %1249 = vmatpush2.msra.mxu0 0.0
    %1250 = vmatprep.subr.mxu0 0.0
    %1251 = vmatpush2.msra.mxu0 0.0
    %1252 = vmatprep.subr.mxu0 0.0
    %1253 = vmatpush2.msra.mxu0 0.0
    %1254 = vmatprep.subr.mxu0 0.0
    %1255 = vmatpush2.msra.mxu0 0.0
    %1256 = vmatprep.subr.mxu0 0.0
    %1257 = vmatpush2.msra.mxu0 0.0
    %1258 = vmatprep.subr.mxu0 0.0
    %1259 = vmatpush2.msra.mxu0 0.0
    %1260 = vmatprep.subr.mxu0 0.0
    %1261 = vmatpush2.msra.mxu0 0.0
    %1262 = vmatprep.subr.mxu0 0.0
    %1263 = vmatpush2.msra.mxu0 0.0
    %1264 = vmatprep.subr.mxu0 0.0
    %1265 = vmatpush2.msra.mxu0 0.0
    %1266 = vmatprep.mubr.f32.mxu0 0.0
    %1267 = vmatmul.mubr.f32.gmra.mxu0 %v1200
    %v1268 = vpop.f32.mrf.mxu0
    %v1269 = vadd.f32 0.0, %v1268
    %v1270 = vpop.f32.mrf.mxu0
    %1271 = vdwg.mxu0
    %v1272 = vld [vmem:[%s11] sm:$0xff]
    %v1273 = vld [vmem:[%s11 + $0x8] sm:$0xff]
    %v1275 = vsel %vm622, %v293, 0
    %v1278 = vsel %vm622, %v452, 0
    %1280 = vmatprep.subr.mxu0 0.0
    %1281 = vmatpush1.xpose.msra.mxu0 0.0
    %1282 = vmatprep.subr.mxu0 0.0
    %1283 = vmatpush1.xpose.msra.mxu0 0.0
    %1284 = vmatprep.subr.mxu0 0.0
    %1285 = vmatpush1.xpose.msra.mxu0 0.0
    %1286 = vmatprep.subr.mxu0 0.0
    %1287 = vmatpush1.xpose.msra.mxu0 0.0
    %1288 = vmatprep.subr.mxu0 0.0
    %1289 = vmatpush1.xpose.msra.mxu0 0.0
    %1290 = vmatprep.subr.mxu0 0.0
    %1291 = vmatpush1.xpose.msra.mxu0 0.0
    %1292 = vmatprep.subr.mxu0 0.0
    %1293 = vmatpush1.xpose.msra.mxu0 0.0
    %1294 = vmatprep.subr.mxu0 0.0
    %1295 = vmatpush1.xpose.msra.mxu0 0.0
    %1296 = vmatprep.subr.mxu0 0.0
    %1297 = vmatpush1.xpose.msra.mxu0 0.0
    %1298 = vmatprep.subr.mxu0 0.0
    %1299 = vmatpush1.xpose.msra.mxu0 0.0
    %1300 = vmatprep.subr.mxu0 0.0
    %1301 = vmatpush1.xpose.msra.mxu0 0.0
    %1302 = vmatprep.subr.mxu0 0.0
    %1303 = vmatpush1.xpose.msra.mxu0 0.0
    %1304 = vmatprep.subr.mxu0 0.0
    %1305 = vmatpush1.xpose.msra.mxu0 0.0
    %1306 = vmatprep.subr.mxu0 0.0
    %1307 = vmatpush1.xpose.msra.mxu0 0.0
    %1308 = vmatprep.subr.mxu0 0.0
    %1309 = vmatpush1.xpose.msra.mxu0 0.0
    %1310 = vmatprep.subr.mxu0 0.0
    %1311 = vmatpush1.xpose.msra.mxu0 %v1278
    %1312 = vmatprep.subr.mxu0 0.0
    %1313 = vmatpush2.xpose.msra.mxu0 0.0
    %1314 = vmatprep.subr.mxu0 0.0
    %1315 = vmatpush2.xpose.msra.mxu0 0.0
    %1316 = vmatprep.subr.mxu0 0.0
    %1317 = vmatpush2.xpose.msra.mxu0 0.0
    %1318 = vmatprep.subr.mxu0 0.0
    %1319 = vmatpush2.xpose.msra.mxu0 0.0
    %1320 = vmatprep.subr.mxu0 0.0
    %1321 = vmatpush2.xpose.msra.mxu0 0.0
    %1322 = vmatprep.subr.mxu0 0.0
    %1323 = vmatpush2.xpose.msra.mxu0 0.0
    %1324 = vmatprep.subr.mxu0 0.0
    %1325 = vmatpush2.xpose.msra.mxu0 0.0
    %1326 = vmatprep.subr.mxu0 0.0
    %1327 = vmatpush2.xpose.msra.mxu0 0.0
    %1328 = vmatprep.subr.mxu0 0.0
    %1329 = vmatpush2.xpose.msra.mxu0 0.0
    %1330 = vmatprep.subr.mxu0 0.0
    %1331 = vmatpush2.xpose.msra.mxu0 0.0
    %1332 = vmatprep.subr.mxu0 0.0
    %1333 = vmatpush2.xpose.msra.mxu0 0.0
    %1334 = vmatprep.subr.mxu0 0.0
    %1335 = vmatpush2.xpose.msra.mxu0 0.0
    %1336 = vmatprep.subr.mxu0 0.0
    %1337 = vmatpush2.xpose.msra.mxu0 0.0
    %1338 = vmatprep.subr.mxu0 0.0
    %1339 = vmatpush2.xpose.msra.mxu0 0.0
    %1340 = vmatprep.subr.mxu0 0.0
    %1341 = vmatpush2.xpose.msra.mxu0 0.0
    %1342 = vmatprep.subr.mxu0 0.0
    %1343 = vmatpush2.xpose.msra.mxu0 0.0
    %1344 = vmatprep.mubr.f32.mxu0 0.0
    %1345 = vmatmul.mubr.f32.gmra.mxu0 %v1275
    %v1346 = vpop.f32.mrf.mxu0
    %v1347 = vadd.f32 0.0, %v1346
    %v1348 = vpop.f32.mrf.mxu0
    %1349 = vdwg.mxu0
    %v1350 = vmul.f32 %v1347, 0.25
    %v1351 = vsel %vm1107, -1e+09, %v1350
    %v1352 = vsel %vm701, %v1351, -inf
    %1353 = vmax.xlane.f32.xlu0 %v1352
    %v1354 = vpop.xlane.xlu0 %1353
    %v1355 = vsub.f32 %v1351, %v1354
    %v1356 = vmul.f32 %v1355, 1.442695
    %v1357 = vpow.pop %v1356
    %v1358 = vsel %vm701, %v1357, 0.0
    %1359 = vadd.xlane.f32.xlu0 %v1358
    %v1360 = vpop.xlane.xlu0 %1359
    %v1361 = vrcp.pop %v1360
    %v1362 = vmul.f32 %v1357, %v1361
    %s1363 = scalar_lea.vmem %s59, 24
    %1364 = vst.msk [vmem:[%s1363] sm:$0xff] %vm701, %v1362
    %v1366 = vsel %vm701, %v1362, 0
    %1368 = vmatprep.subr.mxu0 0.0
    %1369 = vmatpush1.msra.mxu0 0.0
    %1370 = vmatprep.subr.mxu0 0.0
    %1371 = vmatpush1.msra.mxu0 0.0
    %1372 = vmatprep.subr.mxu0 0.0
    %1373 = vmatpush1.msra.mxu0 0.0
    %1374 = vmatprep.subr.mxu0 0.0
    %1375 = vmatpush1.msra.mxu0 0.0
    %1376 = vmatprep.subr.mxu0 0.0
    %1377 = vmatpush1.msra.mxu0 0.0
    %1378 = vmatprep.subr.mxu0 0.0
    %1379 = vmatpush1.msra.mxu0 0.0
    %1380 = vmatprep.subr.mxu0 0.0
    %1381 = vmatpush1.msra.mxu0 0.0
    %1382 = vmatprep.subr.mxu0 0.0
    %1383 = vmatpush1.msra.mxu0 0.0
    %1384 = vmatprep.subr.mxu0 0.0
    %1385 = vmatpush1.msra.mxu0 0.0
    %1386 = vmatprep.subr.mxu0 0.0
    %1387 = vmatpush1.msra.mxu0 0.0
    %1388 = vmatprep.subr.mxu0 0.0
    %1389 = vmatpush1.msra.mxu0 0.0
    %1390 = vmatprep.subr.mxu0 0.0
    %1391 = vmatpush1.msra.mxu0 0.0
    %1392 = vmatprep.subr.mxu0 0.0
    %1393 = vmatpush1.msra.mxu0 0.0
    %1394 = vmatprep.subr.mxu0 0.0
    %1395 = vmatpush1.msra.mxu0 0.0
    %1396 = vmatprep.subr.mxu0 0.0
    %1397 = vmatpush1.msra.mxu0 0.0
    %1398 = vmatprep.subr.mxu0 0.0
    %1399 = vmatpush1.msra.mxu0 %v611
    %1400 = vmatprep.subr.mxu0 0.0
    %1401 = vmatpush2.msra.mxu0 0.0
    %1402 = vmatprep.subr.mxu0 0.0
    %1403 = vmatpush2.msra.mxu0 0.0
    %1404 = vmatprep.subr.mxu0 0.0
    %1405 = vmatpush2.msra.mxu0 0.0
    %1406 = vmatprep.subr.mxu0 0.0
    %1407 = vmatpush2.msra.mxu0 0.0
    %1408 = vmatprep.subr.mxu0 0.0
    %1409 = vmatpush2.msra.mxu0 0.0
    %1410 = vmatprep.subr.mxu0 0.0
    %1411 = vmatpush2.msra.mxu0 0.0
    %1412 = vmatprep.subr.mxu0 0.0
    %1413 = vmatpush2.msra.mxu0 0.0
    %1414 = vmatprep.subr.mxu0 0.0
    %1415 = vmatpush2.msra.mxu0 0.0
    %1416 = vmatprep.subr.mxu0 0.0
    %1417 = vmatpush2.msra.mxu0 0.0
    %1418 = vmatprep.subr.mxu0 0.0
    %1419 = vmatpush2.msra.mxu0 0.0
    %1420 = vmatprep.subr.mxu0 0.0
    %1421 = vmatpush2.msra.mxu0 0.0
    %1422 = vmatprep.subr.mxu0 0.0
    %1423 = vmatpush2.msra.mxu0 0.0
    %1424 = vmatprep.subr.mxu0 0.0
    %1425 = vmatpush2.msra.mxu0 0.0
    %1426 = vmatprep.subr.mxu0 0.0
    %1427 = vmatpush2.msra.mxu0 0.0
    %1428 = vmatprep.subr.mxu0 0.0
    %1429 = vmatpush2.msra.mxu0 0.0
    %1430 = vmatprep.subr.mxu0 0.0
    %1431 = vmatpush2.msra.mxu0 0.0
    %1432 = vmatprep.mubr.f32.mxu0 0.0
    %1433 = vmatmul.mubr.f32.gmra.mxu0 %v1366
    %v1434 = vpop.f32.mrf.mxu0
    %v1435 = vadd.f32 0.0, %v1434
    %v1436 = vpop.f32.mrf.mxu0
    %1437 = vdwg.mxu0
    %v1438 = vld [vmem:[%s953] sm:$0xff]
    %v1439 = vld [vmem:[%s953 + $0x8] sm:$0xff]
    %v1441 = vsel %vm622, %v1435, 0
    %1443 = vmatprep.subr.mxu0 0.0
    %1444 = vmatpush1.msra.mxu0 0.0
    %1445 = vmatprep.subr.mxu0 0.0
    %1446 = vmatpush1.msra.mxu0 0.0
    %1447 = vmatprep.subr.mxu0 0.0
    %1448 = vmatpush1.msra.mxu0 0.0
    %1449 = vmatprep.subr.mxu0 0.0
    %1450 = vmatpush1.msra.mxu0 0.0
    %1451 = vmatprep.subr.mxu0 0.0
    %1452 = vmatpush1.msra.mxu0 0.0
    %1453 = vmatprep.subr.mxu0 0.0
    %1454 = vmatpush1.msra.mxu0 0.0
    %1455 = vmatprep.subr.mxu0 0.0
    %1456 = vmatpush1.msra.mxu0 0.0
    %1457 = vmatprep.subr.mxu0 0.0
    %1458 = vmatpush1.msra.mxu0 0.0
    %1459 = vmatprep.subr.mxu0 0.0
    %1460 = vmatpush1.msra.mxu0 0.0
    %1461 = vmatprep.subr.mxu0 0.0
    %1462 = vmatpush1.msra.mxu0 0.0
    %1463 = vmatprep.subr.mxu0 0.0
    %1464 = vmatpush1.msra.mxu0 0.0
    %1465 = vmatprep.subr.mxu0 0.0
    %1466 = vmatpush1.msra.mxu0 0.0
    %1467 = vmatprep.subr.mxu0 0.0
    %1468 = vmatpush1.msra.mxu0 0.0
    %1469 = vmatprep.subr.mxu0 0.0
    %1470 = vmatpush1.msra.mxu0 0.0
    %1471 = vmatprep.subr.mxu0 0.0
    %1472 = vmatpush1.msra.mxu0 %v1439
    %1473 = vmatprep.subr.mxu0 0.0
    %1474 = vmatpush1.msra.mxu0 %v1438
    %1475 = vmatprep.subr.mxu0 0.0
    %1476 = vmatpush2.msra.mxu0 0.0
    %1477 = vmatprep.subr.mxu0 0.0
    %1478 = vmatpush2.msra.mxu0 0.0
    %1479 = vmatprep.subr.mxu0 0.0
    %1480 = vmatpush2.msra.mxu0 0.0
    %1481 = vmatprep.subr.mxu0 0.0
    %1482 = vmatpush2.msra.mxu0 0.0
    %1483 = vmatprep.subr.mxu0 0.0
    %1484 = vmatpush2.msra.mxu0 0.0
    %1485 = vmatprep.subr.mxu0 0.0
    %1486 = vmatpush2.msra.mxu0 0.0
    %1487 = vmatprep.subr.mxu0 0.0
    %1488 = vmatpush2.msra.mxu0 0.0
    %1489 = vmatprep.subr.mxu0 0.0
    %1490 = vmatpush2.msra.mxu0 0.0
    %1491 = vmatprep.subr.mxu0 0.0
    %1492 = vmatpush2.msra.mxu0 0.0
    %1493 = vmatprep.subr.mxu0 0.0
    %1494 = vmatpush2.msra.mxu0 0.0
    %1495 = vmatprep.subr.mxu0 0.0
    %1496 = vmatpush2.msra.mxu0 0.0
    %1497 = vmatprep.subr.mxu0 0.0
    %1498 = vmatpush2.msra.mxu0 0.0
    %1499 = vmatprep.subr.mxu0 0.0
    %1500 = vmatpush2.msra.mxu0 0.0
    %1501 = vmatprep.subr.mxu0 0.0
    %1502 = vmatpush2.msra.mxu0 0.0
    %1503 = vmatprep.subr.mxu0 0.0
    %1504 = vmatpush2.msra.mxu0 0.0
    %1505 = vmatprep.subr.mxu0 0.0
    %1506 = vmatpush2.msra.mxu0 0.0
    %1507 = vmatprep.mubr.f32.mxu0 0.0
    %1508 = vmatmul.mubr.f32.gmra.mxu0 %v1441
    %v1509 = vpop.f32.mrf.mxu0
    %v1510 = vadd.f32 0.0, %v1509
    %v1511 = vpop.f32.mrf.mxu0
    %1512 = vdwg.mxu0
    %v1514 = vsel %vm622, %v1269, 0
    %1516 = vmatprep.subr.mxu0 0.0
    %1517 = vmatpush1.msra.mxu0 0.0
    %1518 = vmatprep.subr.mxu0 0.0
    %1519 = vmatpush1.msra.mxu0 0.0
    %1520 = vmatprep.subr.mxu0 0.0
    %1521 = vmatpush1.msra.mxu0 0.0
    %1522 = vmatprep.subr.mxu0 0.0
    %1523 = vmatpush1.msra.mxu0 0.0
    %1524 = vmatprep.subr.mxu0 0.0
    %1525 = vmatpush1.msra.mxu0 0.0
    %1526 = vmatprep.subr.mxu0 0.0
    %1527 = vmatpush1.msra.mxu0 0.0
    %1528 = vmatprep.subr.mxu0 0.0
    %1529 = vmatpush1.msra.mxu0 0.0
    %1530 = vmatprep.subr.mxu0 0.0
    %1531 = vmatpush1.msra.mxu0 0.0
    %1532 = vmatprep.subr.mxu0 0.0
    %1533 = vmatpush1.msra.mxu0 0.0
    %1534 = vmatprep.subr.mxu0 0.0
    %1535 = vmatpush1.msra.mxu0 0.0
    %1536 = vmatprep.subr.mxu0 0.0
    %1537 = vmatpush1.msra.mxu0 0.0
    %1538 = vmatprep.subr.mxu0 0.0
    %1539 = vmatpush1.msra.mxu0 0.0
    %1540 = vmatprep.subr.mxu0 0.0
    %1541 = vmatpush1.msra.mxu0 0.0
    %1542 = vmatprep.subr.mxu0 0.0
    %1543 = vmatpush1.msra.mxu0 0.0
    %1544 = vmatprep.subr.mxu0 0.0
    %1545 = vmatpush1.msra.mxu0 %v1273
    %1546 = vmatprep.subr.mxu0 0.0
    %1547 = vmatpush1.msra.mxu0 %v1272
    %1548 = vmatprep.subr.mxu0 0.0
    %1549 = vmatpush2.msra.mxu0 0.0
    %1550 = vmatprep.subr.mxu0 0.0
    %1551 = vmatpush2.msra.mxu0 0.0
    %1552 = vmatprep.subr.mxu0 0.0
    %1553 = vmatpush2.msra.mxu0 0.0
    %1554 = vmatprep.subr.mxu0 0.0
    %1555 = vmatpush2.msra.mxu0 0.0
    %1556 = vmatprep.subr.mxu0 0.0
    %1557 = vmatpush2.msra.mxu0 0.0
    %1558 = vmatprep.subr.mxu0 0.0
    %1559 = vmatpush2.msra.mxu0 0.0
    %1560 = vmatprep.subr.mxu0 0.0
    %1561 = vmatpush2.msra.mxu0 0.0
    %1562 = vmatprep.subr.mxu0 0.0
    %1563 = vmatpush2.msra.mxu0 0.0
    %1564 = vmatprep.subr.mxu0 0.0
    %1565 = vmatpush2.msra.mxu0 0.0
    %1566 = vmatprep.subr.mxu0 0.0
    %1567 = vmatpush2.msra.mxu0 0.0
    %1568 = vmatprep.subr.mxu0 0.0
    %1569 = vmatpush2.msra.mxu0 0.0
    %1570 = vmatprep.subr.mxu0 0.0
    %1571 = vmatpush2.msra.mxu0 0.0
    %1572 = vmatprep.subr.mxu0 0.0
    %1573 = vmatpush2.msra.mxu0 0.0
    %1574 = vmatprep.subr.mxu0 0.0
    %1575 = vmatpush2.msra.mxu0 0.0
    %1576 = vmatprep.subr.mxu0 0.0
    %1577 = vmatpush2.msra.mxu0 0.0
    %1578 = vmatprep.subr.mxu0 0.0
    %1579 = vmatpush2.msra.mxu0 0.0
    %1580 = vmatprep.mubr.f32.mxu0 0.0
    %1581 = vmatmul.mubr.f32.gmra.mxu0 %v1514
    %v1582 = vpop.f32.mrf.mxu0
    %v1583 = vadd.f32 %v1510, %v1582
    %v1584 = vpop.f32.mrf.mxu0
    %1585 = vdwg.mxu0
    %v1586 = vadd.f32 %v1099, %v122
    %v1587 = vadd.f32 %v1583, %v123
    %v1588 = vld [vmem:[%s13] sm:$0x1]
    %v1589 = vld [vmem:[%s15] sm:$0x1]
    %v1590 = vsel %vm134, %v1586, 0.0
    %1591 = vadd.xlane.f32.xlu0 %v1590
    %v1592 = vpop.xlane.xlu0 %1591
    %v1593 = vsel %vm134, %v1587, 0.0
    %1594 = vadd.xlane.f32.xlu0 %v1593
    %v1595 = vpop.xlane.xlu0 %1594
    %v1596 = vrcp.pop 32.0
    %v1597 = vmul.f32 %v1592, %v1596
    %v1598 = vmul.f32 %v1595, %v1596
    %v1599 = vsub.f32 %v1586, %v1597
    %v1600 = vsub.f32 %v1587, %v1598
    %v1601 = vmul.f32 %v1599, %v1599
    %v1602 = vmul.f32 %v1600, %v1600
    %v1603 = vsel %vm134, %v1601, 0.0
    %1604 = vadd.xlane.f32.xlu0 %v1603
    %v1605 = vpop.xlane.xlu0 %1604
    %v1606 = vsel %vm134, %v1602, 0.0
    %1607 = vadd.xlane.f32.xlu0 %v1606
    %v1608 = vpop.xlane.xlu0 %1607
    %v1609 = vmul.f32 %v1605, %v1596
    %v1610 = vmul.f32 %v1608, %v1596
    %v1611 = vadd.f32 %v1609, 1e-05
    %v1612 = vadd.f32 %v1610, 1e-05
    %v1613 = vrsqrt.pop %v1611
    %v1614 = vrsqrt.pop %v1612
    %v1615 = vmul.f32 %v1599, %v1613
    %v1616 = vmul.f32 %v1600, %v1614
    %v1618 = vlaneseq
    %v1619 = vshrl.u32 %v1618, 7
    %v1620 = vsub.s32 0, %v1619
    %v1621 = vrot.slane %v1588, %v1620
    %v1623 = vmul.f32 %v1615, %v1621
    %v1624 = vmul.f32 %v1616, %v1621
    %v1626 = vlaneseq
    %v1627 = vshrl.u32 %v1626, 7
    %v1628 = vsub.s32 0, %v1627
    %v1629 = vrot.slane %v1589, %v1628
    %v1631 = vadd.f32 %v1623, %v1629
    %v1632 = vadd.f32 %v1624, %v1629
    %v1633 = vld [vmem:[%s17] sm:$0xff]
    %v1634 = vld [vmem:[%s17 + $0x8] sm:$0xff]
    %v1635 = vld [vmem:[%s17 + $0x10] sm:$0xff]
    %v1636 = vld [vmem:[%s17 + $0x18] sm:$0xff]
    %v1637 = vld [vmem:[%s19] sm:$0x1]
    %v1639 = vlaneseq
    %v1640 = vshrl.u32 %v1639, 7
    %v1641 = vsub.s32 0, %v1640
    %v1642 = vrot.slane %v1637, %v1641
    %v1645 = vsel %vm134, %v1631, 0
    %v1648 = vsel %vm134, %v1632, 0
    %1650 = vmatprep.subr.mxu0 0.0
    %1651 = vmatpush1.msra.mxu0 0.0
    %1652 = vmatprep.subr.mxu0 0.0
    %1653 = vmatpush1.msra.mxu0 0.0
    %1654 = vmatprep.subr.mxu0 0.0
    %1655 = vmatpush1.msra.mxu0 0.0
    %1656 = vmatprep.subr.mxu0 0.0
    %1657 = vmatpush1.msra.mxu0 0.0
    %1658 = vmatprep.subr.mxu0 0.0
    %1659 = vmatpush1.msra.mxu0 0.0
    %1660 = vmatprep.subr.mxu0 0.0
    %1661 = vmatpush1.msra.mxu0 0.0
    %1662 = vmatprep.subr.mxu0 0.0
    %1663 = vmatpush1.msra.mxu0 0.0
    %1664 = vmatprep.subr.mxu0 0.0
    %1665 = vmatpush1.msra.mxu0 0.0
    %1666 = vmatprep.subr.mxu0 0.0
    %1667 = vmatpush1.msra.mxu0 0.0
    %1668 = vmatprep.subr.mxu0 0.0
    %1669 = vmatpush1.msra.mxu0 0.0
    %1670 = vmatprep.subr.mxu0 0.0
    %1671 = vmatpush1.msra.mxu0 0.0
    %1672 = vmatprep.subr.mxu0 0.0
    %1673 = vmatpush1.msra.mxu0 0.0
    %1674 = vmatprep.subr.mxu0 0.0
    %1675 = vmatpush1.msra.mxu0 %v1636
    %1676 = vmatprep.subr.mxu0 0.0
    %1677 = vmatpush1.msra.mxu0 %v1635
    %1678 = vmatprep.subr.mxu0 0.0
    %1679 = vmatpush1.msra.mxu0 %v1634
    %1680 = vmatprep.subr.mxu0 0.0
    %1681 = vmatpush1.msra.mxu0 %v1633
    %1682 = vmatprep.subr.mxu0 0.0
    %1683 = vmatpush2.msra.mxu0 0.0
    %1684 = vmatprep.subr.mxu0 0.0
    %1685 = vmatpush2.msra.mxu0 0.0
    %1686 = vmatprep.subr.mxu0 0.0
    %1687 = vmatpush2.msra.mxu0 0.0
    %1688 = vmatprep.subr.mxu0 0.0
    %1689 = vmatpush2.msra.mxu0 0.0
    %1690 = vmatprep.subr.mxu0 0.0
    %1691 = vmatpush2.msra.mxu0 0.0
    %1692 = vmatprep.subr.mxu0 0.0
    %1693 = vmatpush2.msra.mxu0 0.0
    %1694 = vmatprep.subr.mxu0 0.0
    %1695 = vmatpush2.msra.mxu0 0.0
    %1696 = vmatprep.subr.mxu0 0.0
    %1697 = vmatpush2.msra.mxu0 0.0
    %1698 = vmatprep.subr.mxu0 0.0
    %1699 = vmatpush2.msra.mxu0 0.0
    %1700 = vmatprep.subr.mxu0 0.0
    %1701 = vmatpush2.msra.mxu0 0.0
    %1702 = vmatprep.subr.mxu0 0.0
    %1703 = vmatpush2.msra.mxu0 0.0
    %1704 = vmatprep.subr.mxu0 0.0
    %1705 = vmatpush2.msra.mxu0 0.0
    %1706 = vmatprep.subr.mxu0 0.0
    %1707 = vmatpush2.msra.mxu0 0.0
    %1708 = vmatprep.subr.mxu0 0.0
    %1709 = vmatpush2.msra.mxu0 0.0
    %1710 = vmatprep.subr.mxu0 0.0
    %1711 = vmatpush2.msra.mxu0 0.0
    %1712 = vmatprep.subr.mxu0 0.0
    %1713 = vmatpush2.msra.mxu0 0.0
    %1714 = vmatprep.mubr.f32.mxu0 0.0
    %1715 = vmatmul.mubr.f32.gmra.mxu0 %v1645
    %v1716 = vpop.f32.mrf.mxu0
    %v1717 = vadd.f32 %v1642, %v1716
    %v1718 = vpop.f32.mrf.mxu0
    %1719 = vmatprep.mubr.f32.mxu0 0.0
    %1720 = vmatmul.mubr.f32.gmra.mxu0 %v1648
    %v1721 = vpop.f32.mrf.mxu0
    %v1722 = vadd.f32 %v1642, %v1721
    %v1723 = vpop.f32.mrf.mxu0
    %1724 = vdwg.mxu0
    %v1725 = vmax.f32 %v1717, 0.0
    %v1726 = vmax.f32 %v1722, 0.0
    %v1727 = vld [vmem:[%s21] sm:$0xff]
    %v1728 = vld [vmem:[%s21 + $0x8] sm:$0xff]
    %v1729 = vld [vmem:[%s21 + $0x10] sm:$0xff]
    %v1730 = vld [vmem:[%s21 + $0x18] sm:$0xff]
    %v1731 = vld [vmem:[%s21 + $0x20] sm:$0xff]
    %v1732 = vld [vmem:[%s21 + $0x28] sm:$0xff]
    %v1733 = vld [vmem:[%s21 + $0x30] sm:$0xff]
    %v1734 = vld [vmem:[%s21 + $0x38] sm:$0xff]
    %v1735 = vld [vmem:[%s23] sm:$0x1]
    %v1737 = vlaneseq
    %v1738 = vshrl.u32 %v1737, 7
    %v1739 = vsub.s32 0, %v1738
    %v1740 = vrot.slane %v1735, %v1739
    %vm1742 = vcmask 523264
    %v1744 = vsel %vm1742, %v1725, 0
    %v1747 = vsel %vm1742, %v1726, 0
    %1749 = vmatprep.subr.mxu0 0.0
    %1750 = vmatpush1.msra.mxu0 0.0
    %1751 = vmatprep.subr.mxu0 0.0
    %1752 = vmatpush1.msra.mxu0 0.0
    %1753 = vmatprep.subr.mxu0 0.0
    %1754 = vmatpush1.msra.mxu0 0.0
    %1755 = vmatprep.subr.mxu0 0.0
    %1756 = vmatpush1.msra.mxu0 0.0
    %1757 = vmatprep.subr.mxu0 0.0
    %1758 = vmatpush1.msra.mxu0 0.0
    %1759 = vmatprep.subr.mxu0 0.0
    %1760 = vmatpush1.msra.mxu0 0.0
    %1761 = vmatprep.subr.mxu0 0.0
    %1762 = vmatpush1.msra.mxu0 0.0
    %1763 = vmatprep.subr.mxu0 0.0
    %1764 = vmatpush1.msra.mxu0 0.0
    %1765 = vmatprep.subr.mxu0 0.0
    %1766 = vmatpush1.msra.mxu0 %v1734
    %1767 = vmatprep.subr.mxu0 0.0
    %1768 = vmatpush1.msra.mxu0 %v1733
    %1769 = vmatprep.subr.mxu0 0.0
    %1770 = vmatpush1.msra.mxu0 %v1732
    %1771 = vmatprep.subr.mxu0 0.0
    %1772 = vmatpush1.msra.mxu0 %v1731
    %1773 = vmatprep.subr.mxu0 0.0
    %1774 = vmatpush1.msra.mxu0 %v1730
    %1775 = vmatprep.subr.mxu0 0.0
    %1776 = vmatpush1.msra.mxu0 %v1729
    %1777 = vmatprep.subr.mxu0 0.0
    %1778 = vmatpush1.msra.mxu0 %v1728
    %1779 = vmatprep.subr.mxu0 0.0
    %1780 = vmatpush1.msra.mxu0 %v1727
    %1781 = vmatprep.subr.mxu0 0.0
    %1782 = vmatpush2.msra.mxu0 0.0
    %1783 = vmatprep.subr.mxu0 0.0
    %1784 = vmatpush2.msra.mxu0 0.0
    %1785 = vmatprep.subr.mxu0 0.0
    %1786 = vmatpush2.msra.mxu0 0.0
    %1787 = vmatprep.subr.mxu0 0.0
    %1788 = vmatpush2.msra.mxu0 0.0
    %1789 = vmatprep.subr.mxu0 0.0
    %1790 = vmatpush2.msra.mxu0 0.0
    %1791 = vmatprep.subr.mxu0 0.0
    %1792 = vmatpush2.msra.mxu0 0.0
    %1793 = vmatprep.subr.mxu0 0.0
    %1794 = vmatpush2.msra.mxu0 0.0
    %1795 = vmatprep.subr.mxu0 0.0
    %1796 = vmatpush2.msra.mxu0 0.0
    %1797 = vmatprep.subr.mxu0 0.0
    %1798 = vmatpush2.msra.mxu0 0.0
    %1799 = vmatprep.subr.mxu0 0.0
    %1800 = vmatpush2.msra.mxu0 0.0
    %1801 = vmatprep.subr.mxu0 0.0
    %1802 = vmatpush2.msra.mxu0 0.0
    %1803 = vmatprep.subr.mxu0 0.0
    %1804 = vmatpush2.msra.mxu0 0.0
    %1805 = vmatprep.subr.mxu0 0.0
    %1806 = vmatpush2.msra.mxu0 0.0
    %1807 = vmatprep.subr.mxu0 0.0
    %1808 = vmatpush2.msra.mxu0 0.0
    %1809 = vmatprep.subr.mxu0 0.0
    %1810 = vmatpush2.msra.mxu0 0.0
    %1811 = vmatprep.subr.mxu0 0.0
    %1812 = vmatpush2.msra.mxu0 0.0
    %1813 = vmatprep.mubr.f32.mxu0 0.0
    %1814 = vmatmul.mubr.f32.gmra.mxu0 %v1744
    %v1815 = vpop.f32.mrf.mxu0
    %v1816 = vadd.f32 %v1740, %v1815
    %v1817 = vpop.f32.mrf.mxu0
    %1818 = vmatprep.mubr.f32.mxu0 0.0
    %1819 = vmatmul.mubr.f32.gmra.mxu0 %v1747
    %v1820 = vpop.f32.mrf.mxu0
    %v1821 = vadd.f32 %v1740, %v1820
    %v1822 = vpop.f32.mrf.mxu0
    %1823 = vdwg.mxu0
    %v1824 = vadd.f32 %v1816, %v1631
    %v1825 = vadd.f32 %v1821, %v1632
    %v1826 = vld [vmem:[%s25] sm:$0x1]
    %v1827 = vld [vmem:[%s27] sm:$0x1]
    %v1828 = vsel %vm134, %v1824, 0.0
    %1829 = vadd.xlane.f32.xlu0 %v1828
    %v1830 = vpop.xlane.xlu0 %1829
    %v1831 = vsel %vm134, %v1825, 0.0
    %1832 = vadd.xlane.f32.xlu0 %v1831
    %v1833 = vpop.xlane.xlu0 %1832
    %v1834 = vmul.f32 %v1830, %v1596
    %v1835 = vmul.f32 %v1833, %v1596
    %v1836 = vsub.f32 %v1824, %v1834
    %v1837 = vsub.f32 %v1825, %v1835
    %v1838 = vmul.f32 %v1836, %v1836
    %v1839 = vmul.f32 %v1837, %v1837
    %v1840 = vsel %vm134, %v1838, 0.0
    %1841 = vadd.xlane.f32.xlu0 %v1840
    %v1842 = vpop.xlane.xlu0 %1841
    %v1843 = vsel %vm134, %v1839, 0.0
    %1844 = vadd.xlane.f32.xlu0 %v1843
    %v1845 = vpop.xlane.xlu0 %1844
    %v1846 = vmul.f32 %v1842, %v1596
    %v1847 = vmul.f32 %v1845, %v1596
    %v1848 = vadd.f32 %v1846, 1e-05
    %v1849 = vadd.f32 %v1847, 1e-05
    %v1850 = vrsqrt.pop %v1848
    %v1851 = vrsqrt.pop %v1849
    %v1852 = vmul.f32 %v1836, %v1850
    %v1853 = vmul.f32 %v1837, %v1851
    %v1855 = vlaneseq
    %v1856 = vshrl.u32 %v1855, 7
    %v1857 = vsub.s32 0, %v1856
    %v1858 = vrot.slane %v1826, %v1857
    %v1860 = vmul.f32 %v1852, %v1858
    %v1861 = vmul.f32 %v1853, %v1858
    %v1863 = vlaneseq
    %v1864 = vshrl.u32 %v1863, 7
    %v1865 = vsub.s32 0, %v1864
    %v1866 = vrot.slane %v1827, %v1865
    %v1868 = vadd.f32 %v1860, %v1866
    %v1869 = vadd.f32 %v1861, %v1866
    %v1870 = vld [vmem:[%s29] sm:$0xff]
    %v1871 = vld [vmem:[%s29 + $0x8] sm:$0xff]
    %v1872 = vld [vmem:[%s29 + $0x10] sm:$0xff]
    %v1873 = vld [vmem:[%s29 + $0x18] sm:$0xff]
    %v1875 = vsel %vm134, %v1868, 0
    %v1878 = vsel %vm134, %v1869, 0
    %1880 = vmatprep.subr.mxu0 0.0
    %1881 = vmatpush1.msra.mxu0 0.0
    %1882 = vmatprep.subr.mxu0 0.0
    %1883 = vmatpush1.msra.mxu0 0.0
    %1884 = vmatprep.subr.mxu0 0.0
    %1885 = vmatpush1.msra.mxu0 0.0
    %1886 = vmatprep.subr.mxu0 0.0
    %1887 = vmatpush1.msra.mxu0 0.0
    %1888 = vmatprep.subr.mxu0 0.0
    %1889 = vmatpush1.msra.mxu0 0.0
    %1890 = vmatprep.subr.mxu0 0.0
    %1891 = vmatpush1.msra.mxu0 0.0
    %1892 = vmatprep.subr.mxu0 0.0
    %1893 = vmatpush1.msra.mxu0 0.0
    %1894 = vmatprep.subr.mxu0 0.0
    %1895 = vmatpush1.msra.mxu0 0.0
    %1896 = vmatprep.subr.mxu0 0.0
    %1897 = vmatpush1.msra.mxu0 0.0
    %1898 = vmatprep.subr.mxu0 0.0
    %1899 = vmatpush1.msra.mxu0 0.0
    %1900 = vmatprep.subr.mxu0 0.0
    %1901 = vmatpush1.msra.mxu0 0.0
    %1902 = vmatprep.subr.mxu0 0.0
    %1903 = vmatpush1.msra.mxu0 0.0
    %1904 = vmatprep.subr.mxu0 0.0
    %1905 = vmatpush1.msra.mxu0 %v1873
    %1906 = vmatprep.subr.mxu0 0.0
    %1907 = vmatpush1.msra.mxu0 %v1872
    %1908 = vmatprep.subr.mxu0 0.0
    %1909 = vmatpush1.msra.mxu0 %v1871
    %1910 = vmatprep.subr.mxu0 0.0
    %1911 = vmatpush1.msra.mxu0 %v1870
    %1912 = vmatprep.subr.mxu0 0.0
    %1913 = vmatpush2.msra.mxu0 0.0
    %1914 = vmatprep.subr.mxu0 0.0
    %1915 = vmatpush2.msra.mxu0 0.0
    %1916 = vmatprep.subr.mxu0 0.0
    %1917 = vmatpush2.msra.mxu0 0.0
    %1918 = vmatprep.subr.mxu0 0.0
    %1919 = vmatpush2.msra.mxu0 0.0
    %1920 = vmatprep.subr.mxu0 0.0
    %1921 = vmatpush2.msra.mxu0 0.0
    %1922 = vmatprep.subr.mxu0 0.0
    %1923 = vmatpush2.msra.mxu0 0.0
    %1924 = vmatprep.subr.mxu0 0.0
    %1925 = vmatpush2.msra.mxu0 0.0
    %1926 = vmatprep.subr.mxu0 0.0
    %1927 = vmatpush2.msra.mxu0 0.0
    %1928 = vmatprep.subr.mxu0 0.0
    %1929 = vmatpush2.msra.mxu0 0.0
    %1930 = vmatprep.subr.mxu0 0.0
    %1931 = vmatpush2.msra.mxu0 0.0
    %1932 = vmatprep.subr.mxu0 0.0
    %1933 = vmatpush2.msra.mxu0 0.0
    %1934 = vmatprep.subr.mxu0 0.0
    %1935 = vmatpush2.msra.mxu0 0.0
    %1936 = vmatprep.subr.mxu0 0.0
    %1937 = vmatpush2.msra.mxu0 0.0
    %1938 = vmatprep.subr.mxu0 0.0
    %1939 = vmatpush2.msra.mxu0 0.0
    %1940 = vmatprep.subr.mxu0 0.0
    %1941 = vmatpush2.msra.mxu0 0.0
    %1942 = vmatprep.subr.mxu0 0.0
    %1943 = vmatpush2.msra.mxu0 0.0
    %1944 = vmatprep.mubr.f32.mxu0 0.0
    %1945 = vmatmul.mubr.f32.gmra.mxu0 %v1875
    %v1946 = vpop.f32.mrf.mxu0
    %v1947 = vadd.f32 0.0, %v1946
    %v1948 = vpop.f32.mrf.mxu0
    %1949 = vmatprep.mubr.f32.mxu0 0.0
    %1950 = vmatmul.mubr.f32.gmra.mxu0 %v1878
    %v1951 = vpop.f32.mrf.mxu0
    %v1952 = vadd.f32 0.0, %v1951
    %v1953 = vpop.f32.mrf.mxu0
    %1954 = vdwg.mxu0
    %s1955 = scalar_lea.vmem %s29, 32
    %v1956 = vld [vmem:[%s1955] sm:$0xff]
    %v1957 = vld [vmem:[%s1955 + $0x8] sm:$0xff]
    %v1958 = vld [vmem:[%s1955 + $0x10] sm:$0xff]
    %v1959 = vld [vmem:[%s1955 + $0x18] sm:$0xff]
    %1960 = vmatprep.subr.mxu0 0.0
    %1961 = vmatpush1.msra.mxu0 0.0
    %1962 = vmatprep.subr.mxu0 0.0
    %1963 = vmatpush1.msra.mxu0 0.0
    %1964 = vmatprep.subr.mxu0 0.0
    %1965 = vmatpush1.msra.mxu0 0.0
    %1966 = vmatprep.subr.mxu0 0.0
    %1967 = vmatpush1.msra.mxu0 0.0
    %1968 = vmatprep.subr.mxu0 0.0
    %1969 = vmatpush1.msra.mxu0 0.0
    %1970 = vmatprep.subr.mxu0 0.0
    %1971 = vmatpush1.msra.mxu0 0.0
    %1972 = vmatprep.subr.mxu0 0.0
    %1973 = vmatpush1.msra.mxu0 0.0
    %1974 = vmatprep.subr.mxu0 0.0
    %1975 = vmatpush1.msra.mxu0 0.0
    %1976 = vmatprep.subr.mxu0 0.0
    %1977 = vmatpush1.msra.mxu0 0.0
    %1978 = vmatprep.subr.mxu0 0.0
    %1979 = vmatpush1.msra.mxu0 0.0
    %1980 = vmatprep.subr.mxu0 0.0
    %1981 = vmatpush1.msra.mxu0 0.0
    %1982 = vmatprep.subr.mxu0 0.0
    %1983 = vmatpush1.msra.mxu0 0.0
    %1984 = vmatprep.subr.mxu0 0.0
    %1985 = vmatpush1.msra.mxu0 %v1959
    %1986 = vmatprep.subr.mxu0 0.0
    %1987 = vmatpush1.msra.mxu0 %v1958
    %1988 = vmatprep.subr.mxu0 0.0
    %1989 = vmatpush1.msra.mxu0 %v1957
    %1990 = vmatprep.subr.mxu0 0.0
    %1991 = vmatpush1.msra.mxu0 %v1956
    %1992 = vmatprep.subr.mxu0 0.0
    %1993 = vmatpush2.msra.mxu0 0.0
    %1994 = vmatprep.subr.mxu0 0.0
    %1995 = vmatpush2.msra.mxu0 0.0
    %1996 = vmatprep.subr.mxu0 0.0
    %1997 = vmatpush2.msra.mxu0 0.0
    %1998 = vmatprep.subr.mxu0 0.0
    %1999 = vmatpush2.msra.mxu0 0.0
    %2000 = vmatprep.subr.mxu0 0.0
    %2001 = vmatpush2.msra.mxu0 0.0
    %2002 = vmatprep.subr.mxu0 0.0
    %2003 = vmatpush2.msra.mxu0 0.0
    %2004 = vmatprep.subr.mxu0 0.0
    %2005 = vmatpush2.msra.mxu0 0.0
    %2006 = vmatprep.subr.mxu0 0.0
    %2007 = vmatpush2.msra.mxu0 0.0
    %2008 = vmatprep.subr.mxu0 0.0
    %2009 = vmatpush2.msra.mxu0 0.0
    %2010 = vmatprep.subr.mxu0 0.0
    %2011 = vmatpush2.msra.mxu0 0.0
    %2012 = vmatprep.subr.mxu0 0.0
    %2013 = vmatpush2.msra.mxu0 0.0
    %2014 = vmatprep.subr.mxu0 0.0
    %2015 = vmatpush2.msra.mxu0 0.0
    %2016 = vmatprep.subr.mxu0 0.0
    %2017 = vmatpush2.msra.mxu0 0.0
    %2018 = vmatprep.subr.mxu0 0.0
    %2019 = vmatpush2.msra.mxu0 0.0
    %2020 = vmatprep.subr.mxu0 0.0
    %2021 = vmatpush2.msra.mxu0 0.0
    %2022 = vmatprep.subr.mxu0 0.0
    %2023 = vmatpush2.msra.mxu0 0.0
    %2024 = vmatprep.mubr.f32.mxu0 0.0
    %2025 = vmatmul.mubr.f32.gmra.mxu0 %v1875
    %v2026 = vpop.f32.mrf.mxu0
    %v2027 = vadd.f32 0.0, %v2026
    %v2028 = vpop.f32.mrf.mxu0
    %2029 = vmatprep.mubr.f32.mxu0 0.0
    %2030 = vmatmul.mubr.f32.gmra.mxu0 %v1878
    %v2031 = vpop.f32.mrf.mxu0
    %v2032 = vadd.f32 0.0, %v2031
    %v2033 = vpop.f32.mrf.mxu0
    %2034 = vdwg.mxu0
    %v2035 = vld [vmem:[%s31] sm:$0xff]
    %v2036 = vld [vmem:[%s31 + $0x8] sm:$0xff]
    %v2037 = vld [vmem:[%s31 + $0x10] sm:$0xff]
    %v2038 = vld [vmem:[%s31 + $0x18] sm:$0xff]
    %2039 = vmatprep.subr.mxu0 0.0
    %2040 = vmatpush1.msra.mxu0 0.0
    %2041 = vmatprep.subr.mxu0 0.0
    %2042 = vmatpush1.msra.mxu0 0.0
    %2043 = vmatprep.subr.mxu0 0.0
    %2044 = vmatpush1.msra.mxu0 0.0
    %2045 = vmatprep.subr.mxu0 0.0
    %2046 = vmatpush1.msra.mxu0 0.0
    %2047 = vmatprep.subr.mxu0 0.0
    %2048 = vmatpush1.msra.mxu0 0.0
    %2049 = vmatprep.subr.mxu0 0.0
    %2050 = vmatpush1.msra.mxu0 0.0
    %2051 = vmatprep.subr.mxu0 0.0
    %2052 = vmatpush1.msra.mxu0 0.0
    %2053 = vmatprep.subr.mxu0 0.0
    %2054 = vmatpush1.msra.mxu0 0.0
    %2055 = vmatprep.subr.mxu0 0.0
    %2056 = vmatpush1.msra.mxu0 0.0
    %2057 = vmatprep.subr.mxu0 0.0
    %2058 = vmatpush1.msra.mxu0 0.0
    %2059 = vmatprep.subr.mxu0 0.0
    %2060 = vmatpush1.msra.mxu0 0.0
    %2061 = vmatprep.subr.mxu0 0.0
    %2062 = vmatpush1.msra.mxu0 0.0
    %2063 = vmatprep.subr.mxu0 0.0
    %2064 = vmatpush1.msra.mxu0 %v2038
    %2065 = vmatprep.subr.mxu0 0.0
    %2066 = vmatpush1.msra.mxu0 %v2037
    %2067 = vmatprep.subr.mxu0 0.0
    %2068 = vmatpush1.msra.mxu0 %v2036
    %2069 = vmatprep.subr.mxu0 0.0
    %2070 = vmatpush1.msra.mxu0 %v2035
    %2071 = vmatprep.subr.mxu0 0.0
    %2072 = vmatpush2.msra.mxu0 0.0
    %2073 = vmatprep.subr.mxu0 0.0
    %2074 = vmatpush2.msra.mxu0 0.0
    %2075 = vmatprep.subr.mxu0 0.0
    %2076 = vmatpush2.msra.mxu0 0.0
    %2077 = vmatprep.subr.mxu0 0.0
    %2078 = vmatpush2.msra.mxu0 0.0
    %2079 = vmatprep.subr.mxu0 0.0
    %2080 = vmatpush2.msra.mxu0 0.0
    %2081 = vmatprep.subr.mxu0 0.0
    %2082 = vmatpush2.msra.mxu0 0.0
    %2083 = vmatprep.subr.mxu0 0.0
    %2084 = vmatpush2.msra.mxu0 0.0
    %2085 = vmatprep.subr.mxu0 0.0
    %2086 = vmatpush2.msra.mxu0 0.0
    %2087 = vmatprep.subr.mxu0 0.0
    %2088 = vmatpush2.msra.mxu0 0.0
    %2089 = vmatprep.subr.mxu0 0.0
    %2090 = vmatpush2.msra.mxu0 0.0
    %2091 = vmatprep.subr.mxu0 0.0
    %2092 = vmatpush2.msra.mxu0 0.0
    %2093 = vmatprep.subr.mxu0 0.0
    %2094 = vmatpush2.msra.mxu0 0.0
    %2095 = vmatprep.subr.mxu0 0.0
    %2096 = vmatpush2.msra.mxu0 0.0
    %2097 = vmatprep.subr.mxu0 0.0
    %2098 = vmatpush2.msra.mxu0 0.0
    %2099 = vmatprep.subr.mxu0 0.0
    %2100 = vmatpush2.msra.mxu0 0.0
    %2101 = vmatprep.subr.mxu0 0.0
    %2102 = vmatpush2.msra.mxu0 0.0
    %2103 = vmatprep.mubr.f32.mxu0 0.0
    %2104 = vmatmul.mubr.f32.gmra.mxu0 %v1875
    %v2105 = vpop.f32.mrf.mxu0
    %v2106 = vadd.f32 0.0, %v2105
    %v2107 = vpop.f32.mrf.mxu0
    %2108 = vmatprep.mubr.f32.mxu0 0.0
    %2109 = vmatmul.mubr.f32.gmra.mxu0 %v1878
    %v2110 = vpop.f32.mrf.mxu0
    %v2111 = vadd.f32 0.0, %v2110
    %v2112 = vpop.f32.mrf.mxu0
    %2113 = vdwg.mxu0
    %s2114 = scalar_lea.vmem %s31, 32
    %v2115 = vld [vmem:[%s2114] sm:$0xff]
    %v2116 = vld [vmem:[%s2114 + $0x8] sm:$0xff]
    %v2117 = vld [vmem:[%s2114 + $0x10] sm:$0xff]
    %v2118 = vld [vmem:[%s2114 + $0x18] sm:$0xff]
    %2119 = vmatprep.subr.mxu0 0.0
    %2120 = vmatpush1.msra.mxu0 0.0
    %2121 = vmatprep.subr.mxu0 0.0
    %2122 = vmatpush1.msra.mxu0 0.0
    %2123 = vmatprep.subr.mxu0 0.0
    %2124 = vmatpush1.msra.mxu0 0.0
    %2125 = vmatprep.subr.mxu0 0.0
    %2126 = vmatpush1.msra.mxu0 0.0
    %2127 = vmatprep.subr.mxu0 0.0
    %2128 = vmatpush1.msra.mxu0 0.0
    %2129 = vmatprep.subr.mxu0 0.0
    %2130 = vmatpush1.msra.mxu0 0.0
    %2131 = vmatprep.subr.mxu0 0.0
    %2132 = vmatpush1.msra.mxu0 0.0
    %2133 = vmatprep.subr.mxu0 0.0
    %2134 = vmatpush1.msra.mxu0 0.0
    %2135 = vmatprep.subr.mxu0 0.0
    %2136 = vmatpush1.msra.mxu0 0.0
    %2137 = vmatprep.subr.mxu0 0.0
    %2138 = vmatpush1.msra.mxu0 0.0
    %2139 = vmatprep.subr.mxu0 0.0
    %2140 = vmatpush1.msra.mxu0 0.0
    %2141 = vmatprep.subr.mxu0 0.0
    %2142 = vmatpush1.msra.mxu0 0.0
    %2143 = vmatprep.subr.mxu0 0.0
    %2144 = vmatpush1.msra.mxu0 %v2118
    %2145 = vmatprep.subr.mxu0 0.0
    %2146 = vmatpush1.msra.mxu0 %v2117
    %2147 = vmatprep.subr.mxu0 0.0
    %2148 = vmatpush1.msra.mxu0 %v2116
    %2149 = vmatprep.subr.mxu0 0.0
    %2150 = vmatpush1.msra.mxu0 %v2115
    %2151 = vmatprep.subr.mxu0 0.0
    %2152 = vmatpush2.msra.mxu0 0.0
    %2153 = vmatprep.subr.mxu0 0.0
    %2154 = vmatpush2.msra.mxu0 0.0
    %2155 = vmatprep.subr.mxu0 0.0
    %2156 = vmatpush2.msra.mxu0 0.0
    %2157 = vmatprep.subr.mxu0 0.0
    %2158 = vmatpush2.msra.mxu0 0.0
    %2159 = vmatprep.subr.mxu0 0.0
    %2160 = vmatpush2.msra.mxu0 0.0
    %2161 = vmatprep.subr.mxu0 0.0
    %2162 = vmatpush2.msra.mxu0 0.0
    %2163 = vmatprep.subr.mxu0 0.0
    %2164 = vmatpush2.msra.mxu0 0.0
    %2165 = vmatprep.subr.mxu0 0.0
    %2166 = vmatpush2.msra.mxu0 0.0
    %2167 = vmatprep.subr.mxu0 0.0
    %2168 = vmatpush2.msra.mxu0 0.0
    %2169 = vmatprep.subr.mxu0 0.0
    %2170 = vmatpush2.msra.mxu0 0.0
    %2171 = vmatprep.subr.mxu0 0.0
    %2172 = vmatpush2.msra.mxu0 0.0
    %2173 = vmatprep.subr.mxu0 0.0
    %2174 = vmatpush2.msra.mxu0 0.0
    %2175 = vmatprep.subr.mxu0 0.0
    %2176 = vmatpush2.msra.mxu0 0.0
    %2177 = vmatprep.subr.mxu0 0.0
    %2178 = vmatpush2.msra.mxu0 0.0
    %2179 = vmatprep.subr.mxu0 0.0
    %2180 = vmatpush2.msra.mxu0 0.0
    %2181 = vmatprep.subr.mxu0 0.0
    %2182 = vmatpush2.msra.mxu0 0.0
    %2183 = vmatprep.mubr.f32.mxu0 0.0
    %2184 = vmatmul.mubr.f32.gmra.mxu0 %v1875
    %v2185 = vpop.f32.mrf.mxu0
    %v2186 = vadd.f32 0.0, %v2185
    %v2187 = vpop.f32.mrf.mxu0
    %2188 = vmatprep.mubr.f32.mxu0 0.0
    %2189 = vmatmul.mubr.f32.gmra.mxu0 %v1878
    %v2190 = vpop.f32.mrf.mxu0
    %v2191 = vadd.f32 0.0, %v2190
    %v2192 = vpop.f32.mrf.mxu0
    %2193 = vdwg.mxu0
    %v2194 = vld [vmem:[%s33] sm:$0xff]
    %v2195 = vld [vmem:[%s33 + $0x8] sm:$0xff]
    %v2196 = vld [vmem:[%s33 + $0x10] sm:$0xff]
    %v2197 = vld [vmem:[%s33 + $0x18] sm:$0xff]
    %2198 = vmatprep.subr.mxu0 0.0
    %2199 = vmatpush1.msra.mxu0 0.0
    %2200 = vmatprep.subr.mxu0 0.0
    %2201 = vmatpush1.msra.mxu0 0.0
    %2202 = vmatprep.subr.mxu0 0.0
    %2203 = vmatpush1.msra.mxu0 0.0
    %2204 = vmatprep.subr.mxu0 0.0
    %2205 = vmatpush1.msra.mxu0 0.0
    %2206 = vmatprep.subr.mxu0 0.0
    %2207 = vmatpush1.msra.mxu0 0.0
    %2208 = vmatprep.subr.mxu0 0.0
    %2209 = vmatpush1.msra.mxu0 0.0
    %2210 = vmatprep.subr.mxu0 0.0
    %2211 = vmatpush1.msra.mxu0 0.0
    %2212 = vmatprep.subr.mxu0 0.0
    %2213 = vmatpush1.msra.mxu0 0.0
    %2214 = vmatprep.subr.mxu0 0.0
    %2215 = vmatpush1.msra.mxu0 0.0
    %2216 = vmatprep.subr.mxu0 0.0
    %2217 = vmatpush1.msra.mxu0 0.0
    %2218 = vmatprep.subr.mxu0 0.0
    %2219 = vmatpush1.msra.mxu0 0.0
    %2220 = vmatprep.subr.mxu0 0.0
    %2221 = vmatpush1.msra.mxu0 0.0
    %2222 = vmatprep.subr.mxu0 0.0
    %2223 = vmatpush1.msra.mxu0 %v2197
    %2224 = vmatprep.subr.mxu0 0.0
    %2225 = vmatpush1.msra.mxu0 %v2196
    %2226 = vmatprep.subr.mxu0 0.0
    %2227 = vmatpush1.msra.mxu0 %v2195
    %2228 = vmatprep.subr.mxu0 0.0
    %2229 = vmatpush1.msra.mxu0 %v2194
    %2230 = vmatprep.subr.mxu0 0.0
    %2231 = vmatpush2.msra.mxu0 0.0
    %2232 = vmatprep.subr.mxu0 0.0
    %2233 = vmatpush2.msra.mxu0 0.0
    %2234 = vmatprep.subr.mxu0 0.0
    %2235 = vmatpush2.msra.mxu0 0.0
    %2236 = vmatprep.subr.mxu0 0.0
    %2237 = vmatpush2.msra.mxu0 0.0
    %2238 = vmatprep.subr.mxu0 0.0
    %2239 = vmatpush2.msra.mxu0 0.0
    %2240 = vmatprep.subr.mxu0 0.0
    %2241 = vmatpush2.msra.mxu0 0.0
    %2242 = vmatprep.subr.mxu0 0.0
    %2243 = vmatpush2.msra.mxu0 0.0
    %2244 = vmatprep.subr.mxu0 0.0
    %2245 = vmatpush2.msra.mxu0 0.0
    %2246 = vmatprep.subr.mxu0 0.0
    %2247 = vmatpush2.msra.mxu0 0.0
    %2248 = vmatprep.subr.mxu0 0.0
    %2249 = vmatpush2.msra.mxu0 0.0
    %2250 = vmatprep.subr.mxu0 0.0
    %2251 = vmatpush2.msra.mxu0 0.0
    %2252 = vmatprep.subr.mxu0 0.0
    %2253 = vmatpush2.msra.mxu0 0.0
    %2254 = vmatprep.subr.mxu0 0.0
    %2255 = vmatpush2.msra.mxu0 0.0
    %2256 = vmatprep.subr.mxu0 0.0
    %2257 = vmatpush2.msra.mxu0 0.0
    %2258 = vmatprep.subr.mxu0 0.0
    %2259 = vmatpush2.msra.mxu0 0.0
    %2260 = vmatprep.subr.mxu0 0.0
    %2261 = vmatpush2.msra.mxu0 0.0
    %2262 = vmatprep.mubr.f32.mxu0 0.0
    %2263 = vmatmul.mubr.f32.gmra.mxu0 %v1875
    %v2264 = vpop.f32.mrf.mxu0
    %v2265 = vadd.f32 0.0, %v2264
    %v2266 = vpop.f32.mrf.mxu0
    %2267 = vmatprep.mubr.f32.mxu0 0.0
    %2268 = vmatmul.mubr.f32.gmra.mxu0 %v1878
    %v2269 = vpop.f32.mrf.mxu0
    %v2270 = vadd.f32 0.0, %v2269
    %v2271 = vpop.f32.mrf.mxu0
    %2272 = vdwg.mxu0
    %s2273 = scalar_lea.vmem %s33, 32
    %v2274 = vld [vmem:[%s2273] sm:$0xff]
    %v2275 = vld [vmem:[%s2273 + $0x8] sm:$0xff]
    %v2276 = vld [vmem:[%s2273 + $0x10] sm:$0xff]
    %v2277 = vld [vmem:[%s2273 + $0x18] sm:$0xff]
    %2278 = vmatprep.subr.mxu0 0.0
    %2279 = vmatpush1.msra.mxu0 0.0
    %2280 = vmatprep.subr.mxu0 0.0
    %2281 = vmatpush1.msra.mxu0 0.0
    %2282 = vmatprep.subr.mxu0 0.0
    %2283 = vmatpush1.msra.mxu0 0.0
    %2284 = vmatprep.subr.mxu0 0.0
    %2285 = vmatpush1.msra.mxu0 0.0
    %2286 = vmatprep.subr.mxu0 0.0
    %2287 = vmatpush1.msra.mxu0 0.0
    %2288 = vmatprep.subr.mxu0 0.0
    %2289 = vmatpush1.msra.mxu0 0.0
    %2290 = vmatprep.subr.mxu0 0.0
    %2291 = vmatpush1.msra.mxu0 0.0
    %2292 = vmatprep.subr.mxu0 0.0
    %2293 = vmatpush1.msra.mxu0 0.0
    %2294 = vmatprep.subr.mxu0 0.0
    %2295 = vmatpush1.msra.mxu0 0.0
    %2296 = vmatprep.subr.mxu0 0.0
    %2297 = vmatpush1.msra.mxu0 0.0
    %2298 = vmatprep.subr.mxu0 0.0
    %2299 = vmatpush1.msra.mxu0 0.0
    %2300 = vmatprep.subr.mxu0 0.0
    %2301 = vmatpush1.msra.mxu0 0.0
    %2302 = vmatprep.subr.mxu0 0.0
    %2303 = vmatpush1.msra.mxu0 %v2277
    %2304 = vmatprep.subr.mxu0 0.0
    %2305 = vmatpush1.msra.mxu0 %v2276
    %2306 = vmatprep.subr.mxu0 0.0
    %2307 = vmatpush1.msra.mxu0 %v2275
    %2308 = vmatprep.subr.mxu0 0.0
    %2309 = vmatpush1.msra.mxu0 %v2274
    %2310 = vmatprep.subr.mxu0 0.0
    %2311 = vmatpush2.msra.mxu0 0.0
    %2312 = vmatprep.subr.mxu0 0.0
    %2313 = vmatpush2.msra.mxu0 0.0
    %2314 = vmatprep.subr.mxu0 0.0
    %2315 = vmatpush2.msra.mxu0 0.0
    %2316 = vmatprep.subr.mxu0 0.0
    %2317 = vmatpush2.msra.mxu0 0.0
    %2318 = vmatprep.subr.mxu0 0.0
    %2319 = vmatpush2.msra.mxu0 0.0
    %2320 = vmatprep.subr.mxu0 0.0
    %2321 = vmatpush2.msra.mxu0 0.0
    %2322 = vmatprep.subr.mxu0 0.0
    %2323 = vmatpush2.msra.mxu0 0.0
    %2324 = vmatprep.subr.mxu0 0.0
    %2325 = vmatpush2.msra.mxu0 0.0
    %2326 = vmatprep.subr.mxu0 0.0
    %2327 = vmatpush2.msra.mxu0 0.0
    %2328 = vmatprep.subr.mxu0 0.0
    %2329 = vmatpush2.msra.mxu0 0.0
    %2330 = vmatprep.subr.mxu0 0.0
    %2331 = vmatpush2.msra.mxu0 0.0
    %2332 = vmatprep.subr.mxu0 0.0
    %2333 = vmatpush2.msra.mxu0 0.0
    %2334 = vmatprep.subr.mxu0 0.0
    %2335 = vmatpush2.msra.mxu0 0.0
    %2336 = vmatprep.subr.mxu0 0.0
    %2337 = vmatpush2.msra.mxu0 0.0
    %2338 = vmatprep.subr.mxu0 0.0
    %2339 = vmatpush2.msra.mxu0 0.0
    %2340 = vmatprep.subr.mxu0 0.0
    %2341 = vmatpush2.msra.mxu0 0.0
    %2342 = vmatprep.mubr.f32.mxu0 0.0
    %2343 = vmatmul.mubr.f32.gmra.mxu0 %v1875
    %v2344 = vpop.f32.mrf.mxu0
    %v2345 = vadd.f32 0.0, %v2344
    %v2346 = vpop.f32.mrf.mxu0
    %2347 = vmatprep.mubr.f32.mxu0 0.0
    %2348 = vmatmul.mubr.f32.gmra.mxu0 %v1878
    %v2349 = vpop.f32.mrf.mxu0
    %v2350 = vadd.f32 0.0, %v2349
    %v2351 = vpop.f32.mrf.mxu0
    %2352 = vdwg.mxu0
    %v2354 = vsel %vm622, %v1947, 0
    %v2357 = vsel %vm622, %v2106, 0
    %2359 = vmatprep.subr.mxu0 0.0
    %2360 = vmatpush1.xpose.msra.mxu0 0.0
    %2361 = vmatprep.subr.mxu0 0.0
    %2362 = vmatpush1.xpose.msra.mxu0 0.0
    %2363 = vmatprep.subr.mxu0 0.0
    %2364 = vmatpush1.xpose.msra.mxu0 0.0
    %2365 = vmatprep.subr.mxu0 0.0
    %2366 = vmatpush1.xpose.msra.mxu0 0.0
    %2367 = vmatprep.subr.mxu0 0.0
    %2368 = vmatpush1.xpose.msra.mxu0 0.0
    %2369 = vmatprep.subr.mxu0 0.0
    %2370 = vmatpush1.xpose.msra.mxu0 0.0
    %2371 = vmatprep.subr.mxu0 0.0
    %2372 = vmatpush1.xpose.msra.mxu0 0.0
    %2373 = vmatprep.subr.mxu0 0.0
    %2374 = vmatpush1.xpose.msra.mxu0 0.0
    %2375 = vmatprep.subr.mxu0 0.0
    %2376 = vmatpush1.xpose.msra.mxu0 0.0
    %2377 = vmatprep.subr.mxu0 0.0
    %2378 = vmatpush1.xpose.msra.mxu0 0.0
    %2379 = vmatprep.subr.mxu0 0.0
    %2380 = vmatpush1.xpose.msra.mxu0 0.0
    %2381 = vmatprep.subr.mxu0 0.0
    %2382 = vmatpush1.xpose.msra.mxu0 0.0
    %2383 = vmatprep.subr.mxu0 0.0
    %2384 = vmatpush1.xpose.msra.mxu0 0.0
    %2385 = vmatprep.subr.mxu0 0.0
    %2386 = vmatpush1.xpose.msra.mxu0 0.0
    %2387 = vmatprep.subr.mxu0 0.0
    %2388 = vmatpush1.xpose.msra.mxu0 0.0
    %2389 = vmatprep.subr.mxu0 0.0
    %2390 = vmatpush1.xpose.msra.mxu0 %v2357
    %2391 = vmatprep.subr.mxu0 0.0
    %2392 = vmatpush2.xpose.msra.mxu0 0.0
    %2393 = vmatprep.subr.mxu0 0.0
    %2394 = vmatpush2.xpose.msra.mxu0 0.0
    %2395 = vmatprep.subr.mxu0 0.0
    %2396 = vmatpush2.xpose.msra.mxu0 0.0
    %2397 = vmatprep.subr.mxu0 0.0
    %2398 = vmatpush2.xpose.msra.mxu0 0.0
    %2399 = vmatprep.subr.mxu0 0.0
    %2400 = vmatpush2.xpose.msra.mxu0 0.0
    %2401 = vmatprep.subr.mxu0 0.0
    %2402 = vmatpush2.xpose.msra.mxu0 0.0
    %2403 = vmatprep.subr.mxu0 0.0
    %2404 = vmatpush2.xpose.msra.mxu0 0.0
    %2405 = vmatprep.subr.mxu0 0.0
    %2406 = vmatpush2.xpose.msra.mxu0 0.0
    %2407 = vmatprep.subr.mxu0 0.0
    %2408 = vmatpush2.xpose.msra.mxu0 0.0
    %2409 = vmatprep.subr.mxu0 0.0
    %2410 = vmatpush2.xpose.msra.mxu0 0.0
    %2411 = vmatprep.subr.mxu0 0.0
    %2412 = vmatpush2.xpose.msra.mxu0 0.0
    %2413 = vmatprep.subr.mxu0 0.0
    %2414 = vmatpush2.xpose.msra.mxu0 0.0
    %2415 = vmatprep.subr.mxu0 0.0
    %2416 = vmatpush2.xpose.msra.mxu0 0.0
    %2417 = vmatprep.subr.mxu0 0.0
    %2418 = vmatpush2.xpose.msra.mxu0 0.0
    %2419 = vmatprep.subr.mxu0 0.0
    %2420 = vmatpush2.xpose.msra.mxu0 0.0
    %2421 = vmatprep.subr.mxu0 0.0
    %2422 = vmatpush2.xpose.msra.mxu0 0.0
    %2423 = vmatprep.mubr.f32.mxu0 0.0
    %2424 = vmatmul.mubr.f32.gmra.mxu0 %v2354
    %v2425 = vpop.f32.mrf.mxu0
    %v2426 = vadd.f32 0.0, %v2425
    %v2427 = vpop.f32.mrf.mxu0
    %2428 = vdwg.mxu0
    %v2429 = vmul.f32 %v2426, 0.25
    %v2430 = vsel %vm621, -1e+09, %v2429
    %v2431 = vsel %vm701, %v2430, -inf
    %2432 = vmax.xlane.f32.xlu0 %v2431
    %v2433 = vpop.xlane.xlu0 %2432
    %v2434 = vsub.f32 %v2430, %v2433
    %v2435 = vmul.f32 %v2434, 1.442695
    %v2436 = vpow.pop %v2435
    %v2437 = vsel %vm701, %v2436, 0.0
    %2438 = vadd.xlane.f32.xlu0 %v2437
    %v2439 = vpop.xlane.xlu0 %2438
    %v2440 = vrcp.pop %v2439
    %v2441 = vmul.f32 %v2436, %v2440
    %s2442 = scalar_lea.vmem %s59, 32
    %2443 = vst.msk [vmem:[%s2442] sm:$0xff] %vm701, %v2441
    %v2445 = vsel %vm701, %v2441, 0
    %2447 = vmatprep.subr.mxu0 0.0
    %2448 = vmatpush1.msra.mxu0 0.0
    %2449 = vmatprep.subr.mxu0 0.0
    %2450 = vmatpush1.msra.mxu0 0.0
    %2451 = vmatprep.subr.mxu0 0.0
    %2452 = vmatpush1.msra.mxu0 0.0
    %2453 = vmatprep.subr.mxu0 0.0
    %2454 = vmatpush1.msra.mxu0 0.0
    %2455 = vmatprep.subr.mxu0 0.0
    %2456 = vmatpush1.msra.mxu0 0.0
    %2457 = vmatprep.subr.mxu0 0.0
    %2458 = vmatpush1.msra.mxu0 0.0
    %2459 = vmatprep.subr.mxu0 0.0
    %2460 = vmatpush1.msra.mxu0 0.0
    %2461 = vmatprep.subr.mxu0 0.0
    %2462 = vmatpush1.msra.mxu0 0.0
    %2463 = vmatprep.subr.mxu0 0.0
    %2464 = vmatpush1.msra.mxu0 0.0
    %2465 = vmatprep.subr.mxu0 0.0
    %2466 = vmatpush1.msra.mxu0 0.0
    %2467 = vmatprep.subr.mxu0 0.0
    %2468 = vmatpush1.msra.mxu0 0.0
    %2469 = vmatprep.subr.mxu0 0.0
    %2470 = vmatpush1.msra.mxu0 0.0
    %2471 = vmatprep.subr.mxu0 0.0
    %2472 = vmatpush1.msra.mxu0 0.0
    %2473 = vmatprep.subr.mxu0 0.0
    %2474 = vmatpush1.msra.mxu0 0.0
    %2475 = vmatprep.subr.mxu0 0.0
    %2476 = vmatpush1.msra.mxu0 0.0
    %2477 = vmatprep.subr.mxu0 0.0
    %2478 = vmatpush1.msra.mxu0 %v2265
    %2479 = vmatprep.subr.mxu0 0.0
    %2480 = vmatpush2.msra.mxu0 0.0
    %2481 = vmatprep.subr.mxu0 0.0
    %2482 = vmatpush2.msra.mxu0 0.0
    %2483 = vmatprep.subr.mxu0 0.0
    %2484 = vmatpush2.msra.mxu0 0.0
    %2485 = vmatprep.subr.mxu0 0.0
    %2486 = vmatpush2.msra.mxu0 0.0
    %2487 = vmatprep.subr.mxu0 0.0
    %2488 = vmatpush2.msra.mxu0 0.0
    %2489 = vmatprep.subr.mxu0 0.0
    %2490 = vmatpush2.msra.mxu0 0.0
    %2491 = vmatprep.subr.mxu0 0.0
    %2492 = vmatpush2.msra.mxu0 0.0
    %2493 = vmatprep.subr.mxu0 0.0
    %2494 = vmatpush2.msra.mxu0 0.0
    %2495 = vmatprep.subr.mxu0 0.0
    %2496 = vmatpush2.msra.mxu0 0.0
    %2497 = vmatprep.subr.mxu0 0.0
    %2498 = vmatpush2.msra.mxu0 0.0
    %2499 = vmatprep.subr.mxu0 0.0
    %2500 = vmatpush2.msra.mxu0 0.0
    %2501 = vmatprep.subr.mxu0 0.0
    %2502 = vmatpush2.msra.mxu0 0.0
    %2503 = vmatprep.subr.mxu0 0.0
    %2504 = vmatpush2.msra.mxu0 0.0
    %2505 = vmatprep.subr.mxu0 0.0
    %2506 = vmatpush2.msra.mxu0 0.0
    %2507 = vmatprep.subr.mxu0 0.0
    %2508 = vmatpush2.msra.mxu0 0.0
    %2509 = vmatprep.subr.mxu0 0.0
    %2510 = vmatpush2.msra.mxu0 0.0
    %2511 = vmatprep.mubr.f32.mxu0 0.0
    %2512 = vmatmul.mubr.f32.gmra.mxu0 %v2445
    %v2513 = vpop.f32.mrf.mxu0
    %v2514 = vadd.f32 0.0, %v2513
    %v2515 = vpop.f32.mrf.mxu0
    %2516 = vdwg.mxu0
    %v2517 = vld [vmem:[%s35] sm:$0xff]
    %v2518 = vld [vmem:[%s35 + $0x8] sm:$0xff]
    %v2520 = vsel %vm622, %v2027, 0
    %v2523 = vsel %vm622, %v2186, 0
    %2525 = vmatprep.subr.mxu0 0.0
    %2526 = vmatpush1.xpose.msra.mxu0 0.0
    %2527 = vmatprep.subr.mxu0 0.0
    %2528 = vmatpush1.xpose.msra.mxu0 0.0
    %2529 = vmatprep.subr.mxu0 0.0
    %2530 = vmatpush1.xpose.msra.mxu0 0.0
    %2531 = vmatprep.subr.mxu0 0.0
    %2532 = vmatpush1.xpose.msra.mxu0 0.0
    %2533 = vmatprep.subr.mxu0 0.0
    %2534 = vmatpush1.xpose.msra.mxu0 0.0
    %2535 = vmatprep.subr.mxu0 0.0
    %2536 = vmatpush1.xpose.msra.mxu0 0.0
    %2537 = vmatprep.subr.mxu0 0.0
    %2538 = vmatpush1.xpose.msra.mxu0 0.0
    %2539 = vmatprep.subr.mxu0 0.0
    %2540 = vmatpush1.xpose.msra.mxu0 0.0
    %2541 = vmatprep.subr.mxu0 0.0
    %2542 = vmatpush1.xpose.msra.mxu0 0.0
    %2543 = vmatprep.subr.mxu0 0.0
    %2544 = vmatpush1.xpose.msra.mxu0 0.0
    %2545 = vmatprep.subr.mxu0 0.0
    %2546 = vmatpush1.xpose.msra.mxu0 0.0
    %2547 = vmatprep.subr.mxu0 0.0
    %2548 = vmatpush1.xpose.msra.mxu0 0.0
    %2549 = vmatprep.subr.mxu0 0.0
    %2550 = vmatpush1.xpose.msra.mxu0 0.0
    %2551 = vmatprep.subr.mxu0 0.0
    %2552 = vmatpush1.xpose.msra.mxu0 0.0
    %2553 = vmatprep.subr.mxu0 0.0
    %2554 = vmatpush1.xpose.msra.mxu0 0.0
    %2555 = vmatprep.subr.mxu0 0.0
    %2556 = vmatpush1.xpose.msra.mxu0 %v2523
    %2557 = vmatprep.subr.mxu0 0.0
    %2558 = vmatpush2.xpose.msra.mxu0 0.0
    %2559 = vmatprep.subr.mxu0 0.0
    %2560 = vmatpush2.xpose.msra.mxu0 0.0
    %2561 = vmatprep.subr.mxu0 0.0
    %2562 = vmatpush2.xpose.msra.mxu0 0.0
    %2563 = vmatprep.subr.mxu0 0.0
    %2564 = vmatpush2.xpose.msra.mxu0 0.0
    %2565 = vmatprep.subr.mxu0 0.0
    %2566 = vmatpush2.xpose.msra.mxu0 0.0
    %2567 = vmatprep.subr.mxu0 0.0
    %2568 = vmatpush2.xpose.msra.mxu0 0.0
    %2569 = vmatprep.subr.mxu0 0.0
    %2570 = vmatpush2.xpose.msra.mxu0 0.0
    %2571 = vmatprep.subr.mxu0 0.0
    %2572 = vmatpush2.xpose.msra.mxu0 0.0
    %2573 = vmatprep.subr.mxu0 0.0
    %2574 = vmatpush2.xpose.msra.mxu0 0.0
    %2575 = vmatprep.subr.mxu0 0.0
    %2576 = vmatpush2.xpose.msra.mxu0 0.0
    %2577 = vmatprep.subr.mxu0 0.0
    %2578 = vmatpush2.xpose.msra.mxu0 0.0
    %2579 = vmatprep.subr.mxu0 0.0
    %2580 = vmatpush2.xpose.msra.mxu0 0.0
    %2581 = vmatprep.subr.mxu0 0.0
    %2582 = vmatpush2.xpose.msra.mxu0 0.0
    %2583 = vmatprep.subr.mxu0 0.0
    %2584 = vmatpush2.xpose.msra.mxu0 0.0
    %2585 = vmatprep.subr.mxu0 0.0
    %2586 = vmatpush2.xpose.msra.mxu0 0.0
    %2587 = vmatprep.subr.mxu0 0.0
    %2588 = vmatpush2.xpose.msra.mxu0 0.0
    %2589 = vmatprep.mubr.f32.mxu0 0.0
    %2590 = vmatmul.mubr.f32.gmra.mxu0 %v2520
    %v2591 = vpop.f32.mrf.mxu0
    %v2592 = vadd.f32 0.0, %v2591
    %v2593 = vpop.f32.mrf.mxu0
    %2594 = vdwg.mxu0
    %v2595 = vmul.f32 %v2592, 0.25
    %v2596 = vsel %vm621, -1e+09, %v2595
    %v2597 = vsel %vm701, %v2596, -inf
    %2598 = vmax.xlane.f32.xlu0 %v2597
    %v2599 = vpop.xlane.xlu0 %2598
    %v2600 = vsub.f32 %v2596, %v2599
    %v2601 = vmul.f32 %v2600, 1.442695
    %v2602 = vpow.pop %v2601
    %v2603 = vsel %vm701, %v2602, 0.0
    %2604 = vadd.xlane.f32.xlu0 %v2603
    %v2605 = vpop.xlane.xlu0 %2604
    %v2606 = vrcp.pop %v2605
    %v2607 = vmul.f32 %v2602, %v2606
    %s2608 = scalar_lea.vmem %s59, 40
    %2609 = vst.msk [vmem:[%s2608] sm:$0xff] %vm701, %v2607
    %v2611 = vsel %vm701, %v2607, 0
    %2613 = vmatprep.subr.mxu0 0.0
    %2614 = vmatpush1.msra.mxu0 0.0
    %2615 = vmatprep.subr.mxu0 0.0
    %2616 = vmatpush1.msra.mxu0 0.0
    %2617 = vmatprep.subr.mxu0 0.0
    %2618 = vmatpush1.msra.mxu0 0.0
    %2619 = vmatprep.subr.mxu0 0.0
    %2620 = vmatpush1.msra.mxu0 0.0
    %2621 = vmatprep.subr.mxu0 0.0
    %2622 = vmatpush1.msra.mxu0 0.0
    %2623 = vmatprep.subr.mxu0 0.0
    %2624 = vmatpush1.msra.mxu0 0.0
    %2625 = vmatprep.subr.mxu0 0.0
    %2626 = vmatpush1.msra.mxu0 0.0
    %2627 = vmatprep.subr.mxu0 0.0
    %2628 = vmatpush1.msra.mxu0 0.0
    %2629 = vmatprep.subr.mxu0 0.0
    %2630 = vmatpush1.msra.mxu0 0.0
    %2631 = vmatprep.subr.mxu0 0.0
    %2632 = vmatpush1.msra.mxu0 0.0
    %2633 = vmatprep.subr.mxu0 0.0
    %2634 = vmatpush1.msra.mxu0 0.0
    %2635 = vmatprep.subr.mxu0 0.0
    %2636 = vmatpush1.msra.mxu0 0.0
    %2637 = vmatprep.subr.mxu0 0.0
    %2638 = vmatpush1.msra.mxu0 0.0
    %2639 = vmatprep.subr.mxu0 0.0
    %2640 = vmatpush1.msra.mxu0 0.0
    %2641 = vmatprep.subr.mxu0 0.0
    %2642 = vmatpush1.msra.mxu0 0.0
    %2643 = vmatprep.subr.mxu0 0.0
    %2644 = vmatpush1.msra.mxu0 %v2345
    %2645 = vmatprep.subr.mxu0 0.0
    %2646 = vmatpush2.msra.mxu0 0.0
    %2647 = vmatprep.subr.mxu0 0.0
    %2648 = vmatpush2.msra.mxu0 0.0
    %2649 = vmatprep.subr.mxu0 0.0
    %2650 = vmatpush2.msra.mxu0 0.0
    %2651 = vmatprep.subr.mxu0 0.0
    %2652 = vmatpush2.msra.mxu0 0.0
    %2653 = vmatprep.subr.mxu0 0.0
    %2654 = vmatpush2.msra.mxu0 0.0
    %2655 = vmatprep.subr.mxu0 0.0
    %2656 = vmatpush2.msra.mxu0 0.0
    %2657 = vmatprep.subr.mxu0 0.0
    %2658 = vmatpush2.msra.mxu0 0.0
    %2659 = vmatprep.subr.mxu0 0.0
    %2660 = vmatpush2.msra.mxu0 0.0
    %2661 = vmatprep.subr.mxu0 0.0
    %2662 = vmatpush2.msra.mxu0 0.0
    %2663 = vmatprep.subr.mxu0 0.0
    %2664 = vmatpush2.msra.mxu0 0.0
    %2665 = vmatprep.subr.mxu0 0.0
    %2666 = vmatpush2.msra.mxu0 0.0
    %2667 = vmatprep.subr.mxu0 0.0
    %2668 = vmatpush2.msra.mxu0 0.0
    %2669 = vmatprep.subr.mxu0 0.0
    %2670 = vmatpush2.msra.mxu0 0.0
    %2671 = vmatprep.subr.mxu0 0.0
    %2672 = vmatpush2.msra.mxu0 0.0
    %2673 = vmatprep.subr.mxu0 0.0
    %2674 = vmatpush2.msra.mxu0 0.0
    %2675 = vmatprep.subr.mxu0 0.0
    %2676 = vmatpush2.msra.mxu0 0.0
    %2677 = vmatprep.mubr.f32.mxu0 0.0
    %2678 = vmatmul.mubr.f32.gmra.mxu0 %v2611
    %v2679 = vpop.f32.mrf.mxu0
    %v2680 = vadd.f32 0.0, %v2679
    %v2681 = vpop.f32.mrf.mxu0
    %2682 = vdwg.mxu0
    %s2683 = scalar_lea.vmem %s35, 16
    %v2684 = vld [vmem:[%s2683] sm:$0xff]
    %v2685 = vld [vmem:[%s2683 + $0x8] sm:$0xff]
    %v2687 = vsel %vm622, %v2680, 0
    %2689 = vmatprep.subr.mxu0 0.0
    %2690 = vmatpush1.msra.mxu0 0.0
    %2691 = vmatprep.subr.mxu0 0.0
    %2692 = vmatpush1.msra.mxu0 0.0
    %2693 = vmatprep.subr.mxu0 0.0
    %2694 = vmatpush1.msra.mxu0 0.0
    %2695 = vmatprep.subr.mxu0 0.0
    %2696 = vmatpush1.msra.mxu0 0.0
    %2697 = vmatprep.subr.mxu0 0.0
    %2698 = vmatpush1.msra.mxu0 0.0
    %2699 = vmatprep.subr.mxu0 0.0
    %2700 = vmatpush1.msra.mxu0 0.0
    %2701 = vmatprep.subr.mxu0 0.0
    %2702 = vmatpush1.msra.mxu0 0.0
    %2703 = vmatprep.subr.mxu0 0.0
    %2704 = vmatpush1.msra.mxu0 0.0
    %2705 = vmatprep.subr.mxu0 0.0
    %2706 = vmatpush1.msra.mxu0 0.0
    %2707 = vmatprep.subr.mxu0 0.0
    %2708 = vmatpush1.msra.mxu0 0.0
    %2709 = vmatprep.subr.mxu0 0.0
    %2710 = vmatpush1.msra.mxu0 0.0
    %2711 = vmatprep.subr.mxu0 0.0
    %2712 = vmatpush1.msra.mxu0 0.0
    %2713 = vmatprep.subr.mxu0 0.0
    %2714 = vmatpush1.msra.mxu0 0.0
    %2715 = vmatprep.subr.mxu0 0.0
    %2716 = vmatpush1.msra.mxu0 0.0
    %2717 = vmatprep.subr.mxu0 0.0
    %2718 = vmatpush1.msra.mxu0 %v2685
    %2719 = vmatprep.subr.mxu0 0.0
    %2720 = vmatpush1.msra.mxu0 %v2684
    %2721 = vmatprep.subr.mxu0 0.0
    %2722 = vmatpush2.msra.mxu0 0.0
    %2723 = vmatprep.subr.mxu0 0.0
    %2724 = vmatpush2.msra.mxu0 0.0
    %2725 = vmatprep.subr.mxu0 0.0
    %2726 = vmatpush2.msra.mxu0 0.0
    %2727 = vmatprep.subr.mxu0 0.0
    %2728 = vmatpush2.msra.mxu0 0.0
    %2729 = vmatprep.subr.mxu0 0.0
    %2730 = vmatpush2.msra.mxu0 0.0
    %2731 = vmatprep.subr.mxu0 0.0
    %2732 = vmatpush2.msra.mxu0 0.0
    %2733 = vmatprep.subr.mxu0 0.0
    %2734 = vmatpush2.msra.mxu0 0.0
    %2735 = vmatprep.subr.mxu0 0.0
    %2736 = vmatpush2.msra.mxu0 0.0
    %2737 = vmatprep.subr.mxu0 0.0
    %2738 = vmatpush2.msra.mxu0 0.0
    %2739 = vmatprep.subr.mxu0 0.0
    %2740 = vmatpush2.msra.mxu0 0.0
    %2741 = vmatprep.subr.mxu0 0.0
    %2742 = vmatpush2.msra.mxu0 0.0
    %2743 = vmatprep.subr.mxu0 0.0
    %2744 = vmatpush2.msra.mxu0 0.0
    %2745 = vmatprep.subr.mxu0 0.0
    %2746 = vmatpush2.msra.mxu0 0.0
    %2747 = vmatprep.subr.mxu0 0.0
    %2748 = vmatpush2.msra.mxu0 0.0
    %2749 = vmatprep.subr.mxu0 0.0
    %2750 = vmatpush2.msra.mxu0 0.0
    %2751 = vmatprep.subr.mxu0 0.0
    %2752 = vmatpush2.msra.mxu0 0.0
    %2753 = vmatprep.mubr.f32.mxu0 0.0
    %2754 = vmatmul.mubr.f32.gmra.mxu0 %v2687
    %v2755 = vpop.f32.mrf.mxu0
    %v2756 = vadd.f32 0.0, %v2755
    %v2757 = vpop.f32.mrf.mxu0
    %2758 = vdwg.mxu0
    %v2760 = vsel %vm622, %v2514, 0
    %2762 = vmatprep.subr.mxu0 0.0
    %2763 = vmatpush1.msra.mxu0 0.0
    %2764 = vmatprep.subr.mxu0 0.0
    %2765 = vmatpush1.msra.mxu0 0.0
    %2766 = vmatprep.subr.mxu0 0.0
    %2767 = vmatpush1.msra.mxu0 0.0
    %2768 = vmatprep.subr.mxu0 0.0
    %2769 = vmatpush1.msra.mxu0 0.0
    %2770 = vmatprep.subr.mxu0 0.0
    %2771 = vmatpush1.msra.mxu0 0.0
    %2772 = vmatprep.subr.mxu0 0.0
    %2773 = vmatpush1.msra.mxu0 0.0
    %2774 = vmatprep.subr.mxu0 0.0
    %2775 = vmatpush1.msra.mxu0 0.0
    %2776 = vmatprep.subr.mxu0 0.0
    %2777 = vmatpush1.msra.mxu0 0.0
    %2778 = vmatprep.subr.mxu0 0.0
    %2779 = vmatpush1.msra.mxu0 0.0
    %2780 = vmatprep.subr.mxu0 0.0
    %2781 = vmatpush1.msra.mxu0 0.0
    %2782 = vmatprep.subr.mxu0 0.0
    %2783 = vmatpush1.msra.mxu0 0.0
    %2784 = vmatprep.subr.mxu0 0.0
    %2785 = vmatpush1.msra.mxu0 0.0
    %2786 = vmatprep.subr.mxu0 0.0
    %2787 = vmatpush1.msra.mxu0 0.0
    %2788 = vmatprep.subr.mxu0 0.0
    %2789 = vmatpush1.msra.mxu0 0.0
    %2790 = vmatprep.subr.mxu0 0.0
    %2791 = vmatpush1.msra.mxu0 %v2518
    %2792 = vmatprep.subr.mxu0 0.0
    %2793 = vmatpush1.msra.mxu0 %v2517
    %2794 = vmatprep.subr.mxu0 0.0
    %2795 = vmatpush2.msra.mxu0 0.0
    %2796 = vmatprep.subr.mxu0 0.0
    %2797 = vmatpush2.msra.mxu0 0.0
    %2798 = vmatprep.subr.mxu0 0.0
    %2799 = vmatpush2.msra.mxu0 0.0
    %2800 = vmatprep.subr.mxu0 0.0
    %2801 = vmatpush2.msra.mxu0 0.0
    %2802 = vmatprep.subr.mxu0 0.0
    %2803 = vmatpush2.msra.mxu0 0.0
    %2804 = vmatprep.subr.mxu0 0.0
    %2805 = vmatpush2.msra.mxu0 0.0
    %2806 = vmatprep.subr.mxu0 0.0
    %2807 = vmatpush2.msra.mxu0 0.0
    %2808 = vmatprep.subr.mxu0 0.0
    %2809 = vmatpush2.msra.mxu0 0.0
    %2810 = vmatprep.subr.mxu0 0.0
    %2811 = vmatpush2.msra.mxu0 0.0
    %2812 = vmatprep.subr.mxu0 0.0
    %2813 = vmatpush2.msra.mxu0 0.0
    %2814 = vmatprep.subr.mxu0 0.0
    %2815 = vmatpush2.msra.mxu0 0.0
    %2816 = vmatprep.subr.mxu0 0.0
    %2817 = vmatpush2.msra.mxu0 0.0
    %2818 = vmatprep.subr.mxu0 0.0
    %2819 = vmatpush2.msra.mxu0 0.0
    %2820 = vmatprep.subr.mxu0 0.0
    %2821 = vmatpush2.msra.mxu0 0.0
    %2822 = vmatprep.subr.mxu0 0.0
    %2823 = vmatpush2.msra.mxu0 0.0
    %2824 = vmatprep.subr.mxu0 0.0
    %2825 = vmatpush2.msra.mxu0 0.0
    %2826 = vmatprep.mubr.f32.mxu0 0.0
    %2827 = vmatmul.mubr.f32.gmra.mxu0 %v2760
    %v2828 = vpop.f32.mrf.mxu0
    %v2829 = vadd.f32 %v2756, %v2828
    %v2830 = vpop.f32.mrf.mxu0
    %2831 = vdwg.mxu0
    %v2833 = vsel %vm622, %v1952, 0
    %v2836 = vsel %vm622, %v2111, 0
    %2838 = vmatprep.subr.mxu0 0.0
    %2839 = vmatpush1.xpose.msra.mxu0 0.0
    %2840 = vmatprep.subr.mxu0 0.0
    %2841 = vmatpush1.xpose.msra.mxu0 0.0
    %2842 = vmatprep.subr.mxu0 0.0
    %2843 = vmatpush1.xpose.msra.mxu0 0.0
    %2844 = vmatprep.subr.mxu0 0.0
    %2845 = vmatpush1.xpose.msra.mxu0 0.0
    %2846 = vmatprep.subr.mxu0 0.0
    %2847 = vmatpush1.xpose.msra.mxu0 0.0
    %2848 = vmatprep.subr.mxu0 0.0
    %2849 = vmatpush1.xpose.msra.mxu0 0.0
    %2850 = vmatprep.subr.mxu0 0.0
    %2851 = vmatpush1.xpose.msra.mxu0 0.0
    %2852 = vmatprep.subr.mxu0 0.0
    %2853 = vmatpush1.xpose.msra.mxu0 0.0
    %2854 = vmatprep.subr.mxu0 0.0
    %2855 = vmatpush1.xpose.msra.mxu0 0.0
    %2856 = vmatprep.subr.mxu0 0.0
    %2857 = vmatpush1.xpose.msra.mxu0 0.0
    %2858 = vmatprep.subr.mxu0 0.0
    %2859 = vmatpush1.xpose.msra.mxu0 0.0
    %2860 = vmatprep.subr.mxu0 0.0
    %2861 = vmatpush1.xpose.msra.mxu0 0.0
    %2862 = vmatprep.subr.mxu0 0.0
    %2863 = vmatpush1.xpose.msra.mxu0 0.0
    %2864 = vmatprep.subr.mxu0 0.0
    %2865 = vmatpush1.xpose.msra.mxu0 0.0
    %2866 = vmatprep.subr.mxu0 0.0
    %2867 = vmatpush1.xpose.msra.mxu0 0.0
    %2868 = vmatprep.subr.mxu0 0.0
    %2869 = vmatpush1.xpose.msra.mxu0 %v2836
    %2870 = vmatprep.subr.mxu0 0.0
    %2871 = vmatpush2.xpose.msra.mxu0 0.0
    %2872 = vmatprep.subr.mxu0 0.0
    %2873 = vmatpush2.xpose.msra.mxu0 0.0
    %2874 = vmatprep.subr.mxu0 0.0
    %2875 = vmatpush2.xpose.msra.mxu0 0.0
    %2876 = vmatprep.subr.mxu0 0.0
    %2877 = vmatpush2.xpose.msra.mxu0 0.0
    %2878 = vmatprep.subr.mxu0 0.0
    %2879 = vmatpush2.xpose.msra.mxu0 0.0
    %2880 = vmatprep.subr.mxu0 0.0
    %2881 = vmatpush2.xpose.msra.mxu0 0.0
    %2882 = vmatprep.subr.mxu0 0.0
    %2883 = vmatpush2.xpose.msra.mxu0 0.0
    %2884 = vmatprep.subr.mxu0 0.0
    %2885 = vmatpush2.xpose.msra.mxu0 0.0
    %2886 = vmatprep.subr.mxu0 0.0
    %2887 = vmatpush2.xpose.msra.mxu0 0.0
    %2888 = vmatprep.subr.mxu0 0.0
    %2889 = vmatpush2.xpose.msra.mxu0 0.0
    %2890 = vmatprep.subr.mxu0 0.0
    %2891 = vmatpush2.xpose.msra.mxu0 0.0
    %2892 = vmatprep.subr.mxu0 0.0
    %2893 = vmatpush2.xpose.msra.mxu0 0.0
    %2894 = vmatprep.subr.mxu0 0.0
    %2895 = vmatpush2.xpose.msra.mxu0 0.0
    %2896 = vmatprep.subr.mxu0 0.0
    %2897 = vmatpush2.xpose.msra.mxu0 0.0
    %2898 = vmatprep.subr.mxu0 0.0
    %2899 = vmatpush2.xpose.msra.mxu0 0.0
    %2900 = vmatprep.subr.mxu0 0.0
    %2901 = vmatpush2.xpose.msra.mxu0 0.0
    %2902 = vmatprep.mubr.f32.mxu0 0.0
    %2903 = vmatmul.mubr.f32.gmra.mxu0 %v2833
    %v2904 = vpop.f32.mrf.mxu0
    %v2905 = vadd.f32 0.0, %v2904
    %v2906 = vpop.f32.mrf.mxu0
    %2907 = vdwg.mxu0
    %v2908 = vmul.f32 %v2905, 0.25
    %v2909 = vsel %vm1107, -1e+09, %v2908
    %v2910 = vsel %vm701, %v2909, -inf
    %2911 = vmax.xlane.f32.xlu0 %v2910
    %v2912 = vpop.xlane.xlu0 %2911
    %v2913 = vsub.f32 %v2909, %v2912
    %v2914 = vmul.f32 %v2913, 1.442695
    %v2915 = vpow.pop %v2914
    %v2916 = vsel %vm701, %v2915, 0.0
    %2917 = vadd.xlane.f32.xlu0 %v2916
    %v2918 = vpop.xlane.xlu0 %2917
    %v2919 = vrcp.pop %v2918
    %v2920 = vmul.f32 %v2915, %v2919
    %s2921 = scalar_lea.vmem %s59, 48
    %2922 = vst.msk [vmem:[%s2921] sm:$0xff] %vm701, %v2920
    %v2924 = vsel %vm701, %v2920, 0
    %2926 = vmatprep.subr.mxu0 0.0
    %2927 = vmatpush1.msra.mxu0 0.0
    %2928 = vmatprep.subr.mxu0 0.0
    %2929 = vmatpush1.msra.mxu0 0.0
    %2930 = vmatprep.subr.mxu0 0.0
    %2931 = vmatpush1.msra.mxu0 0.0
    %2932 = vmatprep.subr.mxu0 0.0
    %2933 = vmatpush1.msra.mxu0 0.0
    %2934 = vmatprep.subr.mxu0 0.0
    %2935 = vmatpush1.msra.mxu0 0.0
    %2936 = vmatprep.subr.mxu0 0.0
    %2937 = vmatpush1.msra.mxu0 0.0
    %2938 = vmatprep.subr.mxu0 0.0
    %2939 = vmatpush1.msra.mxu0 0.0
    %2940 = vmatprep.subr.mxu0 0.0
    %2941 = vmatpush1.msra.mxu0 0.0
    %2942 = vmatprep.subr.mxu0 0.0
    %2943 = vmatpush1.msra.mxu0 0.0
    %2944 = vmatprep.subr.mxu0 0.0
    %2945 = vmatpush1.msra.mxu0 0.0
    %2946 = vmatprep.subr.mxu0 0.0
    %2947 = vmatpush1.msra.mxu0 0.0
    %2948 = vmatprep.subr.mxu0 0.0
    %2949 = vmatpush1.msra.mxu0 0.0
    %2950 = vmatprep.subr.mxu0 0.0
    %2951 = vmatpush1.msra.mxu0 0.0
    %2952 = vmatprep.subr.mxu0 0.0
    %2953 = vmatpush1.msra.mxu0 0.0
    %2954 = vmatprep.subr.mxu0 0.0
    %2955 = vmatpush1.msra.mxu0 0.0
    %2956 = vmatprep.subr.mxu0 0.0
    %2957 = vmatpush1.msra.mxu0 %v2270
    %2958 = vmatprep.subr.mxu0 0.0
    %2959 = vmatpush2.msra.mxu0 0.0
    %2960 = vmatprep.subr.mxu0 0.0
    %2961 = vmatpush2.msra.mxu0 0.0
    %2962 = vmatprep.subr.mxu0 0.0
    %2963 = vmatpush2.msra.mxu0 0.0
    %2964 = vmatprep.subr.mxu0 0.0
    %2965 = vmatpush2.msra.mxu0 0.0
    %2966 = vmatprep.subr.mxu0 0.0
    %2967 = vmatpush2.msra.mxu0 0.0
    %2968 = vmatprep.subr.mxu0 0.0
    %2969 = vmatpush2.msra.mxu0 0.0
    %2970 = vmatprep.subr.mxu0 0.0
    %2971 = vmatpush2.msra.mxu0 0.0
    %2972 = vmatprep.subr.mxu0 0.0
    %2973 = vmatpush2.msra.mxu0 0.0
    %2974 = vmatprep.subr.mxu0 0.0
    %2975 = vmatpush2.msra.mxu0 0.0
    %2976 = vmatprep.subr.mxu0 0.0
    %2977 = vmatpush2.msra.mxu0 0.0
    %2978 = vmatprep.subr.mxu0 0.0
    %2979 = vmatpush2.msra.mxu0 0.0
    %2980 = vmatprep.subr.mxu0 0.0
    %2981 = vmatpush2.msra.mxu0 0.0
    %2982 = vmatprep.subr.mxu0 0.0
    %2983 = vmatpush2.msra.mxu0 0.0
    %2984 = vmatprep.subr.mxu0 0.0
    %2985 = vmatpush2.msra.mxu0 0.0
    %2986 = vmatprep.subr.mxu0 0.0
    %2987 = vmatpush2.msra.mxu0 0.0
    %2988 = vmatprep.subr.mxu0 0.0
    %2989 = vmatpush2.msra.mxu0 0.0
    %2990 = vmatprep.mubr.f32.mxu0 0.0
    %2991 = vmatmul.mubr.f32.gmra.mxu0 %v2924
    %v2992 = vpop.f32.mrf.mxu0
    %v2993 = vadd.f32 0.0, %v2992
    %v2994 = vpop.f32.mrf.mxu0
    %2995 = vdwg.mxu0
    %v2996 = vld [vmem:[%s35] sm:$0xff]
    %v2997 = vld [vmem:[%s35 + $0x8] sm:$0xff]
    %v2999 = vsel %vm622, %v2032, 0
    %v3002 = vsel %vm622, %v2191, 0
    %3004 = vmatprep.subr.mxu0 0.0
    %3005 = vmatpush1.xpose.msra.mxu0 0.0
    %3006 = vmatprep.subr.mxu0 0.0
    %3007 = vmatpush1.xpose.msra.mxu0 0.0
    %3008 = vmatprep.subr.mxu0 0.0
    %3009 = vmatpush1.xpose.msra.mxu0 0.0
    %3010 = vmatprep.subr.mxu0 0.0
    %3011 = vmatpush1.xpose.msra.mxu0 0.0
    %3012 = vmatprep.subr.mxu0 0.0
    %3013 = vmatpush1.xpose.msra.mxu0 0.0
    %3014 = vmatprep.subr.mxu0 0.0
    %3015 = vmatpush1.xpose.msra.mxu0 0.0
    %3016 = vmatprep.subr.mxu0 0.0
    %3017 = vmatpush1.xpose.msra.mxu0 0.0
    %3018 = vmatprep.subr.mxu0 0.0
    %3019 = vmatpush1.xpose.msra.mxu0 0.0
    %3020 = vmatprep.subr.mxu0 0.0
    %3021 = vmatpush1.xpose.msra.mxu0 0.0
    %3022 = vmatprep.subr.mxu0 0.0
    %3023 = vmatpush1.xpose.msra.mxu0 0.0
    %3024 = vmatprep.subr.mxu0 0.0
    %3025 = vmatpush1.xpose.msra.mxu0 0.0
    %3026 = vmatprep.subr.mxu0 0.0
    %3027 = vmatpush1.xpose.msra.mxu0 0.0
    %3028 = vmatprep.subr.mxu0 0.0
    %3029 = vmatpush1.xpose.msra.mxu0 0.0
    %3030 = vmatprep.subr.mxu0 0.0
    %3031 = vmatpush1.xpose.msra.mxu0 0.0
    %3032 = vmatprep.subr.mxu0 0.0
    %3033 = vmatpush1.xpose.msra.mxu0 0.0
    %3034 = vmatprep.subr.mxu0 0.0
    %3035 = vmatpush1.xpose.msra.mxu0 %v3002
    %3036 = vmatprep.subr.mxu0 0.0
    %3037 = vmatpush2.xpose.msra.mxu0 0.0
    %3038 = vmatprep.subr.mxu0 0.0
    %3039 = vmatpush2.xpose.msra.mxu0 0.0
    %3040 = vmatprep.subr.mxu0 0.0
    %3041 = vmatpush2.xpose.msra.mxu0 0.0
    %3042 = vmatprep.subr.mxu0 0.0
    %3043 = vmatpush2.xpose.msra.mxu0 0.0
    %3044 = vmatprep.subr.mxu0 0.0
    %3045 = vmatpush2.xpose.msra.mxu0 0.0
    %3046 = vmatprep.subr.mxu0 0.0
    %3047 = vmatpush2.xpose.msra.mxu0 0.0
    %3048 = vmatprep.subr.mxu0 0.0
    %3049 = vmatpush2.xpose.msra.mxu0 0.0
    %3050 = vmatprep.subr.mxu0 0.0
    %3051 = vmatpush2.xpose.msra.mxu0 0.0
    %3052 = vmatprep.subr.mxu0 0.0
    %3053 = vmatpush2.xpose.msra.mxu0 0.0
    %3054 = vmatprep.subr.mxu0 0.0
    %3055 = vmatpush2.xpose.msra.mxu0 0.0
    %3056 = vmatprep.subr.mxu0 0.0
    %3057 = vmatpush2.xpose.msra.mxu0 0.0
    %3058 = vmatprep.subr.mxu0 0.0
    %3059 = vmatpush2.xpose.msra.mxu0 0.0
    %3060 = vmatprep.subr.mxu0 0.0
    %3061 = vmatpush2.xpose.msra.mxu0 0.0
    %3062 = vmatprep.subr.mxu0 0.0
    %3063 = vmatpush2.xpose.msra.mxu0 0.0
    %3064 = vmatprep.subr.mxu0 0.0
    %3065 = vmatpush2.xpose.msra.mxu0 0.0
    %3066 = vmatprep.subr.mxu0 0.0
    %3067 = vmatpush2.xpose.msra.mxu0 0.0
    %3068 = vmatprep.mubr.f32.mxu0 0.0
    %3069 = vmatmul.mubr.f32.gmra.mxu0 %v2999
    %v3070 = vpop.f32.mrf.mxu0
    %v3071 = vadd.f32 0.0, %v3070
    %v3072 = vpop.f32.mrf.mxu0
    %3073 = vdwg.mxu0
    %v3074 = vmul.f32 %v3071, 0.25
    %v3075 = vsel %vm1107, -1e+09, %v3074
    %v3076 = vsel %vm701, %v3075, -inf
    %3077 = vmax.xlane.f32.xlu0 %v3076
    %v3078 = vpop.xlane.xlu0 %3077
    %v3079 = vsub.f32 %v3075, %v3078
    %v3080 = vmul.f32 %v3079, 1.442695
    %v3081 = vpow.pop %v3080
    %v3082 = vsel %vm701, %v3081, 0.0
    %3083 = vadd.xlane.f32.xlu0 %v3082
    %v3084 = vpop.xlane.xlu0 %3083
    %v3085 = vrcp.pop %v3084
    %v3086 = vmul.f32 %v3081, %v3085
    %s3087 = scalar_lea.vmem %s59, 56
    %3088 = vst.msk [vmem:[%s3087] sm:$0xff] %vm701, %v3086
    %v3090 = vsel %vm701, %v3086, 0
    %3092 = vmatprep.subr.mxu0 0.0
    %3093 = vmatpush1.msra.mxu0 0.0
    %3094 = vmatprep.subr.mxu0 0.0
    %3095 = vmatpush1.msra.mxu0 0.0
    %3096 = vmatprep.subr.mxu0 0.0
    %3097 = vmatpush1.msra.mxu0 0.0
    %3098 = vmatprep.subr.mxu0 0.0
    %3099 = vmatpush1.msra.mxu0 0.0
    %3100 = vmatprep.subr.mxu0 0.0
    %3101 = vmatpush1.msra.mxu0 0.0
    %3102 = vmatprep.subr.mxu0 0.0
    %3103 = vmatpush1.msra.mxu0 0.0
    %3104 = vmatprep.subr.mxu0 0.0
    %3105 = vmatpush1.msra.mxu0 0.0
    %3106 = vmatprep.subr.mxu0 0.0
    %3107 = vmatpush1.msra.mxu0 0.0
    %3108 = vmatprep.subr.mxu0 0.0
    %3109 = vmatpush1.msra.mxu0 0.0
    %3110 = vmatprep.subr.mxu0 0.0
    %3111 = vmatpush1.msra.mxu0 0.0
    %3112 = vmatprep.subr.mxu0 0.0
    %3113 = vmatpush1.msra.mxu0 0.0
    %3114 = vmatprep.subr.mxu0 0.0
    %3115 = vmatpush1.msra.mxu0 0.0
    %3116 = vmatprep.subr.mxu0 0.0
    %3117 = vmatpush1.msra.mxu0 0.0
    %3118 = vmatprep.subr.mxu0 0.0
    %3119 = vmatpush1.msra.mxu0 0.0
    %3120 = vmatprep.subr.mxu0 0.0
    %3121 = vmatpush1.msra.mxu0 0.0
    %3122 = vmatprep.subr.mxu0 0.0
    %3123 = vmatpush1.msra.mxu0 %v2350
    %3124 = vmatprep.subr.mxu0 0.0
    %3125 = vmatpush2.msra.mxu0 0.0
    %3126 = vmatprep.subr.mxu0 0.0
    %3127 = vmatpush2.msra.mxu0 0.0
    %3128 = vmatprep.subr.mxu0 0.0
    %3129 = vmatpush2.msra.mxu0 0.0
    %3130 = vmatprep.subr.mxu0 0.0
    %3131 = vmatpush2.msra.mxu0 0.0
    %3132 = vmatprep.subr.mxu0 0.0
    %3133 = vmatpush2.msra.mxu0 0.0
    %3134 = vmatprep.subr.mxu0 0.0
    %3135 = vmatpush2.msra.mxu0 0.0
    %3136 = vmatprep.subr.mxu0 0.0
    %3137 = vmatpush2.msra.mxu0 0.0
    %3138 = vmatprep.subr.mxu0 0.0
    %3139 = vmatpush2.msra.mxu0 0.0
    %3140 = vmatprep.subr.mxu0 0.0
    %3141 = vmatpush2.msra.mxu0 0.0
    %3142 = vmatprep.subr.mxu0 0.0
    %3143 = vmatpush2.msra.mxu0 0.0
    %3144 = vmatprep.subr.mxu0 0.0
    %3145 = vmatpush2.msra.mxu0 0.0
    %3146 = vmatprep.subr.mxu0 0.0
    %3147 = vmatpush2.msra.mxu0 0.0
    %3148 = vmatprep.subr.mxu0 0.0
    %3149 = vmatpush2.msra.mxu0 0.0
    %3150 = vmatprep.subr.mxu0 0.0
    %3151 = vmatpush2.msra.mxu0 0.0
    %3152 = vmatprep.subr.mxu0 0.0
    %3153 = vmatpush2.msra.mxu0 0.0
    %3154 = vmatprep.subr.mxu0 0.0
    %3155 = vmatpush2.msra.mxu0 0.0
    %3156 = vmatprep.mubr.f32.mxu0 0.0
    %3157 = vmatmul.mubr.f32.gmra.mxu0 %v3090
    %v3158 = vpop.f32.mrf.mxu0
    %v3159 = vadd.f32 0.0, %v3158
    %v3160 = vpop.f32.mrf.mxu0
    %3161 = vdwg.mxu0
    %v3162 = vld [vmem:[%s2683] sm:$0xff]
    %v3163 = vld [vmem:[%s2683 + $0x8] sm:$0xff]
    %v3165 = vsel %vm622, %v3159, 0
    %3167 = vmatprep.subr.mxu0 0.0
    %3168 = vmatpush1.msra.mxu0 0.0
    %3169 = vmatprep.subr.mxu0 0.0
    %3170 = vmatpush1.msra.mxu0 0.0
    %3171 = vmatprep.subr.mxu0 0.0
    %3172 = vmatpush1.msra.mxu0 0.0
    %3173 = vmatprep.subr.mxu0 0.0
    %3174 = vmatpush1.msra.mxu0 0.0
    %3175 = vmatprep.subr.mxu0 0.0
    %3176 = vmatpush1.msra.mxu0 0.0
    %3177 = vmatprep.subr.mxu0 0.0
    %3178 = vmatpush1.msra.mxu0 0.0
    %3179 = vmatprep.subr.mxu0 0.0
    %3180 = vmatpush1.msra.mxu0 0.0
    %3181 = vmatprep.subr.mxu0 0.0
    %3182 = vmatpush1.msra.mxu0 0.0
    %3183 = vmatprep.subr.mxu0 0.0
    %3184 = vmatpush1.msra.mxu0 0.0
    %3185 = vmatprep.subr.mxu0 0.0
    %3186 = vmatpush1.msra.mxu0 0.0
    %3187 = vmatprep.subr.mxu0 0.0
    %3188 = vmatpush1.msra.mxu0 0.0
    %3189 = vmatprep.subr.mxu0 0.0
    %3190 = vmatpush1.msra.mxu0 0.0
    %3191 = vmatprep.subr.mxu0 0.0
    %3192 = vmatpush1.msra.mxu0 0.0
    %3193 = vmatprep.subr.mxu0 0.0
    %3194 = vmatpush1.msra.mxu0 0.0
    %3195 = vmatprep.subr.mxu0 0.0
    %3196 = vmatpush1.msra.mxu0 %v3163
    %3197 = vmatprep.subr.mxu0 0.0
    %3198 = vmatpush1.msra.mxu0 %v3162
    %3199 = vmatprep.subr.mxu0 0.0
    %3200 = vmatpush2.msra.mxu0 0.0
    %3201 = vmatprep.subr.mxu0 0.0
    %3202 = vmatpush2.msra.mxu0 0.0
    %3203 = vmatprep.subr.mxu0 0.0
    %3204 = vmatpush2.msra.mxu0 0.0
    %3205 = vmatprep.subr.mxu0 0.0
    %3206 = vmatpush2.msra.mxu0 0.0
    %3207 = vmatprep.subr.mxu0 0.0
    %3208 = vmatpush2.msra.mxu0 0.0
    %3209 = vmatprep.subr.mxu0 0.0
    %3210 = vmatpush2.msra.mxu0 0.0
    %3211 = vmatprep.subr.mxu0 0.0
    %3212 = vmatpush2.msra.mxu0 0.0
    %3213 = vmatprep.subr.mxu0 0.0
    %3214 = vmatpush2.msra.mxu0 0.0
    %3215 = vmatprep.subr.mxu0 0.0
    %3216 = vmatpush2.msra.mxu0 0.0
    %3217 = vmatprep.subr.mxu0 0.0
    %3218 = vmatpush2.msra.mxu0 0.0
    %3219 = vmatprep.subr.mxu0 0.0
    %3220 = vmatpush2.msra.mxu0 0.0
    %3221 = vmatprep.subr.mxu0 0.0
    %3222 = vmatpush2.msra.mxu0 0.0
    %3223 = vmatprep.subr.mxu0 0.0
    %3224 = vmatpush2.msra.mxu0 0.0
    %3225 = vmatprep.subr.mxu0 0.0
    %3226 = vmatpush2.msra.mxu0 0.0
    %3227 = vmatprep.subr.mxu0 0.0
    %3228 = vmatpush2.msra.mxu0 0.0
    %3229 = vmatprep.subr.mxu0 0.0
    %3230 = vmatpush2.msra.mxu0 0.0
    %3231 = vmatprep.mubr.f32.mxu0 0.0
    %3232 = vmatmul.mubr.f32.gmra.mxu0 %v3165
    %v3233 = vpop.f32.mrf.mxu0
    %v3234 = vadd.f32 0.0, %v3233
    %v3235 = vpop.f32.mrf.mxu0
    %3236 = vdwg.mxu0
    %v3238 = vsel %vm622, %v2993, 0
    %3240 = vmatprep.subr.mxu0 0.0
    %3241 = vmatpush1.msra.mxu0 0.0
    %3242 = vmatprep.subr.mxu0 0.0
    %3243 = vmatpush1.msra.mxu0 0.0
    %3244 = vmatprep.subr.mxu0 0.0
    %3245 = vmatpush1.msra.mxu0 0.0
    %3246 = vmatprep.subr.mxu0 0.0
    %3247 = vmatpush1.msra.mxu0 0.0
    %3248 = vmatprep.subr.mxu0 0.0
    %3249 = vmatpush1.msra.mxu0 0.0
    %3250 = vmatprep.subr.mxu0 0.0
    %3251 = vmatpush1.msra.mxu0 0.0
    %3252 = vmatprep.subr.mxu0 0.0
    %3253 = vmatpush1.msra.mxu0 0.0
    %3254 = vmatprep.subr.mxu0 0.0
    %3255 = vmatpush1.msra.mxu0 0.0
    %3256 = vmatprep.subr.mxu0 0.0
    %3257 = vmatpush1.msra.mxu0 0.0
    %3258 = vmatprep.subr.mxu0 0.0
    %3259 = vmatpush1.msra.mxu0 0.0
    %3260 = vmatprep.subr.mxu0 0.0
    %3261 = vmatpush1.msra.mxu0 0.0
    %3262 = vmatprep.subr.mxu0 0.0
    %3263 = vmatpush1.msra.mxu0 0.0
    %3264 = vmatprep.subr.mxu0 0.0
    %3265 = vmatpush1.msra.mxu0 0.0
    %3266 = vmatprep.subr.mxu0 0.0
    %3267 = vmatpush1.msra.mxu0 0.0
    %3268 = vmatprep.subr.mxu0 0.0
    %3269 = vmatpush1.msra.mxu0 %v2997
    %3270 = vmatprep.subr.mxu0 0.0
    %3271 = vmatpush1.msra.mxu0 %v2996
    %3272 = vmatprep.subr.mxu0 0.0
    %3273 = vmatpush2.msra.mxu0 0.0
    %3274 = vmatprep.subr.mxu0 0.0
    %3275 = vmatpush2.msra.mxu0 0.0
    %3276 = vmatprep.subr.mxu0 0.0
    %3277 = vmatpush2.msra.mxu0 0.0
    %3278 = vmatprep.subr.mxu0 0.0
    %3279 = vmatpush2.msra.mxu0 0.0
    %3280 = vmatprep.subr.mxu0 0.0
    %3281 = vmatpush2.msra.mxu0 0.0
    %3282 = vmatprep.subr.mxu0 0.0
    %3283 = vmatpush2.msra.mxu0 0.0
    %3284 = vmatprep.subr.mxu0 0.0
    %3285 = vmatpush2.msra.mxu0 0.0
    %3286 = vmatprep.subr.mxu0 0.0
    %3287 = vmatpush2.msra.mxu0 0.0
    %3288 = vmatprep.subr.mxu0 0.0
    %3289 = vmatpush2.msra.mxu0 0.0
    %3290 = vmatprep.subr.mxu0 0.0
    %3291 = vmatpush2.msra.mxu0 0.0
    %3292 = vmatprep.subr.mxu0 0.0
    %3293 = vmatpush2.msra.mxu0 0.0
    %3294 = vmatprep.subr.mxu0 0.0
    %3295 = vmatpush2.msra.mxu0 0.0
    %3296 = vmatprep.subr.mxu0 0.0
    %3297 = vmatpush2.msra.mxu0 0.0
    %3298 = vmatprep.subr.mxu0 0.0
    %3299 = vmatpush2.msra.mxu0 0.0
    %3300 = vmatprep.subr.mxu0 0.0
    %3301 = vmatpush2.msra.mxu0 0.0
    %3302 = vmatprep.subr.mxu0 0.0
    %3303 = vmatpush2.msra.mxu0 0.0
    %3304 = vmatprep.mubr.f32.mxu0 0.0
    %3305 = vmatmul.mubr.f32.gmra.mxu0 %v3238
    %v3306 = vpop.f32.mrf.mxu0
    %v3307 = vadd.f32 %v3234, %v3306
    %v3308 = vpop.f32.mrf.mxu0
    %3309 = vdwg.mxu0
    %v3310 = vadd.f32 %v2829, %v1868
    %v3311 = vadd.f32 %v3307, %v1869
    %v3312 = vld [vmem:[%s37] sm:$0x1]
    %v3313 = vld [vmem:[%s39] sm:$0x1]
    %v3314 = vsel %vm134, %v3310, 0.0
    %3315 = vadd.xlane.f32.xlu0 %v3314
    %v3316 = vpop.xlane.xlu0 %3315
    %v3317 = vsel %vm134, %v3311, 0.0
    %3318 = vadd.xlane.f32.xlu0 %v3317
    %v3319 = vpop.xlane.xlu0 %3318
    %v3320 = vmul.f32 %v3316, %v1596
    %v3321 = vmul.f32 %v3319, %v1596
    %v3322 = vsub.f32 %v3310, %v3320
    %v3323 = vsub.f32 %v3311, %v3321
    %v3324 = vmul.f32 %v3322, %v3322
    %v3325 = vmul.f32 %v3323, %v3323
    %v3326 = vsel %vm134, %v3324, 0.0
    %3327 = vadd.xlane.f32.xlu0 %v3326
    %v3328 = vpop.xlane.xlu0 %3327
    %v3329 = vsel %vm134, %v3325, 0.0
    %3330 = vadd.xlane.f32.xlu0 %v3329
    %v3331 = vpop.xlane.xlu0 %3330
    %v3332 = vmul.f32 %v3328, %v1596
    %v3333 = vmul.f32 %v3331, %v1596
    %v3334 = vadd.f32 %v3332, 1e-05
    %v3335 = vadd.f32 %v3333, 1e-05
    %v3336 = vrsqrt.pop %v3334
    %v3337 = vrsqrt.pop %v3335
    %v3338 = vmul.f32 %v3322, %v3336
    %v3339 = vmul.f32 %v3323, %v3337
    %v3341 = vlaneseq
    %v3342 = vshrl.u32 %v3341, 7
    %v3343 = vsub.s32 0, %v3342
    %v3344 = vrot.slane %v3312, %v3343
    %v3346 = vmul.f32 %v3338, %v3344
    %v3347 = vmul.f32 %v3339, %v3344
    %v3349 = vlaneseq
    %v3350 = vshrl.u32 %v3349, 7
    %v3351 = vsub.s32 0, %v3350
    %v3352 = vrot.slane %v3313, %v3351
    %v3354 = vadd.f32 %v3346, %v3352
    %v3355 = vadd.f32 %v3347, %v3352
    %v3356 = vld [vmem:[%s41] sm:$0xff]
    %v3357 = vld [vmem:[%s41 + $0x8] sm:$0xff]
    %v3358 = vld [vmem:[%s41 + $0x10] sm:$0xff]
    %v3359 = vld [vmem:[%s41 + $0x18] sm:$0xff]
    %v3360 = vld [vmem:[%s43] sm:$0x1]
    %v3362 = vlaneseq
    %v3363 = vshrl.u32 %v3362, 7
    %v3364 = vsub.s32 0, %v3363
    %v3365 = vrot.slane %v3360, %v3364
    %v3368 = vsel %vm134, %v3354, 0
    %v3371 = vsel %vm134, %v3355, 0
    %3373 = vmatprep.subr.mxu0 0.0
    %3374 = vmatpush1.msra.mxu0 0.0
    %3375 = vmatprep.subr.mxu0 0.0
    %3376 = vmatpush1.msra.mxu0 0.0
    %3377 = vmatprep.subr.mxu0 0.0
    %3378 = vmatpush1.msra.mxu0 0.0
    %3379 = vmatprep.subr.mxu0 0.0
    %3380 = vmatpush1.msra.mxu0 0.0
    %3381 = vmatprep.subr.mxu0 0.0
    %3382 = vmatpush1.msra.mxu0 0.0
    %3383 = vmatprep.subr.mxu0 0.0
    %3384 = vmatpush1.msra.mxu0 0.0
    %3385 = vmatprep.subr.mxu0 0.0
    %3386 = vmatpush1.msra.mxu0 0.0
    %3387 = vmatprep.subr.mxu0 0.0
    %3388 = vmatpush1.msra.mxu0 0.0
    %3389 = vmatprep.subr.mxu0 0.0
    %3390 = vmatpush1.msra.mxu0 0.0
    %3391 = vmatprep.subr.mxu0 0.0
    %3392 = vmatpush1.msra.mxu0 0.0
    %3393 = vmatprep.subr.mxu0 0.0
    %3394 = vmatpush1.msra.mxu0 0.0
    %3395 = vmatprep.subr.mxu0 0.0
    %3396 = vmatpush1.msra.mxu0 0.0
    %3397 = vmatprep.subr.mxu0 0.0
    %3398 = vmatpush1.msra.mxu0 %v3359
    %3399 = vmatprep.subr.mxu0 0.0
    %3400 = vmatpush1.msra.mxu0 %v3358
    %3401 = vmatprep.subr.mxu0 0.0
    %3402 = vmatpush1.msra.mxu0 %v3357
    %3403 = vmatprep.subr.mxu0 0.0
    %3404 = vmatpush1.msra.mxu0 %v3356
    %3405 = vmatprep.subr.mxu0 0.0
    %3406 = vmatpush2.msra.mxu0 0.0
    %3407 = vmatprep.subr.mxu0 0.0
    %3408 = vmatpush2.msra.mxu0 0.0
    %3409 = vmatprep.subr.mxu0 0.0
    %3410 = vmatpush2.msra.mxu0 0.0
    %3411 = vmatprep.subr.mxu0 0.0
    %3412 = vmatpush2.msra.mxu0 0.0
    %3413 = vmatprep.subr.mxu0 0.0
    %3414 = vmatpush2.msra.mxu0 0.0
    %3415 = vmatprep.subr.mxu0 0.0
    %3416 = vmatpush2.msra.mxu0 0.0
    %3417 = vmatprep.subr.mxu0 0.0
    %3418 = vmatpush2.msra.mxu0 0.0
    %3419 = vmatprep.subr.mxu0 0.0
    %3420 = vmatpush2.msra.mxu0 0.0
    %3421 = vmatprep.subr.mxu0 0.0
    %3422 = vmatpush2.msra.mxu0 0.0
    %3423 = vmatprep.subr.mxu0 0.0
    %3424 = vmatpush2.msra.mxu0 0.0
    %3425 = vmatprep.subr.mxu0 0.0
    %3426 = vmatpush2.msra.mxu0 0.0
    %3427 = vmatprep.subr.mxu0 0.0
    %3428 = vmatpush2.msra.mxu0 0.0
    %3429 = vmatprep.subr.mxu0 0.0
    %3430 = vmatpush2.msra.mxu0 0.0
    %3431 = vmatprep.subr.mxu0 0.0
    %3432 = vmatpush2.msra.mxu0 0.0
    %3433 = vmatprep.subr.mxu0 0.0
    %3434 = vmatpush2.msra.mxu0 0.0
    %3435 = vmatprep.subr.mxu0 0.0
    %3436 = vmatpush2.msra.mxu0 0.0
    %3437 = vmatprep.mubr.f32.mxu0 0.0
    %3438 = vmatmul.mubr.f32.gmra.mxu0 %v3368
    %v3439 = vpop.f32.mrf.mxu0
    %v3440 = vadd.f32 %v3365, %v3439
    %v3441 = vpop.f32.mrf.mxu0
    %3442 = vmatprep.mubr.f32.mxu0 0.0
    %3443 = vmatmul.mubr.f32.gmra.mxu0 %v3371
    %v3444 = vpop.f32.mrf.mxu0
    %v3445 = vadd.f32 %v3365, %v3444
    %v3446 = vpop.f32.mrf.mxu0
    %3447 = vdwg.mxu0
    %v3448 = vmax.f32 %v3440, 0.0
    %v3449 = vmax.f32 %v3445, 0.0
    %v3450 = vld [vmem:[%s45] sm:$0xff]
    %v3451 = vld [vmem:[%s45 + $0x8] sm:$0xff]
    %v3452 = vld [vmem:[%s45 + $0x10] sm:$0xff]
    %v3453 = vld [vmem:[%s45 + $0x18] sm:$0xff]
    %v3454 = vld [vmem:[%s45 + $0x20] sm:$0xff]
    %v3455 = vld [vmem:[%s45 + $0x28] sm:$0xff]
    %v3456 = vld [vmem:[%s45 + $0x30] sm:$0xff]
    %v3457 = vld [vmem:[%s45 + $0x38] sm:$0xff]
    %v3458 = vld [vmem:[%s47] sm:$0x1]
    %v3460 = vlaneseq
    %v3461 = vshrl.u32 %v3460, 7
    %v3462 = vsub.s32 0, %v3461
    %v3463 = vrot.slane %v3458, %v3462
    %v3466 = vsel %vm1742, %v3448, 0
    %v3469 = vsel %vm1742, %v3449, 0
    %3471 = vmatprep.subr.mxu0 0.0
    %3472 = vmatpush1.msra.mxu0 0.0
    %3473 = vmatprep.subr.mxu0 0.0
    %3474 = vmatpush1.msra.mxu0 0.0
    %3475 = vmatprep.subr.mxu0 0.0
    %3476 = vmatpush1.msra.mxu0 0.0
    %3477 = vmatprep.subr.mxu0 0.0
    %3478 = vmatpush1.msra.mxu0 0.0
    %3479 = vmatprep.subr.mxu0 0.0
    %3480 = vmatpush1.msra.mxu0 0.0
    %3481 = vmatprep.subr.mxu0 0.0
    %3482 = vmatpush1.msra.mxu0 0.0
    %3483 = vmatprep.subr.mxu0 0.0
    %3484 = vmatpush1.msra.mxu0 0.0
    %3485 = vmatprep.subr.mxu0 0.0
    %3486 = vmatpush1.msra.mxu0 0.0
    %3487 = vmatprep.subr.mxu0 0.0
    %3488 = vmatpush1.msra.mxu0 %v3457
    %3489 = vmatprep.subr.mxu0 0.0
    %3490 = vmatpush1.msra.mxu0 %v3456
    %3491 = vmatprep.subr.mxu0 0.0
    %3492 = vmatpush1.msra.mxu0 %v3455
    %3493 = vmatprep.subr.mxu0 0.0
    %3494 = vmatpush1.msra.mxu0 %v3454
    %3495 = vmatprep.subr.mxu0 0.0
    %3496 = vmatpush1.msra.mxu0 %v3453
    %3497 = vmatprep.subr.mxu0 0.0
    %3498 = vmatpush1.msra.mxu0 %v3452
    %3499 = vmatprep.subr.mxu0 0.0
    %3500 = vmatpush1.msra.mxu0 %v3451
    %3501 = vmatprep.subr.mxu0 0.0
    %3502 = vmatpush1.msra.mxu0 %v3450
    %3503 = vmatprep.subr.mxu0 0.0
    %3504 = vmatpush2.msra.mxu0 0.0
    %3505 = vmatprep.subr.mxu0 0.0
    %3506 = vmatpush2.msra.mxu0 0.0
    %3507 = vmatprep.subr.mxu0 0.0
    %3508 = vmatpush2.msra.mxu0 0.0
    %3509 = vmatprep.subr.mxu0 0.0
    %3510 = vmatpush2.msra.mxu0 0.0
    %3511 = vmatprep.subr.mxu0 0.0
    %3512 = vmatpush2.msra.mxu0 0.0
    %3513 = vmatprep.subr.mxu0 0.0
    %3514 = vmatpush2.msra.mxu0 0.0
    %3515 = vmatprep.subr.mxu0 0.0
    %3516 = vmatpush2.msra.mxu0 0.0
    %3517 = vmatprep.subr.mxu0 0.0
    %3518 = vmatpush2.msra.mxu0 0.0
    %3519 = vmatprep.subr.mxu0 0.0
    %3520 = vmatpush2.msra.mxu0 0.0
    %3521 = vmatprep.subr.mxu0 0.0
    %3522 = vmatpush2.msra.mxu0 0.0
    %3523 = vmatprep.subr.mxu0 0.0
    %3524 = vmatpush2.msra.mxu0 0.0
    %3525 = vmatprep.subr.mxu0 0.0
    %3526 = vmatpush2.msra.mxu0 0.0
    %3527 = vmatprep.subr.mxu0 0.0
    %3528 = vmatpush2.msra.mxu0 0.0
    %3529 = vmatprep.subr.mxu0 0.0
    %3530 = vmatpush2.msra.mxu0 0.0
    %3531 = vmatprep.subr.mxu0 0.0
    %3532 = vmatpush2.msra.mxu0 0.0
    %3533 = vmatprep.subr.mxu0 0.0
    %3534 = vmatpush2.msra.mxu0 0.0
    %3535 = vmatprep.mubr.f32.mxu0 0.0
    %3536 = vmatmul.mubr.f32.gmra.mxu0 %v3466
    %v3537 = vpop.f32.mrf.mxu0
    %v3538 = vadd.f32 %v3463, %v3537
    %v3539 = vpop.f32.mrf.mxu0
    %3540 = vmatprep.mubr.f32.mxu0 0.0
    %3541 = vmatmul.mubr.f32.gmra.mxu0 %v3469
    %v3542 = vpop.f32.mrf.mxu0
    %v3543 = vadd.f32 %v3463, %v3542
    %v3544 = vpop.f32.mrf.mxu0
    %3545 = vdwg.mxu0
    %v3546 = vadd.f32 %v3538, %v3354
    %v3547 = vadd.f32 %v3543, %v3355
    %v3548 = vld [vmem:[%s49] sm:$0x1]
    %v3549 = vld [vmem:[%s51] sm:$0x1]
    %v3550 = vsel %vm134, %v3546, 0.0
    %3551 = vadd.xlane.f32.xlu0 %v3550
    %v3552 = vpop.xlane.xlu0 %3551
    %v3553 = vsel %vm134, %v3547, 0.0
    %3554 = vadd.xlane.f32.xlu0 %v3553
    %v3555 = vpop.xlane.xlu0 %3554
    %v3556 = vmul.f32 %v3552, %v1596
    %v3557 = vmul.f32 %v3555, %v1596
    %v3558 = vsub.f32 %v3546, %v3556
    %v3559 = vsub.f32 %v3547, %v3557
    %v3560 = vmul.f32 %v3558, %v3558
    %v3561 = vmul.f32 %v3559, %v3559
    %v3562 = vsel %vm134, %v3560, 0.0
    %3563 = vadd.xlane.f32.xlu0 %v3562
    %v3564 = vpop.xlane.xlu0 %3563
    %v3565 = vsel %vm134, %v3561, 0.0
    %3566 = vadd.xlane.f32.xlu0 %v3565
    %v3567 = vpop.xlane.xlu0 %3566
    %v3568 = vmul.f32 %v3564, %v1596
    %v3569 = vmul.f32 %v3567, %v1596
    %v3570 = vadd.f32 %v3568, 1e-05
    %v3571 = vadd.f32 %v3569, 1e-05
    %v3572 = vrsqrt.pop %v3570
    %v3573 = vrsqrt.pop %v3571
    %v3574 = vmul.f32 %v3558, %v3572
    %v3575 = vmul.f32 %v3559, %v3573
    %v3577 = vlaneseq
    %v3578 = vshrl.u32 %v3577, 7
    %v3579 = vsub.s32 0, %v3578
    %v3580 = vrot.slane %v3548, %v3579
    %v3582 = vmul.f32 %v3574, %v3580
    %v3583 = vmul.f32 %v3575, %v3580
    %v3585 = vlaneseq
    %v3586 = vshrl.u32 %v3585, 7
    %v3587 = vsub.s32 0, %v3586
    %v3588 = vrot.slane %v3549, %v3587
    %v3590 = vadd.f32 %v3582, %v3588
    %v3591 = vadd.f32 %v3583, %v3588
    %v3592 = vld [vmem:[%s53] sm:$0xff]
    %v3593 = vld [vmem:[%s53 + $0x8] sm:$0xff]
    %v3594 = vld [vmem:[%s53 + $0x10] sm:$0xff]
    %v3595 = vld [vmem:[%s53 + $0x18] sm:$0xff]
    %v3596 = vld [vmem:[%s55] sm:$0x1]
    %v3598 = vlaneseq
    %v3599 = vshrl.u32 %v3598, 7
    %v3600 = vsub.s32 0, %v3599
    %v3601 = vrot.slane %v3596, %v3600
    %v3604 = vsel %vm134, %v3590, 0
    %v3607 = vsel %vm134, %v3591, 0
    %3609 = vmatprep.subr.mxu0 0.0
    %3610 = vmatpush1.msra.mxu0 0.0
    %3611 = vmatprep.subr.mxu0 0.0
    %3612 = vmatpush1.msra.mxu0 0.0
    %3613 = vmatprep.subr.mxu0 0.0
    %3614 = vmatpush1.msra.mxu0 0.0
    %3615 = vmatprep.subr.mxu0 0.0
    %3616 = vmatpush1.msra.mxu0 0.0
    %3617 = vmatprep.subr.mxu0 0.0
    %3618 = vmatpush1.msra.mxu0 0.0
    %3619 = vmatprep.subr.mxu0 0.0
    %3620 = vmatpush1.msra.mxu0 0.0
    %3621 = vmatprep.subr.mxu0 0.0
    %3622 = vmatpush1.msra.mxu0 0.0
    %3623 = vmatprep.subr.mxu0 0.0
    %3624 = vmatpush1.msra.mxu0 0.0
    %3625 = vmatprep.subr.mxu0 0.0
    %3626 = vmatpush1.msra.mxu0 0.0
    %3627 = vmatprep.subr.mxu0 0.0
    %3628 = vmatpush1.msra.mxu0 0.0
    %3629 = vmatprep.subr.mxu0 0.0
    %3630 = vmatpush1.msra.mxu0 0.0
    %3631 = vmatprep.subr.mxu0 0.0
    %3632 = vmatpush1.msra.mxu0 0.0
    %3633 = vmatprep.subr.mxu0 0.0
    %3634 = vmatpush1.msra.mxu0 %v3595
    %3635 = vmatprep.subr.mxu0 0.0
    %3636 = vmatpush1.msra.mxu0 %v3594
    %3637 = vmatprep.subr.mxu0 0.0
    %3638 = vmatpush1.msra.mxu0 %v3593
    %3639 = vmatprep.subr.mxu0 0.0
    %3640 = vmatpush1.msra.mxu0 %v3592
    %3641 = vmatprep.subr.mxu0 0.0
    %3642 = vmatpush2.msra.mxu0 0.0
    %3643 = vmatprep.subr.mxu0 0.0
    %3644 = vmatpush2.msra.mxu0 0.0
    %3645 = vmatprep.subr.mxu0 0.0
    %3646 = vmatpush2.msra.mxu0 0.0
    %3647 = vmatprep.subr.mxu0 0.0
    %3648 = vmatpush2.msra.mxu0 0.0
    %3649 = vmatprep.subr.mxu0 0.0
    %3650 = vmatpush2.msra.mxu0 0.0
    %3651 = vmatprep.subr.mxu0 0.0
    %3652 = vmatpush2.msra.mxu0 0.0
    %3653 = vmatprep.subr.mxu0 0.0
    %3654 = vmatpush2.msra.mxu0 0.0
    %3655 = vmatprep.subr.mxu0 0.0
    %3656 = vmatpush2.msra.mxu0 0.0
    %3657 = vmatprep.subr.mxu0 0.0
    %3658 = vmatpush2.msra.mxu0 0.0
    %3659 = vmatprep.subr.mxu0 0.0
    %3660 = vmatpush2.msra.mxu0 0.0
    %3661 = vmatprep.subr.mxu0 0.0
    %3662 = vmatpush2.msra.mxu0 0.0
    %3663 = vmatprep.subr.mxu0 0.0
    %3664 = vmatpush2.msra.mxu0 0.0
    %3665 = vmatprep.subr.mxu0 0.0
    %3666 = vmatpush2.msra.mxu0 0.0
    %3667 = vmatprep.subr.mxu0 0.0
    %3668 = vmatpush2.msra.mxu0 0.0
    %3669 = vmatprep.subr.mxu0 0.0
    %3670 = vmatpush2.msra.mxu0 0.0
    %3671 = vmatprep.subr.mxu0 0.0
    %3672 = vmatpush2.msra.mxu0 0.0
    %3673 = vmatprep.mubr.f32.mxu0 0.0
    %3674 = vmatmul.mubr.f32.gmra.mxu0 %v3604
    %v3675 = vpop.f32.mrf.mxu0
    %v3676 = vadd.f32 %v3601, %v3675
    %v3677 = vpop.f32.mrf.mxu0
    %3678 = vmatprep.mubr.f32.mxu0 0.0
    %3679 = vmatmul.mubr.f32.gmra.mxu0 %v3607
    %v3680 = vpop.f32.mrf.mxu0
    %v3681 = vadd.f32 %v3601, %v3680
    %v3682 = vpop.f32.mrf.mxu0
    %3683 = vdwg.mxu0
    %3684 = vst [vmem:[#allocation2] sm:$0xff] %v3676
    %3685 = vst [vmem:[#allocation2 + $0x8] sm:$0xff] %v3681
    // Predicated region
    $region114: #{gpt_forward.1} parent=1 // pred_check
      _
    $region115: #{gpt_forward.1} parent=1 // pred_check_branch
      %3687 = sbr.rel (0) target = $region117
    $region116: #{gpt_forward.1} parent=1 // pred_region
      %s3689 = ssub.s32 256, 256
      %3690 = vsyncadd [#allocation3], %s3689
      %s3691 = sshll.u32 [#allocation2], 4
      %s3692 = int_to_ptr.vmem [resolvable:$true] %s3691
      %3697 = dma.vmem_to_hbm [thread:$0]  %s3692, 256, %s57, [#allocation3], 128, 128, 8
    $region117: #{gpt_forward.1} parent=1 // pred_fallthru
      _
    // Predicated region
    $region118: #{gpt_forward.1} parent=1 // pred_check
      _
    $region119: #{gpt_forward.1} parent=1 // pred_check_branch
      %3699 = sbr.rel (0) target = $region121
    $region120: #{gpt_forward.1} parent=1 // pred_region
      _
    $region121: #{gpt_forward.1} parent=1 // pred_fallthru
      _
    // Predicated region
    $region122: #{gpt_forward.1} parent=1 // pred_check
      _
    $region123: #{gpt_forward.1} parent=1 // pred_check_branch
      %3701 = sbr.rel (0) target = $region125
    $region124: #{gpt_forward.1} parent=1 // pred_region
      %3702 = dma.done [#allocation3], 256
    $region125: #{gpt_forward.1} parent=1 // pred_fallthru
      _
    // Predicated region
    $region126: #{gpt_forward.1} parent=1 // pred_check
      _
    $region127: #{gpt_forward.1} parent=1 // pred_check_branch
      %3704 = sbr.rel (0) target = $region129
    $region128: #{gpt_forward.1} parent=1 // pred_region
      _
    $region129: #{gpt_forward.1} parent=1 // pred_fallthru
      _
    %3705 = vsyncpa [#allocation3], 1

</llo_original>
